<compile_context>
chip_gen: v7x
topology: tpu7x:2x2x1
jax: 0.10.0
libtpu: 0.0.40
codegen_flags: <defaults>
</compile_context>

<pallas_src>
import jax
import jax.numpy as jnp
from jax import lax
from jax.experimental import pallas as pl
from jax.experimental.pallas import tpu as pltpu


# ----------------------------- Pallas kernels ------------------------------ #

def features_kernel(cols_ref, w1_ref, s1_ref, t1_ref, w2_ref, s2_ref, t2_ref,
                    o_ref, c1_ref, pad2_ref):
    """Fused conv1(im2col) + BN + ReLU + maxpool(2,2) + pad + conv2 + BN + ReLU.

    cols_ref : (N*256, 27)  im2col'd padded 16x16x3 input (taps (dy,dx) major, cin minor)
    w1_ref   : (27, 16)     conv1 weights, rows in (dy, dx, cin) order
    w2_ref   : (9, 16, 8)   conv2 weights, [tap, cin, cout]
    o_ref    : (N, 64, 8)   conv2 activations in (h, w, c) order (row-major == (N, 512))
    c1_ref   : VMEM scratch (N, 16, 16, 16) conv1 activation (for strided pooling reads)
    pad2_ref : VMEM scratch (N, 10, 10, 16) zero-padded pooled activation for conv2
    """
    N = o_ref.shape[0]

    # ---- conv1 as a single K=27 MXU matmul, folded BN + ReLU ----
    h1 = jnp.dot(cols_ref[...], w1_ref[...], preferred_element_type=jnp.float32)
    h1 = jnp.maximum(h1 * s1_ref[...] + t1_ref[...], 0.0)          # (N*256, 16)
    c1_ref[...] = h1.reshape(N, 16, 16, 16)

    # ---- maxpool 2x2 stride 2 ----
    # W direction via strided ref reads, H direction purely in registers.
    a = jnp.maximum(c1_ref[:, :, pl.ds(0, 8, 2), :],
                    c1_ref[:, :, pl.ds(1, 8, 2), :])                # (N, 16, 8, 16)
    a = a.reshape(N, 8, 2, 8, 16)
    pooled = jnp.maximum(a[:, :, 0, :, :], a[:, :, 1, :, :])        # (N, 8, 8, 16)

    # ---- 'same' zero padding for conv2, entirely in VMEM ----
    pad2_ref[...] = jnp.zeros_like(pad2_ref)
    pad2_ref[:, 1:9, 1:9, :] = pooled

    # ---- conv2: 9 taps, K=16 each, folded BN + ReLU ----
    acc = jnp.zeros((N * 64, 8), jnp.float32)
    for k in range(9):                                              # unrolled 3x3 taps
        dy, dx = k // 3, k % 3
        patch = pad2_ref[:, dy:dy + 8, dx:dx + 8, :].reshape(N * 64, 16)
        acc = acc + jnp.dot(patch, w2_ref[k], preferred_element_type=jnp.float32)
    y2 = jnp.maximum(acc * s2_ref[...] + t2_ref[...], 0.0)          # (N*64, 8)
    o_ref[...] = y2.reshape(N, 64, 8)


def mlp_kernel(x_ref, w1_ref, b1_ref, w2_ref, b2_ref, w3_ref, b3_ref, o_ref):
    """Linear(512,512)+ReLU -> Linear(512,256)+ReLU -> Linear(256,C).  Dropout = identity.

    Weights arrive as bfloat16 (half the HBM DMA); activations are cast to bf16 right before
    each matmul and accumulated in float32 on the MXU.
    """
    h = jnp.dot(x_ref[...].astype(jnp.bfloat16), w1_ref[...],
                preferred_element_type=jnp.float32) + b1_ref[...]
    h = jnp.maximum(h, 0.0)
    h = jnp.dot(h.astype(jnp.bfloat16), w2_ref[...],
                preferred_element_type=jnp.float32) + b2_ref[...]
    h = jnp.maximum(h, 0.0)
    o_ref[...] = jnp.dot(h.astype(jnp.bfloat16), w3_ref[...],
                         preferred_element_type=jnp.float32) + b3_ref[...]


# ------------------------------- wrappers ---------------------------------- #

@jax.jit
def tinyml_forward(x_nchw, kp):
    N = x_nchw.shape[0]
    num_classes = kp["fb3"].shape[1]

    # Tiny input-prep fusion (XLA): NCHW->NHWC, SAME pad, im2col to (N*256, 27).
    x = jnp.transpose(x_nchw, (0, 2, 3, 1))                          # (N, 16, 16, 3)
    xp = jnp.pad(x, ((0, 0), (1, 1), (1, 1), (0, 0)))                # (N, 18, 18, 3)
    cols = jnp.concatenate(
        [xp[:, dy:dy + 16, dx:dx + 16, :] for dy in range(3) for dx in range(3)],
        axis=-1).reshape(N * 256, 27)

    feats = pl.pallas_call(
        features_kernel,
        out_shape=jax.ShapeDtypeStruct((N, 64, 8), jnp.float32),
        scratch_shapes=[pltpu.VMEM((N, 16, 16, 16), jnp.float32),
                        pltpu.VMEM((N, 10, 10, 16), jnp.float32)],
    )(cols, kp["w1"], kp["s1"], kp["t1"], kp["w2"], kp["s2"], kp["t2"])

    flat = feats.reshape(N, 512)          # row-major bitcast, no data movement

    return pl.pallas_call(
        mlp_kernel,
        out_shape=jax.ShapeDtypeStruct((N, num_classes), jnp.float32),
    )(flat, kp["fw1"], kp["fb1"], kp["fw2"], kp["fb2"], kp["fw3"], kp["fb3"])


# --------------------------- parameter creation ----------------------------- #

def init_params(key, num_classes=10):
    """PyTorch-equivalent parameters (eval mode, BN folded)."""
    ks = jax.random.split(key, 7)
    eps = 1e-5

    def rnd(k, shape, s=0.05):
        return jax.random.normal(k, shape, jnp.float32) * s

    p = {}
    # conv1: 3 -> 16; rows of w1 ordered (dy, dx, cin) == HWIO flattened.
    p["w1"] = rnd(ks[0], (27, 16))
    b1 = rnd(ks[1], (16,))
    s1 = jnp.ones((16,), jnp.float32) / jnp.sqrt(1.0 + eps)   # gamma/sqrt(var+eps), eval stats
    p["s1"], p["t1"] = s1, s1 * b1                            # beta + scale*(bias - mean)

    # conv2: 16 -> 8
    p["w2"] = rnd(ks[2], (9, 16, 8))
    b2 = rnd(ks[3], (8,))
    s2 = jnp.ones((8,), jnp.float32) / jnp.sqrt(1.0 + eps)
    p["s2"], p["t2"] = s2, s2 * b2

    # classifier (fw1 consumes the PyTorch (C, H, W)-order flatten)
    p["fw1"] = rnd(ks[4], (512, 512))
    p["fb1"] = jnp.zeros((512,), jnp.float32)
    p["fw2"] = rnd(ks[5], (512, 256))
    p["fb2"] = jnp.zeros((256,), jnp.float32)
    p["fw3"] = rnd(ks[6], (256, num_classes))
    p["fb3"] = jnp.zeros((num_classes,), jnp.float32)
    return p


def prepare_params(p):
    """One-time prep of kernel-side parameters (row-permuted fc1, bf16 MLP weights)."""
    kp = {
        "w1": p["w1"],
        "s1": p["s1"].reshape(1, 16), "t1": p["t1"].reshape(1, 16),
        "w2": p["w2"],
        "s2": p["s2"].reshape(1, 8), "t2": p["t2"].reshape(1, 8),
    }
    # kernel flattens the conv2 output in (H, W, C) order; PyTorch flattens in (C, H, W).
    # Permuting fw1's rows once makes both orders produce identical logits.
    h = jnp.arange(8).reshape(8, 1, 1)
    w = jnp.arange(8).reshape(1, 8, 1)
    c = jnp.arange(8).reshape(1, 1, 8)
    chw_index = (c * 64 + h * 8 + w).reshape(-1)              # (512,) in (h, w, c) order
    kp["fw1"] = p["fw1"][chw_index, :].astype(jnp.bfloat16)
    kp["fw2"] = p["fw2"].astype(jnp.bfloat16)
    kp["fw3"] = p["fw3"].astype(jnp.bfloat16)
    kp["fb1"] = p["fb1"].reshape(1, -1)
    kp["fb2"] = p["fb2"].reshape(1, -1)
    kp["fb3"] = p["fb3"].reshape(1, -1)
    return kp


# ------------------------- pure-JAX reference check ------------------------- #

def reference_forward(x_nchw, p):
    """PyTorch-semantics reference (eval mode), bf16 classifier quantization mirrored."""
    x = jnp.transpose(x_nchw, (0, 2, 3, 1))
    w1_hwio = p["w1"].reshape(3, 3, 3, 16)
    w2_hwio = p["w2"].reshape(3, 3, 16, 8)

    def conv(inp, w):
        return lax.conv_general_dilated(inp, w, (1, 1), "SAME",
                                        dimension_numbers=("NHWC", "HWIO", "NHWC"))

    y = jnp.maximum(conv(x, w1_hwio) * p["s1"] + p["t1"], 0.0)
    y = lax.reduce_window(y, -jnp.inf, lax.max, (1, 2, 2, 1), (1, 2, 2, 1), "VALID")
    y = jnp.maximum(conv(y, w2_hwio) * p["s2"] + p["t2"], 0.0)
    flat = jnp.transpose(y, (0, 3, 1, 2)).reshape(y.shape[0], -1)    # (C, H, W) flatten

    def qdot(a, w):   # same bf16 quantization as the kernel, f32 accumulation
        return jnp.dot(a.astype(jnp.bfloat16), w.astype(jnp.bfloat16),
                       preferred_element_type=jnp.float32)

    h = jnp.maximum(qdot(flat, p["fw1"]) + p["fb1"], 0.0)
    h = jnp.maximum(qdot(h, p["fw2"]) + p["fb2"], 0.0)
    return qdot(h, p["fw3"]) + p["fb3"]


# ----------------------------------- main ----------------------------------- #

if __name__ == "__main__":
    key = jax.random.PRNGKey(0)
    kx, kparam = jax.random.split(key)
    # PyTorch-style NCHW input; 16x16 spatial so that 8*8*8 = 512 features post-pool.
    x = jax.random.normal(kx, (2, 3, 16, 16), jnp.float32)

    torch_params = init_params(kparam, num_classes=10)
    kernel_params = prepare_params(torch_params)

    out = jax.block_until_ready(tinyml_forward(x, kernel_params))
    ref = reference_forward(x, torch_params)

    assert out.shape == (2, 10), out.shape
    max_err = float(jnp.max(jnp.abs(out - ref)))
    assert jnp.allclose(out, ref, atol=2e-3, rtol=2e-2), max_err
    print("KERNEL_OK")
</pallas_src>

<mosaic_0001>
module attributes {stable_mosaic.version = 11 : i64} {
  func.func @features_kernel(%arg0: memref<512x27xf32, #tpu.memory_space<vmem>>, %arg1: memref<27x16xf32, #tpu.memory_space<vmem>>, %arg2: memref<1x16xf32, #tpu.memory_space<vmem>>, %arg3: memref<1x16xf32, #tpu.memory_space<vmem>>, %arg4: memref<9x16x8xf32, #tpu.memory_space<vmem>>, %arg5: memref<1x8xf32, #tpu.memory_space<vmem>>, %arg6: memref<1x8xf32, #tpu.memory_space<vmem>>, %arg7: memref<2x64x8xf32, #tpu.memory_space<vmem>>, %arg8: memref<2x16x16x16xf32, #tpu.memory_space<vmem>>, %arg9: memref<2x10x10x16xf32, #tpu.memory_space<vmem>>) attributes {dimension_semantics = [], scalar_prefetch = 0 : i64, scratch_operands = 2 : i64, tpu.core_type = #tpu.core_type<tc>} {
    %c0 = arith.constant 0 : index
    %c0_0 = arith.constant 0 : index
    %0 = vector.load %arg0[%c0, %c0_0] : memref<512x27xf32, #tpu.memory_space<vmem>>, vector<512x27xf32>
    %c0_1 = arith.constant 0 : index
    %c0_2 = arith.constant 0 : index
    %1 = vector.load %arg1[%c0_1, %c0_2] : memref<27x16xf32, #tpu.memory_space<vmem>>, vector<27x16xf32>
    %cst = arith.constant dense<0.000000e+00> : vector<512x16xf32>
    %2 = tpu.matmul %0, %1, %cst {dimension_numbers = #tpu.dot_dimension_numbers<[1], [0], [0], [1], [0, 0, 1, 1], [], []>} : vector<512x27xf32>, vector<27x16xf32>, vector<512x16xf32> -> vector<512x16xf32>
    %c0_3 = arith.constant 0 : index
    %c0_4 = arith.constant 0 : index
    %3 = vector.load %arg2[%c0_3, %c0_4] : memref<1x16xf32, #tpu.memory_space<vmem>>, vector<1x16xf32>
    %4 = vector.broadcast %3 : vector<1x16xf32> to vector<512x16xf32>
    %5 = arith.mulf %2, %4 : vector<512x16xf32>
    %c0_5 = arith.constant 0 : index
    %c0_6 = arith.constant 0 : index
    %6 = vector.load %arg3[%c0_5, %c0_6] : memref<1x16xf32, #tpu.memory_space<vmem>>, vector<1x16xf32>
    %7 = vector.broadcast %6 : vector<1x16xf32> to vector<512x16xf32>
    %8 = arith.addf %5, %7 : vector<512x16xf32>
    %cst_7 = arith.constant 0.000000e+00 : f32
    %9 = vector.broadcast %cst_7 : f32 to vector<512x16xf32>
    %10 = arith.maximumf %8, %9 : vector<512x16xf32>
    %11 = vector.shape_cast %10 : vector<512x16xf32> to vector<2x16x16x16xf32>
    %c0_8 = arith.constant 0 : index
    %c0_9 = arith.constant 0 : index
    %c0_10 = arith.constant 0 : index
    %c0_11 = arith.constant 0 : index
    %12 = vector.load %arg8[%c0_8, %c0_9, %c0_10, %c0_11] : memref<2x16x16x16xf32, #tpu.memory_space<vmem>>, vector<2x16x16x16xf32>
    tpu.vector_store %arg8[%c0_8, %c0_9, %c0_10, %c0_11], %11 {strides = array<i32>} : memref<2x16x16x16xf32, #tpu.memory_space<vmem>>, vector<2x16x16x16xf32>,
    %c0_12 = arith.constant 0 : index
    %c0_13 = arith.constant 0 : index
    %c0_14 = arith.constant 0 : index
    %c0_15 = arith.constant 0 : index
    %13 = tpu.strided_load %arg8[%c0_12, %c0_13, %c0_14, %c0_15] {strides = array<i32: 1, 1, 2, 1>} : memref<2x16x16x16xf32, #tpu.memory_space<vmem>>, vector<2x16x8x16xf32>
    %c0_16 = arith.constant 0 : index
    %c0_17 = arith.constant 0 : index
    %c1 = arith.constant 1 : index
    %c0_18 = arith.constant 0 : index
    %14 = tpu.strided_load %arg8[%c0_16, %c0_17, %c1, %c0_18] {strides = array<i32: 1, 1, 2, 1>} : memref<2x16x16x16xf32, #tpu.memory_space<vmem>>, vector<2x16x8x16xf32>
    %15 = arith.maximumf %13, %14 : vector<2x16x8x16xf32>
    %16 = vector.shape_cast %15 : vector<2x16x8x16xf32> to vector<2x8x2x8x16xf32>
    %17 = vector.extract_strided_slice %16 {offsets = [0, 0, 0, 0, 0], sizes = [2, 8, 1, 8, 16], strides = [1, 1, 1, 1, 1]} : vector<2x8x2x8x16xf32> to vector<2x8x1x8x16xf32>
    %18 = vector.shape_cast %17 : vector<2x8x1x8x16xf32> to vector<2x8x8x16xf32>
    %19 = vector.extract_strided_slice %16 {offsets = [0, 0, 1, 0, 0], sizes = [2, 8, 1, 8, 16], strides = [1, 1, 1, 1, 1]} : vector<2x8x2x8x16xf32> to vector<2x8x1x8x16xf32>
    %20 = vector.shape_cast %19 : vector<2x8x1x8x16xf32> to vector<2x8x8x16xf32>
    %21 = arith.maximumf %18, %20 : vector<2x8x8x16xf32>
    %cst_19 = arith.constant 0.000000e+00 : f32
    %22 = vector.broadcast %cst_19 : f32 to vector<2x10x10x16xf32>
    %c0_20 = arith.constant 0 : index
    %c0_21 = arith.constant 0 : index
    %c0_22 = arith.constant 0 : index
    %c0_23 = arith.constant 0 : index
    %23 = vector.load %arg9[%c0_20, %c0_21, %c0_22, %c0_23] : memref<2x10x10x16xf32, #tpu.memory_space<vmem>>, vector<2x10x10x16xf32>
    tpu.vector_store %arg9[%c0_20, %c0_21, %c0_22, %c0_23], %22 {strides = array<i32>} : memref<2x10x10x16xf32, #tpu.memory_space<vmem>>, vector<2x10x10x16xf32>,
    %c0_24 = arith.constant 0 : index
    %c1_25 = arith.constant 1 : index
    %c1_26 = arith.constant 1 : index
    %c0_27 = arith.constant 0 : index
    %24 = vector.load %arg9[%c0_24, %c1_25, %c1_26, %c0_27] : memref<2x10x10x16xf32, #tpu.memory_space<vmem>>, vector<2x8x8x16xf32>
    tpu.vector_store %arg9[%c0_24, %c1_25, %c1_26, %c0_27], %21 {strides = array<i32>} : memref<2x10x10x16xf32, #tpu.memory_space<vmem>>, vector<2x8x8x16xf32>,
    %cst_28 = arith.constant 0.000000e+00 : f32
    %25 = vector.broadcast %cst_28 : f32 to vector<128x8xf32>
    %c0_29 = arith.constant 0 : index
    %c0_30 = arith.constant 0 : index
    %c0_31 = arith.constant 0 : index
    %c0_32 = arith.constant 0 : index
    %26 = vector.load %arg9[%c0_29, %c0_30, %c0_31, %c0_32] : memref<2x10x10x16xf32, #tpu.memory_space<vmem>>, vector<2x8x8x16xf32>
    %27 = vector.shape_cast %26 : vector<2x8x8x16xf32> to vector<128x16xf32>
    %c0_33 = arith.constant 0 : index
    %c0_34 = arith.constant 0 : index
    %c0_35 = arith.constant 0 : index
    %28 = vector.load %arg4[%c0_33, %c0_34, %c0_35] : memref<9x16x8xf32, #tpu.memory_space<vmem>>, vector<1x16x8xf32>
    %29 = vector.shape_cast %28 : vector<1x16x8xf32> to vector<16x8xf32>
    %cst_36 = arith.constant dense<0.000000e+00> : vector<128x8xf32>
    %30 = tpu.matmul %27, %29, %cst_36 {dimension_numbers = #tpu.dot_dimension_numbers<[1], [0], [0], [1], [0, 0, 1, 1], [], []>} : vector<128x16xf32>, vector<16x8xf32>, vector<128x8xf32> -> vector<128x8xf32>
    %31 = arith.addf %25, %30 : vector<128x8xf32>
    %c0_37 = arith.constant 0 : index
    %c0_38 = arith.constant 0 : index
    %c1_39 = arith.constant 1 : index
    %c0_40 = arith.constant 0 : index
    %32 = vector.load %arg9[%c0_37, %c0_38, %c1_39, %c0_40] : memref<2x10x10x16xf32, #tpu.memory_space<vmem>>, vector<2x8x8x16xf32>
    %33 = vector.shape_cast %32 : vector<2x8x8x16xf32> to vector<128x16xf32>
    %c1_41 = arith.constant 1 : index
    %c0_42 = arith.constant 0 : index
    %c0_43 = arith.constant 0 : index
    %34 = vector.load %arg4[%c1_41, %c0_42, %c0_43] : memref<9x16x8xf32, #tpu.memory_space<vmem>>, vector<1x16x8xf32>
    %35 = vector.shape_cast %34 : vector<1x16x8xf32> to vector<16x8xf32>
    %cst_44 = arith.constant dense<0.000000e+00> : vector<128x8xf32>
    %36 = tpu.matmul %33, %35, %cst_44 {dimension_numbers = #tpu.dot_dimension_numbers<[1], [0], [0], [1], [0, 0, 1, 1], [], []>} : vector<128x16xf32>, vector<16x8xf32>, vector<128x8xf32> -> vector<128x8xf32>
    %37 = arith.addf %31, %36 : vector<128x8xf32>
    %c0_45 = arith.constant 0 : index
    %c0_46 = arith.constant 0 : index
    %c2 = arith.constant 2 : index
    %c0_47 = arith.constant 0 : index
    %38 = vector.load %arg9[%c0_45, %c0_46, %c2, %c0_47] : memref<2x10x10x16xf32, #tpu.memory_space<vmem>>, vector<2x8x8x16xf32>
    %39 = vector.shape_cast %38 : vector<2x8x8x16xf32> to vector<128x16xf32>
    %c2_48 = arith.constant 2 : index
    %c0_49 = arith.constant 0 : index
    %c0_50 = arith.constant 0 : index
    %40 = vector.load %arg4[%c2_48, %c0_49, %c0_50] : memref<9x16x8xf32, #tpu.memory_space<vmem>>, vector<1x16x8xf32>
    %41 = vector.shape_cast %40 : vector<1x16x8xf32> to vector<16x8xf32>
    %cst_51 = arith.constant dense<0.000000e+00> : vector<128x8xf32>
    %42 = tpu.matmul %39, %41, %cst_51 {dimension_numbers = #tpu.dot_dimension_numbers<[1], [0], [0], [1], [0, 0, 1, 1], [], []>} : vector<128x16xf32>, vector<16x8xf32>, vector<128x8xf32> -> vector<128x8xf32>
    %43 = arith.addf %37, %42 : vector<128x8xf32>
    %c0_52 = arith.constant 0 : index
    %c1_53 = arith.constant 1 : index
    %c0_54 = arith.constant 0 : index
    %c0_55 = arith.constant 0 : index
    %44 = vector.load %arg9[%c0_52, %c1_53, %c0_54, %c0_55] : memref<2x10x10x16xf32, #tpu.memory_space<vmem>>, vector<2x8x8x16xf32>
    %45 = vector.shape_cast %44 : vector<2x8x8x16xf32> to vector<128x16xf32>
    %c3 = arith.constant 3 : index
    %c0_56 = arith.constant 0 : index
    %c0_57 = arith.constant 0 : index
    %46 = vector.load %arg4[%c3, %c0_56, %c0_57] : memref<9x16x8xf32, #tpu.memory_space<vmem>>, vector<1x16x8xf32>
    %47 = vector.shape_cast %46 : vector<1x16x8xf32> to vector<16x8xf32>
    %cst_58 = arith.constant dense<0.000000e+00> : vector<128x8xf32>
    %48 = tpu.matmul %45, %47, %cst_58 {dimension_numbers = #tpu.dot_dimension_numbers<[1], [0], [0], [1], [0, 0, 1, 1], [], []>} : vector<128x16xf32>, vector<16x8xf32>, vector<128x8xf32> -> vector<128x8xf32>
    %49 = arith.addf %43, %48 : vector<128x8xf32>
    %c0_59 = arith.constant 0 : index
    %c1_60 = arith.constant 1 : index
    %c1_61 = arith.constant 1 : index
    %c0_62 = arith.constant 0 : index
    %50 = vector.load %arg9[%c0_59, %c1_60, %c1_61, %c0_62] : memref<2x10x10x16xf32, #tpu.memory_space<vmem>>, vector<2x8x8x16xf32>
    %51 = vector.shape_cast %50 : vector<2x8x8x16xf32> to vector<128x16xf32>
    %c4 = arith.constant 4 : index
    %c0_63 = arith.constant 0 : index
    %c0_64 = arith.constant 0 : index
    %52 = vector.load %arg4[%c4, %c0_63, %c0_64] : memref<9x16x8xf32, #tpu.memory_space<vmem>>, vector<1x16x8xf32>
    %53 = vector.shape_cast %52 : vector<1x16x8xf32> to vector<16x8xf32>
    %cst_65 = arith.constant dense<0.000000e+00> : vector<128x8xf32>
    %54 = tpu.matmul %51, %53, %cst_65 {dimension_numbers = #tpu.dot_dimension_numbers<[1], [0], [0], [1], [0, 0, 1, 1], [], []>} : vector<128x16xf32>, vector<16x8xf32>, vector<128x8xf32> -> vector<128x8xf32>
    %55 = arith.addf %49, %54 : vector<128x8xf32>
    %c0_66 = arith.constant 0 : index
    %c1_67 = arith.constant 1 : index
    %c2_68 = arith.constant 2 : index
    %c0_69 = arith.constant 0 : index
    %56 = vector.load %arg9[%c0_66, %c1_67, %c2_68, %c0_69] : memref<2x10x10x16xf32, #tpu.memory_space<vmem>>, vector<2x8x8x16xf32>
    %57 = vector.shape_cast %56 : vector<2x8x8x16xf32> to vector<128x16xf32>
    %c5 = arith.constant 5 : index
    %c0_70 = arith.constant 0 : index
    %c0_71 = arith.constant 0 : index
    %58 = vector.load %arg4[%c5, %c0_70, %c0_71] : memref<9x16x8xf32, #tpu.memory_space<vmem>>, vector<1x16x8xf32>
    %59 = vector.shape_cast %58 : vector<1x16x8xf32> to vector<16x8xf32>
    %cst_72 = arith.constant dense<0.000000e+00> : vector<128x8xf32>
    %60 = tpu.matmul %57, %59, %cst_72 {dimension_numbers = #tpu.dot_dimension_numbers<[1], [0], [0], [1], [0, 0, 1, 1], [], []>} : vector<128x16xf32>, vector<16x8xf32>, vector<128x8xf32> -> vector<128x8xf32>
    %61 = arith.addf %55, %60 : vector<128x8xf32>
    %c0_73 = arith.constant 0 : index
    %c2_74 = arith.constant 2 : index
    %c0_75 = arith.constant 0 : index
    %c0_76 = arith.constant 0 : index
    %62 = vector.load %arg9[%c0_73, %c2_74, %c0_75, %c0_76] : memref<2x10x10x16xf32, #tpu.memory_space<vmem>>, vector<2x8x8x16xf32>
    %63 = vector.shape_cast %62 : vector<2x8x8x16xf32> to vector<128x16xf32>
    %c6 = arith.constant 6 : index
    %c0_77 = arith.constant 0 : index
    %c0_78 = arith.constant 0 : index
    %64 = vector.load %arg4[%c6, %c0_77, %c0_78] : memref<9x16x8xf32, #tpu.memory_space<vmem>>, vector<1x16x8xf32>
    %65 = vector.shape_cast %64 : vector<1x16x8xf32> to vector<16x8xf32>
    %cst_79 = arith.constant dense<0.000000e+00> : vector<128x8xf32>
    %66 = tpu.matmul %63, %65, %cst_79 {dimension_numbers = #tpu.dot_dimension_numbers<[1], [0], [0], [1], [0, 0, 1, 1], [], []>} : vector<128x16xf32>, vector<16x8xf32>, vector<128x8xf32> -> vector<128x8xf32>
    %67 = arith.addf %61, %66 : vector<128x8xf32>
    %c0_80 = arith.constant 0 : index
    %c2_81 = arith.constant 2 : index
    %c1_82 = arith.constant 1 : index
    %c0_83 = arith.constant 0 : index
    %68 = vector.load %arg9[%c0_80, %c2_81, %c1_82, %c0_83] : memref<2x10x10x16xf32, #tpu.memory_space<vmem>>, vector<2x8x8x16xf32>
    %69 = vector.shape_cast %68 : vector<2x8x8x16xf32> to vector<128x16xf32>
    %c7 = arith.constant 7 : index
    %c0_84 = arith.constant 0 : index
    %c0_85 = arith.constant 0 : index
    %70 = vector.load %arg4[%c7, %c0_84, %c0_85] : memref<9x16x8xf32, #tpu.memory_space<vmem>>, vector<1x16x8xf32>
    %71 = vector.shape_cast %70 : vector<1x16x8xf32> to vector<16x8xf32>
    %cst_86 = arith.constant dense<0.000000e+00> : vector<128x8xf32>
    %72 = tpu.matmul %69, %71, %cst_86 {dimension_numbers = #tpu.dot_dimension_numbers<[1], [0], [0], [1], [0, 0, 1, 1], [], []>} : vector<128x16xf32>, vector<16x8xf32>, vector<128x8xf32> -> vector<128x8xf32>
    %73 = arith.addf %67, %72 : vector<128x8xf32>
    %c0_87 = arith.constant 0 : index
    %c2_88 = arith.constant 2 : index
    %c2_89 = arith.constant 2 : index
    %c0_90 = arith.constant 0 : index
    %74 = vector.load %arg9[%c0_87, %c2_88, %c2_89, %c0_90] : memref<2x10x10x16xf32, #tpu.memory_space<vmem>>, vector<2x8x8x16xf32>
    %75 = vector.shape_cast %74 : vector<2x8x8x16xf32> to vector<128x16xf32>
    %c8 = arith.constant 8 : index
    %c0_91 = arith.constant 0 : index
    %c0_92 = arith.constant 0 : index
    %76 = vector.load %arg4[%c8, %c0_91, %c0_92] : memref<9x16x8xf32, #tpu.memory_space<vmem>>, vector<1x16x8xf32>
    %77 = vector.shape_cast %76 : vector<1x16x8xf32> to vector<16x8xf32>
    %cst_93 = arith.constant dense<0.000000e+00> : vector<128x8xf32>
    %78 = tpu.matmul %75, %77, %cst_93 {dimension_numbers = #tpu.dot_dimension_numbers<[1], [0], [0], [1], [0, 0, 1, 1], [], []>} : vector<128x16xf32>, vector<16x8xf32>, vector<128x8xf32> -> vector<128x8xf32>
    %79 = arith.addf %73, %78 : vector<128x8xf32>
    %c0_94 = arith.constant 0 : index
    %c0_95 = arith.constant 0 : index
    %80 = vector.load %arg5[%c0_94, %c0_95] : memref<1x8xf32, #tpu.memory_space<vmem>>, vector<1x8xf32>
    %81 = vector.broadcast %80 : vector<1x8xf32> to vector<128x8xf32>
    %82 = arith.mulf %79, %81 : vector<128x8xf32>
    %c0_96 = arith.constant 0 : index
    %c0_97 = arith.constant 0 : index
    %83 = vector.load %arg6[%c0_96, %c0_97] : memref<1x8xf32, #tpu.memory_space<vmem>>, vector<1x8xf32>
    %84 = vector.broadcast %83 : vector<1x8xf32> to vector<128x8xf32>
    %85 = arith.addf %82, %84 : vector<128x8xf32>
    %cst_98 = arith.constant 0.000000e+00 : f32
    %86 = vector.broadcast %cst_98 : f32 to vector<128x8xf32>
    %87 = arith.maximumf %85, %86 : vector<128x8xf32>
    %88 = vector.shape_cast %87 : vector<128x8xf32> to vector<2x64x8xf32>
    %c0_99 = arith.constant 0 : index
    %c0_100 = arith.constant 0 : index
    %c0_101 = arith.constant 0 : index
    %89 = vector.load %arg7[%c0_99, %c0_100, %c0_101] : memref<2x64x8xf32, #tpu.memory_space<vmem>>, vector<2x64x8xf32>
    tpu.vector_store %arg7[%c0_99, %c0_100, %c0_101], %88 {strides = array<i32>} : memref<2x64x8xf32, #tpu.memory_space<vmem>>, vector<2x64x8xf32>,
    return
  }
}

module attributes {stable_mosaic.version = 11 : i64} {
  func.func @mlp_kernel(%arg0: memref<2x512xf32, #tpu.memory_space<vmem>>, %arg1: memref<512x512xbf16, #tpu.memory_space<vmem>>, %arg2: memref<1x512xf32, #tpu.memory_space<vmem>>, %arg3: memref<512x256xbf16, #tpu.memory_space<vmem>>, %arg4: memref<1x256xf32, #tpu.memory_space<vmem>>, %arg5: memref<256x10xbf16, #tpu.memory_space<vmem>>, %arg6: memref<1x10xf32, #tpu.memory_space<vmem>>, %arg7: memref<2x10xf32, #tpu.memory_space<vmem>>) attributes {dimension_semantics = [], scalar_prefetch = 0 : i64, scratch_operands = 0 : i64, tpu.core_type = #tpu.core_type<tc>} {
    %c0 = arith.constant 0 : index
    %c0_0 = arith.constant 0 : index
    %0 = vector.load %arg0[%c0, %c0_0] : memref<2x512xf32, #tpu.memory_space<vmem>>, vector<2x512xf32>
    %1 = arith.truncf %0 : vector<2x512xf32> to vector<2x512xbf16>
    %c0_1 = arith.constant 0 : index
    %c0_2 = arith.constant 0 : index
    %2 = vector.load %arg1[%c0_1, %c0_2] : memref<512x512xbf16, #tpu.memory_space<vmem>>, vector<512x512xbf16>
    %cst = arith.constant dense<0.000000e+00> : vector<2x512xf32>
    %3 = tpu.matmul %1, %2, %cst {dimension_numbers = #tpu.dot_dimension_numbers<[1], [0], [0], [1], [0, 0, 1, 1], [], []>} : vector<2x512xbf16>, vector<512x512xbf16>, vector<2x512xf32> -> vector<2x512xf32>
    %c0_3 = arith.constant 0 : index
    %c0_4 = arith.constant 0 : index
    %4 = vector.load %arg2[%c0_3, %c0_4] : memref<1x512xf32, #tpu.memory_space<vmem>>, vector<1x512xf32>
    %5 = vector.broadcast %4 : vector<1x512xf32> to vector<2x512xf32>
    %6 = arith.addf %3, %5 : vector<2x512xf32>
    %cst_5 = arith.constant 0.000000e+00 : f32
    %7 = vector.broadcast %cst_5 : f32 to vector<2x512xf32>
    %8 = arith.maximumf %6, %7 : vector<2x512xf32>
    %9 = arith.truncf %8 : vector<2x512xf32> to vector<2x512xbf16>
    %c0_6 = arith.constant 0 : index
    %c0_7 = arith.constant 0 : index
    %10 = vector.load %arg3[%c0_6, %c0_7] : memref<512x256xbf16, #tpu.memory_space<vmem>>, vector<512x256xbf16>
    %cst_8 = arith.constant dense<0.000000e+00> : vector<2x256xf32>
    %11 = tpu.matmul %9, %10, %cst_8 {dimension_numbers = #tpu.dot_dimension_numbers<[1], [0], [0], [1], [0, 0, 1, 1], [], []>} : vector<2x512xbf16>, vector<512x256xbf16>, vector<2x256xf32> -> vector<2x256xf32>
    %c0_9 = arith.constant 0 : index
    %c0_10 = arith.constant 0 : index
    %12 = vector.load %arg4[%c0_9, %c0_10] : memref<1x256xf32, #tpu.memory_space<vmem>>, vector<1x256xf32>
    %13 = vector.broadcast %12 : vector<1x256xf32> to vector<2x256xf32>
    %14 = arith.addf %11, %13 : vector<2x256xf32>
    %cst_11 = arith.constant 0.000000e+00 : f32
    %15 = vector.broadcast %cst_11 : f32 to vector<2x256xf32>
    %16 = arith.maximumf %14, %15 : vector<2x256xf32>
    %17 = arith.truncf %16 : vector<2x256xf32> to vector<2x256xbf16>
    %c0_12 = arith.constant 0 : index
    %c0_13 = arith.constant 0 : index
    %18 = vector.load %arg5[%c0_12, %c0_13] : memref<256x10xbf16, #tpu.memory_space<vmem>>, vector<256x10xbf16>
    %cst_14 = arith.constant dense<0.000000e+00> : vector<2x10xf32>
    %19 = tpu.matmul %17, %18, %cst_14 {dimension_numbers = #tpu.dot_dimension_numbers<[1], [0], [0], [1], [0, 0, 1, 1], [], []>} : vector<2x256xbf16>, vector<256x10xbf16>, vector<2x10xf32> -> vector<2x10xf32>
    %c0_15 = arith.constant 0 : index
    %c0_16 = arith.constant 0 : index
    %20 = vector.load %arg6[%c0_15, %c0_16] : memref<1x10xf32, #tpu.memory_space<vmem>>, vector<1x10xf32>
    %21 = vector.broadcast %20 : vector<1x10xf32> to vector<2x10xf32>
    %22 = arith.addf %19, %21 : vector<2x10xf32>
    %c0_17 = arith.constant 0 : index
    %c0_18 = arith.constant 0 : index
    %23 = vector.load %arg7[%c0_17, %c0_18] : memref<2x10xf32, #tpu.memory_space<vmem>>, vector<2x10xf32>
    tpu.vector_store %arg7[%c0_17, %c0_18], %22 {strides = array<i32>} : memref<2x10xf32, #tpu.memory_space<vmem>>, vector<2x10xf32>,
    return
  }
}

</mosaic_0001>

<llo_original>
// kernel: tinyml_forward.3
$region0: #{tinyml_forward.3}
  #allocation0 [shape = 'u32[]', space=smem, size = 0x4, offset = 0x4, fixed_abs, tag = 'smem constant byte address 0x4 - core index']
  #allocation1 [shape = 'u32[144,128]{1,0:T(1,128)}', space=vmem, size = 0x12000, scoped, tag = 'internal scratch']
  %s0 = inlined_call_operand.vmem [shape: f32[2,512], index: 0, kind: input, shape index: {}]
  %s1 = inlined_call_operand.vmem [shape: bf16[512,512], index: 1, kind: input, shape index: {}]
  %s2 = inlined_call_operand.vmem [shape: f32[1,512], index: 2, kind: input, shape index: {}]
  %s3 = inlined_call_operand.vmem [shape: bf16[512,256], index: 3, kind: input, shape index: {}]
  %s4 = inlined_call_operand.vmem [shape: f32[1,256], index: 4, kind: input, shape index: {}]
  %s5 = inlined_call_operand.vmem [shape: bf16[256,10], index: 5, kind: input, shape index: {}]
  %s6 = inlined_call_operand.vmem [shape: f32[1,10], index: 6, kind: input, shape index: {}]
  %s7 = inlined_call_operand.hbm [shape: f32[2,10], index: 7, kind: output, shape index: {}]
  %s8 = sld [smem:[#allocation0]]
  $region38: #{tinyml_forward.3} parent=0
    _
  %s10 = ssub.s32 1, %s8
  %s11 = scalar_select 0, %s10, %s8
  $region1: #{tinyml_forward.3} parent=0
    #allocation2 [shape = 'u8[1024]{0}', space=vmem, size = 0x400, scoped, tag = 'output window, operand 0, single buffered']
    #allocation3 [shape = 's32[1]{0}', space=sflag, size = 0x4, scoped, tag = 'scoped memory for tinyml_forward.3']
    %12 = vsyncpa [#allocation3], 0
    // Predicated region
    $region2: #{tinyml_forward.3} parent=1 // pred_check
      _
    $region3: #{tinyml_forward.3} parent=1 // pred_check_branch
      %14 = sbr.rel (0) target = $region5
    $region4: #{tinyml_forward.3} parent=1 // pred_region
      _
    $region5: #{tinyml_forward.3} parent=1 // pred_fallthru
      _
    // Predicated region
    $region6: #{tinyml_forward.3} parent=1 // pred_check
      _
    $region7: #{tinyml_forward.3} parent=1 // pred_check_branch
      %16 = sbr.rel (0) target = $region9
    $region8: #{tinyml_forward.3} parent=1 // pred_region
      _
    $region9: #{tinyml_forward.3} parent=1 // pred_fallthru
      _
    // Predicated region
    $region10: #{tinyml_forward.3} parent=1 // pred_check
      _
    $region11: #{tinyml_forward.3} parent=1 // pred_check_branch
      %18 = sbr.rel (0) target = $region13
    $region12: #{tinyml_forward.3} parent=1 // pred_region
      _
    $region13: #{tinyml_forward.3} parent=1 // pred_fallthru
      _
    // Predicated region
    $region14: #{tinyml_forward.3} parent=1 // pred_check
      _
    $region15: #{tinyml_forward.3} parent=1 // pred_check_branch
      %20 = sbr.rel (0) target = $region17
    $region16: #{tinyml_forward.3} parent=1 // pred_region
      _
    $region17: #{tinyml_forward.3} parent=1 // pred_fallthru
      _
    // Predicated region
    $region18: #{tinyml_forward.3} parent=1 // pred_check
      _
    $region19: #{tinyml_forward.3} parent=1 // pred_check_branch
      %22 = sbr.rel (0) target = $region21
    $region20: #{tinyml_forward.3} parent=1 // pred_region
      _
    $region21: #{tinyml_forward.3} parent=1 // pred_fallthru
      _
    // Predicated region
    $region22: #{tinyml_forward.3} parent=1 // pred_check
      _
    $region23: #{tinyml_forward.3} parent=1 // pred_check_branch
      %24 = sbr.rel (0) target = $region25
    $region24: #{tinyml_forward.3} parent=1 // pred_region
      _
    $region25: #{tinyml_forward.3} parent=1 // pred_fallthru
      _
    // Predicated region
    $region26: #{tinyml_forward.3} parent=1 // pred_check
      _
    $region27: #{tinyml_forward.3} parent=1 // pred_check_branch
      %26 = sbr.rel (0) target = $region29
    $region28: #{tinyml_forward.3} parent=1 // pred_region
      _
    $region29: #{tinyml_forward.3} parent=1 // pred_fallthru
      _
    %v28 = vld [vmem:[%s0] sm:$0xff]
    %v30 = vcombine.high %v28, %v28
    %v32 = vunpack.c.l.s4 1983009808
    %v33 = vunpack.c.0.s8 %v32
    %v34 = vlaneseq
    %v35 = vshrl.u32 %v34, 7
    %v36 = vsub.s32 %v33, %v35
    %v37 = vrot.slane %v28, %v36
    %v39 = vunpack.c.l.s4 1983009808
    %v40 = vunpack.c.0.s8 %v39
    %v41 = vlaneseq
    %v42 = vshrl.u32 %v41, 7
    %v43 = vsub.s32 %v40, %v42
    %v44 = vrot.slane %v30, %v43
    %v45 = vcombine.high %v37, %v37
    %v46 = vcombine.high %v44, %v44
    %v51 = vpack.c.bf16 %v37, %v37
    %v52 = vpack.c.bf16 %v45, %v45
    %v53 = vpack.c.bf16 %v44, %v44
    %v54 = vpack.c.bf16 %v46, %v46
    %v55 = vld [vmem:[%s1] sm:$0xff]
    %v56 = vld [vmem:[%s1 + $0x8] sm:$0xff]
    %v57 = vld [vmem:[%s1 + $0x10] sm:$0xff]
    %v58 = vld [vmem:[%s1 + $0x18] sm:$0xff]
    %v59 = vld [vmem:[%s1 + $0x20] sm:$0xff]
    %v60 = vld [vmem:[%s1 + $0x28] sm:$0xff]
    %v61 = vld [vmem:[%s1 + $0x30] sm:$0xff]
    %v62 = vld [vmem:[%s1 + $0x38] sm:$0xff]
    %v63 = vld [vmem:[%s1 + $0x40] sm:$0xff]
    %v64 = vld [vmem:[%s1 + $0x48] sm:$0xff]
    %v65 = vld [vmem:[%s1 + $0x50] sm:$0xff]
    %v66 = vld [vmem:[%s1 + $0x58] sm:$0xff]
    %v67 = vld [vmem:[%s1 + $0x60] sm:$0xff]
    %v68 = vld [vmem:[%s1 + $0x68] sm:$0xff]
    %v69 = vld [vmem:[%s1 + $0x70] sm:$0xff]
    %v70 = vld [vmem:[%s1 + $0x78] sm:$0xff]
    %v71 = vld [vmem:[%s1 + $0x80] sm:$0xff]
    %v72 = vld [vmem:[%s1 + $0x88] sm:$0xff]
    %v73 = vld [vmem:[%s1 + $0x90] sm:$0xff]
    %v74 = vld [vmem:[%s1 + $0x98] sm:$0xff]
    %v75 = vld [vmem:[%s1 + $0xa0] sm:$0xff]
    %v76 = vld [vmem:[%s1 + $0xa8] sm:$0xff]
    %v77 = vld [vmem:[%s1 + $0xb0] sm:$0xff]
    %v78 = vld [vmem:[%s1 + $0xb8] sm:$0xff]
    %v79 = vld [vmem:[%s1 + $0xc0] sm:$0xff]
    %v80 = vld [vmem:[%s1 + $0xc8] sm:$0xff]
    %v81 = vld [vmem:[%s1 + $0xd0] sm:$0xff]
    %v82 = vld [vmem:[%s1 + $0xd8] sm:$0xff]
    %v83 = vld [vmem:[%s1 + $0xe0] sm:$0xff]
    %v84 = vld [vmem:[%s1 + $0xe8] sm:$0xff]
    %v85 = vld [vmem:[%s1 + $0xf0] sm:$0xff]
    %v86 = vld [vmem:[%s1 + $0xf8] sm:$0xff]
    %v87 = vld [vmem:[%s1 + $0x100] sm:$0xff]
    %v88 = vld [vmem:[%s1 + $0x108] sm:$0xff]
    %v89 = vld [vmem:[%s1 + $0x110] sm:$0xff]
    %v90 = vld [vmem:[%s1 + $0x118] sm:$0xff]
    %v91 = vld [vmem:[%s1 + $0x120] sm:$0xff]
    %v92 = vld [vmem:[%s1 + $0x128] sm:$0xff]
    %v93 = vld [vmem:[%s1 + $0x130] sm:$0xff]
    %v94 = vld [vmem:[%s1 + $0x138] sm:$0xff]
    %v95 = vld [vmem:[%s1 + $0x140] sm:$0xff]
    %v96 = vld [vmem:[%s1 + $0x148] sm:$0xff]
    %v97 = vld [vmem:[%s1 + $0x150] sm:$0xff]
    %v98 = vld [vmem:[%s1 + $0x158] sm:$0xff]
    %v99 = vld [vmem:[%s1 + $0x160] sm:$0xff]
    %v100 = vld [vmem:[%s1 + $0x168] sm:$0xff]
    %v101 = vld [vmem:[%s1 + $0x170] sm:$0xff]
    %v102 = vld [vmem:[%s1 + $0x178] sm:$0xff]
    %v103 = vld [vmem:[%s1 + $0x180] sm:$0xff]
    %v104 = vld [vmem:[%s1 + $0x188] sm:$0xff]
    %v105 = vld [vmem:[%s1 + $0x190] sm:$0xff]
    %v106 = vld [vmem:[%s1 + $0x198] sm:$0xff]
    %v107 = vld [vmem:[%s1 + $0x1a0] sm:$0xff]
    %v108 = vld [vmem:[%s1 + $0x1a8] sm:$0xff]
    %v109 = vld [vmem:[%s1 + $0x1b0] sm:$0xff]
    %v110 = vld [vmem:[%s1 + $0x1b8] sm:$0xff]
    %v111 = vld [vmem:[%s1 + $0x1c0] sm:$0xff]
    %v112 = vld [vmem:[%s1 + $0x1c8] sm:$0xff]
    %v113 = vld [vmem:[%s1 + $0x1d0] sm:$0xff]
    %v114 = vld [vmem:[%s1 + $0x1d8] sm:$0xff]
    %v115 = vld [vmem:[%s1 + $0x1e0] sm:$0xff]
    %v116 = vld [vmem:[%s1 + $0x1e8] sm:$0xff]
    %v117 = vld [vmem:[%s1 + $0x1f0] sm:$0xff]
    %v118 = vld [vmem:[%s1 + $0x1f8] sm:$0xff]
    %v119 = vld [vmem:[%s1 + $0x200] sm:$0xff]
    %v120 = vld [vmem:[%s1 + $0x208] sm:$0xff]
    %v121 = vld [vmem:[%s1 + $0x210] sm:$0xff]
    %v122 = vld [vmem:[%s1 + $0x218] sm:$0xff]
    %v123 = vld [vmem:[%s1 + $0x220] sm:$0xff]
    %v124 = vld [vmem:[%s1 + $0x228] sm:$0xff]
    %v125 = vld [vmem:[%s1 + $0x230] sm:$0xff]
    %v126 = vld [vmem:[%s1 + $0x238] sm:$0xff]
    %v127 = vld [vmem:[%s1 + $0x240] sm:$0xff]
    %v128 = vld [vmem:[%s1 + $0x248] sm:$0xff]
    %v129 = vld [vmem:[%s1 + $0x250] sm:$0xff]
    %v130 = vld [vmem:[%s1 + $0x258] sm:$0xff]
    %v131 = vld [vmem:[%s1 + $0x260] sm:$0xff]
    %v132 = vld [vmem:[%s1 + $0x268] sm:$0xff]
    %v133 = vld [vmem:[%s1 + $0x270] sm:$0xff]
    %v134 = vld [vmem:[%s1 + $0x278] sm:$0xff]
    %v135 = vld [vmem:[%s1 + $0x280] sm:$0xff]
    %v136 = vld [vmem:[%s1 + $0x288] sm:$0xff]
    %v137 = vld [vmem:[%s1 + $0x290] sm:$0xff]
    %v138 = vld [vmem:[%s1 + $0x298] sm:$0xff]
    %v139 = vld [vmem:[%s1 + $0x2a0] sm:$0xff]
    %v140 = vld [vmem:[%s1 + $0x2a8] sm:$0xff]
    %v141 = vld [vmem:[%s1 + $0x2b0] sm:$0xff]
    %v142 = vld [vmem:[%s1 + $0x2b8] sm:$0xff]
    %v143 = vld [vmem:[%s1 + $0x2c0] sm:$0xff]
    %v144 = vld [vmem:[%s1 + $0x2c8] sm:$0xff]
    %v145 = vld [vmem:[%s1 + $0x2d0] sm:$0xff]
    %v146 = vld [vmem:[%s1 + $0x2d8] sm:$0xff]
    %v147 = vld [vmem:[%s1 + $0x2e0] sm:$0xff]
    %v148 = vld [vmem:[%s1 + $0x2e8] sm:$0xff]
    %v149 = vld [vmem:[%s1 + $0x2f0] sm:$0xff]
    %v150 = vld [vmem:[%s1 + $0x2f8] sm:$0xff]
    %v151 = vld [vmem:[%s1 + $0x300] sm:$0xff]
    %v152 = vld [vmem:[%s1 + $0x308] sm:$0xff]
    %v153 = vld [vmem:[%s1 + $0x310] sm:$0xff]
    %v154 = vld [vmem:[%s1 + $0x318] sm:$0xff]
    %v155 = vld [vmem:[%s1 + $0x320] sm:$0xff]
    %v156 = vld [vmem:[%s1 + $0x328] sm:$0xff]
    %v157 = vld [vmem:[%s1 + $0x330] sm:$0xff]
    %v158 = vld [vmem:[%s1 + $0x338] sm:$0xff]
    %v159 = vld [vmem:[%s1 + $0x340] sm:$0xff]
    %v160 = vld [vmem:[%s1 + $0x348] sm:$0xff]
    %v161 = vld [vmem:[%s1 + $0x350] sm:$0xff]
    %v162 = vld [vmem:[%s1 + $0x358] sm:$0xff]
    %v163 = vld [vmem:[%s1 + $0x360] sm:$0xff]
    %v164 = vld [vmem:[%s1 + $0x368] sm:$0xff]
    %v165 = vld [vmem:[%s1 + $0x370] sm:$0xff]
    %v166 = vld [vmem:[%s1 + $0x378] sm:$0xff]
    %v167 = vld [vmem:[%s1 + $0x380] sm:$0xff]
    %v168 = vld [vmem:[%s1 + $0x388] sm:$0xff]
    %v169 = vld [vmem:[%s1 + $0x390] sm:$0xff]
    %v170 = vld [vmem:[%s1 + $0x398] sm:$0xff]
    %v171 = vld [vmem:[%s1 + $0x3a0] sm:$0xff]
    %v172 = vld [vmem:[%s1 + $0x3a8] sm:$0xff]
    %v173 = vld [vmem:[%s1 + $0x3b0] sm:$0xff]
    %v174 = vld [vmem:[%s1 + $0x3b8] sm:$0xff]
    %v175 = vld [vmem:[%s1 + $0x3c0] sm:$0xff]
    %v176 = vld [vmem:[%s1 + $0x3c8] sm:$0xff]
    %v177 = vld [vmem:[%s1 + $0x3d0] sm:$0xff]
    %v178 = vld [vmem:[%s1 + $0x3d8] sm:$0xff]
    %v179 = vld [vmem:[%s1 + $0x3e0] sm:$0xff]
    %v180 = vld [vmem:[%s1 + $0x3e8] sm:$0xff]
    %v181 = vld [vmem:[%s1 + $0x3f0] sm:$0xff]
    %v182 = vld [vmem:[%s1 + $0x3f8] sm:$0xff]
    %v183 = vld [vmem:[%s2] sm:$0xf]
    %v185 = vlaneseq
    %v186 = vshrl.u32 %v185, 7
    %v187 = vsub.s32 0, %v186
    %v188 = vrot.slane %v183, %v187
    %v189 = vlaneseq
    %v190 = vshrl.u32 %v189, 7
    %v191 = vsub.s32 1, %v190
    %v192 = vrot.slane %v183, %v191
    %v193 = vlaneseq
    %v194 = vshrl.u32 %v193, 7
    %v195 = vsub.s32 2, %v194
    %v196 = vrot.slane %v183, %v195
    %v197 = vlaneseq
    %v198 = vshrl.u32 %v197, 7
    %v199 = vsub.s32 3, %v198
    %v200 = vrot.slane %v183, %v199
    %v333 = vunpack.c.l.b16 %v55
    %v334 = vunpack.c.h.b16 %v55
    %v335 = vunpack.c.l.b16 %v56
    %v336 = vunpack.c.h.b16 %v56
    %v337 = vunpack.c.l.b16 %v57
    %v338 = vunpack.c.h.b16 %v57
    %v339 = vunpack.c.l.b16 %v58
    %v340 = vunpack.c.h.b16 %v58
    %v341 = vunpack.c.l.b16 %v59
    %v342 = vunpack.c.h.b16 %v59
    %v343 = vunpack.c.l.b16 %v60
    %v344 = vunpack.c.h.b16 %v60
    %v345 = vunpack.c.l.b16 %v61
    %v346 = vunpack.c.h.b16 %v61
    %v347 = vunpack.c.l.b16 %v62
    %v348 = vunpack.c.h.b16 %v62
    %v349 = vunpack.c.l.b16 %v63
    %v350 = vunpack.c.h.b16 %v63
    %v351 = vunpack.c.l.b16 %v64
    %v352 = vunpack.c.h.b16 %v64
    %v353 = vunpack.c.l.b16 %v65
    %v354 = vunpack.c.h.b16 %v65
    %v355 = vunpack.c.l.b16 %v66
    %v356 = vunpack.c.h.b16 %v66
    %v357 = vunpack.c.l.b16 %v67
    %v358 = vunpack.c.h.b16 %v67
    %v359 = vunpack.c.l.b16 %v68
    %v360 = vunpack.c.h.b16 %v68
    %v361 = vunpack.c.l.b16 %v69
    %v362 = vunpack.c.h.b16 %v69
    %v363 = vunpack.c.l.b16 %v70
    %v364 = vunpack.c.h.b16 %v70
    %v365 = vunpack.c.l.b16 %v71
    %v366 = vunpack.c.h.b16 %v71
    %v367 = vunpack.c.l.b16 %v72
    %v368 = vunpack.c.h.b16 %v72
    %v369 = vunpack.c.l.b16 %v73
    %v370 = vunpack.c.h.b16 %v73
    %v371 = vunpack.c.l.b16 %v74
    %v372 = vunpack.c.h.b16 %v74
    %v373 = vunpack.c.l.b16 %v75
    %v374 = vunpack.c.h.b16 %v75
    %v375 = vunpack.c.l.b16 %v76
    %v376 = vunpack.c.h.b16 %v76
    %v377 = vunpack.c.l.b16 %v77
    %v378 = vunpack.c.h.b16 %v77
    %v379 = vunpack.c.l.b16 %v78
    %v380 = vunpack.c.h.b16 %v78
    %v381 = vunpack.c.l.b16 %v79
    %v382 = vunpack.c.h.b16 %v79
    %v383 = vunpack.c.l.b16 %v80
    %v384 = vunpack.c.h.b16 %v80
    %v385 = vunpack.c.l.b16 %v81
    %v386 = vunpack.c.h.b16 %v81
    %v387 = vunpack.c.l.b16 %v82
    %v388 = vunpack.c.h.b16 %v82
    %v389 = vunpack.c.l.b16 %v83
    %v390 = vunpack.c.h.b16 %v83
    %v391 = vunpack.c.l.b16 %v84
    %v392 = vunpack.c.h.b16 %v84
    %v393 = vunpack.c.l.b16 %v85
    %v394 = vunpack.c.h.b16 %v85
    %v395 = vunpack.c.l.b16 %v86
    %v396 = vunpack.c.h.b16 %v86
    %v397 = vunpack.c.l.b16 %v87
    %v398 = vunpack.c.h.b16 %v87
    %v399 = vunpack.c.l.b16 %v88
    %v400 = vunpack.c.h.b16 %v88
    %v401 = vunpack.c.l.b16 %v89
    %v402 = vunpack.c.h.b16 %v89
    %v403 = vunpack.c.l.b16 %v90
    %v404 = vunpack.c.h.b16 %v90
    %v405 = vunpack.c.l.b16 %v91
    %v406 = vunpack.c.h.b16 %v91
    %v407 = vunpack.c.l.b16 %v92
    %v408 = vunpack.c.h.b16 %v92
    %v409 = vunpack.c.l.b16 %v93
    %v410 = vunpack.c.h.b16 %v93
    %v411 = vunpack.c.l.b16 %v94
    %v412 = vunpack.c.h.b16 %v94
    %v413 = vunpack.c.l.b16 %v95
    %v414 = vunpack.c.h.b16 %v95
    %v415 = vunpack.c.l.b16 %v96
    %v416 = vunpack.c.h.b16 %v96
    %v417 = vunpack.c.l.b16 %v97
    %v418 = vunpack.c.h.b16 %v97
    %v419 = vunpack.c.l.b16 %v98
    %v420 = vunpack.c.h.b16 %v98
    %v421 = vunpack.c.l.b16 %v99
    %v422 = vunpack.c.h.b16 %v99
    %v423 = vunpack.c.l.b16 %v100
    %v424 = vunpack.c.h.b16 %v100
    %v425 = vunpack.c.l.b16 %v101
    %v426 = vunpack.c.h.b16 %v101
    %v427 = vunpack.c.l.b16 %v102
    %v428 = vunpack.c.h.b16 %v102
    %v429 = vunpack.c.l.b16 %v103
    %v430 = vunpack.c.h.b16 %v103
    %v431 = vunpack.c.l.b16 %v104
    %v432 = vunpack.c.h.b16 %v104
    %v433 = vunpack.c.l.b16 %v105
    %v434 = vunpack.c.h.b16 %v105
    %v435 = vunpack.c.l.b16 %v106
    %v436 = vunpack.c.h.b16 %v106
    %v437 = vunpack.c.l.b16 %v107
    %v438 = vunpack.c.h.b16 %v107
    %v439 = vunpack.c.l.b16 %v108
    %v440 = vunpack.c.h.b16 %v108
    %v441 = vunpack.c.l.b16 %v109
    %v442 = vunpack.c.h.b16 %v109
    %v443 = vunpack.c.l.b16 %v110
    %v444 = vunpack.c.h.b16 %v110
    %v445 = vunpack.c.l.b16 %v111
    %v446 = vunpack.c.h.b16 %v111
    %v447 = vunpack.c.l.b16 %v112
    %v448 = vunpack.c.h.b16 %v112
    %v449 = vunpack.c.l.b16 %v113
    %v450 = vunpack.c.h.b16 %v113
    %v451 = vunpack.c.l.b16 %v114
    %v452 = vunpack.c.h.b16 %v114
    %v453 = vunpack.c.l.b16 %v115
    %v454 = vunpack.c.h.b16 %v115
    %v455 = vunpack.c.l.b16 %v116
    %v456 = vunpack.c.h.b16 %v116
    %v457 = vunpack.c.l.b16 %v117
    %v458 = vunpack.c.h.b16 %v117
    %v459 = vunpack.c.l.b16 %v118
    %v460 = vunpack.c.h.b16 %v118
    %v461 = vunpack.c.l.b16 %v119
    %v462 = vunpack.c.h.b16 %v119
    %v463 = vunpack.c.l.b16 %v120
    %v464 = vunpack.c.h.b16 %v120
    %v465 = vunpack.c.l.b16 %v121
    %v466 = vunpack.c.h.b16 %v121
    %v467 = vunpack.c.l.b16 %v122
    %v468 = vunpack.c.h.b16 %v122
    %v469 = vunpack.c.l.b16 %v123
    %v470 = vunpack.c.h.b16 %v123
    %v471 = vunpack.c.l.b16 %v124
    %v472 = vunpack.c.h.b16 %v124
    %v473 = vunpack.c.l.b16 %v125
    %v474 = vunpack.c.h.b16 %v125
    %v475 = vunpack.c.l.b16 %v126
    %v476 = vunpack.c.h.b16 %v126
    %v477 = vunpack.c.l.b16 %v127
    %v478 = vunpack.c.h.b16 %v127
    %v479 = vunpack.c.l.b16 %v128
    %v480 = vunpack.c.h.b16 %v128
    %v481 = vunpack.c.l.b16 %v129
    %v482 = vunpack.c.h.b16 %v129
    %v483 = vunpack.c.l.b16 %v130
    %v484 = vunpack.c.h.b16 %v130
    %v485 = vunpack.c.l.b16 %v131
    %v486 = vunpack.c.h.b16 %v131
    %v487 = vunpack.c.l.b16 %v132
    %v488 = vunpack.c.h.b16 %v132
    %v489 = vunpack.c.l.b16 %v133
    %v490 = vunpack.c.h.b16 %v133
    %v491 = vunpack.c.l.b16 %v134
    %v492 = vunpack.c.h.b16 %v134
    %v493 = vunpack.c.l.b16 %v135
    %v494 = vunpack.c.h.b16 %v135
    %v495 = vunpack.c.l.b16 %v136
    %v496 = vunpack.c.h.b16 %v136
    %v497 = vunpack.c.l.b16 %v137
    %v498 = vunpack.c.h.b16 %v137
    %v499 = vunpack.c.l.b16 %v138
    %v500 = vunpack.c.h.b16 %v138
    %v501 = vunpack.c.l.b16 %v139
    %v502 = vunpack.c.h.b16 %v139
    %v503 = vunpack.c.l.b16 %v140
    %v504 = vunpack.c.h.b16 %v140
    %v505 = vunpack.c.l.b16 %v141
    %v506 = vunpack.c.h.b16 %v141
    %v507 = vunpack.c.l.b16 %v142
    %v508 = vunpack.c.h.b16 %v142
    %v509 = vunpack.c.l.b16 %v143
    %v510 = vunpack.c.h.b16 %v143
    %v511 = vunpack.c.l.b16 %v144
    %v512 = vunpack.c.h.b16 %v144
    %v513 = vunpack.c.l.b16 %v145
    %v514 = vunpack.c.h.b16 %v145
    %v515 = vunpack.c.l.b16 %v146
    %v516 = vunpack.c.h.b16 %v146
    %v517 = vunpack.c.l.b16 %v147
    %v518 = vunpack.c.h.b16 %v147
    %v519 = vunpack.c.l.b16 %v148
    %v520 = vunpack.c.h.b16 %v148
    %v521 = vunpack.c.l.b16 %v149
    %v522 = vunpack.c.h.b16 %v149
    %v523 = vunpack.c.l.b16 %v150
    %v524 = vunpack.c.h.b16 %v150
    %v525 = vunpack.c.l.b16 %v151
    %v526 = vunpack.c.h.b16 %v151
    %v527 = vunpack.c.l.b16 %v152
    %v528 = vunpack.c.h.b16 %v152
    %v529 = vunpack.c.l.b16 %v153
    %v530 = vunpack.c.h.b16 %v153
    %v531 = vunpack.c.l.b16 %v154
    %v532 = vunpack.c.h.b16 %v154
    %v533 = vunpack.c.l.b16 %v155
    %v534 = vunpack.c.h.b16 %v155
    %v535 = vunpack.c.l.b16 %v156
    %v536 = vunpack.c.h.b16 %v156
    %v537 = vunpack.c.l.b16 %v157
    %v538 = vunpack.c.h.b16 %v157
    %v539 = vunpack.c.l.b16 %v158
    %v540 = vunpack.c.h.b16 %v158
    %v541 = vunpack.c.l.b16 %v159
    %v542 = vunpack.c.h.b16 %v159
    %v543 = vunpack.c.l.b16 %v160
    %v544 = vunpack.c.h.b16 %v160
    %v545 = vunpack.c.l.b16 %v161
    %v546 = vunpack.c.h.b16 %v161
    %v547 = vunpack.c.l.b16 %v162
    %v548 = vunpack.c.h.b16 %v162
    %v549 = vunpack.c.l.b16 %v163
    %v550 = vunpack.c.h.b16 %v163
    %v551 = vunpack.c.l.b16 %v164
    %v552 = vunpack.c.h.b16 %v164
    %v553 = vunpack.c.l.b16 %v165
    %v554 = vunpack.c.h.b16 %v165
    %v555 = vunpack.c.l.b16 %v166
    %v556 = vunpack.c.h.b16 %v166
    %v557 = vunpack.c.l.b16 %v167
    %v558 = vunpack.c.h.b16 %v167
    %v559 = vunpack.c.l.b16 %v168
    %v560 = vunpack.c.h.b16 %v168
    %v561 = vunpack.c.l.b16 %v169
    %v562 = vunpack.c.h.b16 %v169
    %v563 = vunpack.c.l.b16 %v170
    %v564 = vunpack.c.h.b16 %v170
    %v565 = vunpack.c.l.b16 %v171
    %v566 = vunpack.c.h.b16 %v171
    %v567 = vunpack.c.l.b16 %v172
    %v568 = vunpack.c.h.b16 %v172
    %v569 = vunpack.c.l.b16 %v173
    %v570 = vunpack.c.h.b16 %v173
    %v571 = vunpack.c.l.b16 %v174
    %v572 = vunpack.c.h.b16 %v174
    %v573 = vunpack.c.l.b16 %v175
    %v574 = vunpack.c.h.b16 %v175
    %v575 = vunpack.c.l.b16 %v176
    %v576 = vunpack.c.h.b16 %v176
    %v577 = vunpack.c.l.b16 %v177
    %v578 = vunpack.c.h.b16 %v177
    %v579 = vunpack.c.l.b16 %v178
    %v580 = vunpack.c.h.b16 %v178
    %v581 = vunpack.c.l.b16 %v179
    %v582 = vunpack.c.h.b16 %v179
    %v583 = vunpack.c.l.b16 %v180
    %v584 = vunpack.c.h.b16 %v180
    %v585 = vunpack.c.l.b16 %v181
    %v586 = vunpack.c.h.b16 %v181
    %v587 = vunpack.c.l.b16 %v182
    %v588 = vunpack.c.h.b16 %v182
    %v589 = vpack.c.b16 %v337, %v333
    %v590 = vpack.c.b16 %v338, %v334
    %v591 = vpack.c.b16 %v339, %v335
    %v592 = vpack.c.b16 %v340, %v336
    %v593 = vpack.c.b16 %v345, %v341
    %v594 = vpack.c.b16 %v346, %v342
    %v595 = vpack.c.b16 %v347, %v343
    %v596 = vpack.c.b16 %v348, %v344
    %v597 = vpack.c.b16 %v353, %v349
    %v598 = vpack.c.b16 %v354, %v350
    %v599 = vpack.c.b16 %v355, %v351
    %v600 = vpack.c.b16 %v356, %v352
    %v601 = vpack.c.b16 %v361, %v357
    %v602 = vpack.c.b16 %v362, %v358
    %v603 = vpack.c.b16 %v363, %v359
    %v604 = vpack.c.b16 %v364, %v360
    %v605 = vpack.c.b16 %v369, %v365
    %v606 = vpack.c.b16 %v370, %v366
    %v607 = vpack.c.b16 %v371, %v367
    %v608 = vpack.c.b16 %v372, %v368
    %v609 = vpack.c.b16 %v377, %v373
    %v610 = vpack.c.b16 %v378, %v374
    %v611 = vpack.c.b16 %v379, %v375
    %v612 = vpack.c.b16 %v380, %v376
    %v613 = vpack.c.b16 %v385, %v381
    %v614 = vpack.c.b16 %v386, %v382
    %v615 = vpack.c.b16 %v387, %v383
    %v616 = vpack.c.b16 %v388, %v384
    %v617 = vpack.c.b16 %v393, %v389
    %v618 = vpack.c.b16 %v394, %v390
    %v619 = vpack.c.b16 %v395, %v391
    %v620 = vpack.c.b16 %v396, %v392
    %v621 = vpack.c.b16 %v401, %v397
    %v622 = vpack.c.b16 %v402, %v398
    %v623 = vpack.c.b16 %v403, %v399
    %v624 = vpack.c.b16 %v404, %v400
    %v625 = vpack.c.b16 %v409, %v405
    %v626 = vpack.c.b16 %v410, %v406
    %v627 = vpack.c.b16 %v411, %v407
    %v628 = vpack.c.b16 %v412, %v408
    %v629 = vpack.c.b16 %v417, %v413
    %v630 = vpack.c.b16 %v418, %v414
    %v631 = vpack.c.b16 %v419, %v415
    %v632 = vpack.c.b16 %v420, %v416
    %v633 = vpack.c.b16 %v425, %v421
    %v634 = vpack.c.b16 %v426, %v422
    %v635 = vpack.c.b16 %v427, %v423
    %v636 = vpack.c.b16 %v428, %v424
    %v637 = vpack.c.b16 %v433, %v429
    %v638 = vpack.c.b16 %v434, %v430
    %v639 = vpack.c.b16 %v435, %v431
    %v640 = vpack.c.b16 %v436, %v432
    %v641 = vpack.c.b16 %v441, %v437
    %v642 = vpack.c.b16 %v442, %v438
    %v643 = vpack.c.b16 %v443, %v439
    %v644 = vpack.c.b16 %v444, %v440
    %v645 = vpack.c.b16 %v449, %v445
    %v646 = vpack.c.b16 %v450, %v446
    %v647 = vpack.c.b16 %v451, %v447
    %v648 = vpack.c.b16 %v452, %v448
    %v649 = vpack.c.b16 %v457, %v453
    %v650 = vpack.c.b16 %v458, %v454
    %v651 = vpack.c.b16 %v459, %v455
    %v652 = vpack.c.b16 %v460, %v456
    %v653 = vpack.c.b16 %v465, %v461
    %v654 = vpack.c.b16 %v466, %v462
    %v655 = vpack.c.b16 %v467, %v463
    %v656 = vpack.c.b16 %v468, %v464
    %v657 = vpack.c.b16 %v473, %v469
    %v658 = vpack.c.b16 %v474, %v470
    %v659 = vpack.c.b16 %v475, %v471
    %v660 = vpack.c.b16 %v476, %v472
    %v661 = vpack.c.b16 %v481, %v477
    %v662 = vpack.c.b16 %v482, %v478
    %v663 = vpack.c.b16 %v483, %v479
    %v664 = vpack.c.b16 %v484, %v480
    %v665 = vpack.c.b16 %v489, %v485
    %v666 = vpack.c.b16 %v490, %v486
    %v667 = vpack.c.b16 %v491, %v487
    %v668 = vpack.c.b16 %v492, %v488
    %v669 = vpack.c.b16 %v497, %v493
    %v670 = vpack.c.b16 %v498, %v494
    %v671 = vpack.c.b16 %v499, %v495
    %v672 = vpack.c.b16 %v500, %v496
    %v673 = vpack.c.b16 %v505, %v501
    %v674 = vpack.c.b16 %v506, %v502
    %v675 = vpack.c.b16 %v507, %v503
    %v676 = vpack.c.b16 %v508, %v504
    %v677 = vpack.c.b16 %v513, %v509
    %v678 = vpack.c.b16 %v514, %v510
    %v679 = vpack.c.b16 %v515, %v511
    %v680 = vpack.c.b16 %v516, %v512
    %v681 = vpack.c.b16 %v521, %v517
    %v682 = vpack.c.b16 %v522, %v518
    %v683 = vpack.c.b16 %v523, %v519
    %v684 = vpack.c.b16 %v524, %v520
    %v685 = vpack.c.b16 %v529, %v525
    %v686 = vpack.c.b16 %v530, %v526
    %v687 = vpack.c.b16 %v531, %v527
    %v688 = vpack.c.b16 %v532, %v528
    %v689 = vpack.c.b16 %v537, %v533
    %v690 = vpack.c.b16 %v538, %v534
    %v691 = vpack.c.b16 %v539, %v535
    %v692 = vpack.c.b16 %v540, %v536
    %v693 = vpack.c.b16 %v545, %v541
    %v694 = vpack.c.b16 %v546, %v542
    %v695 = vpack.c.b16 %v547, %v543
    %v696 = vpack.c.b16 %v548, %v544
    %v697 = vpack.c.b16 %v553, %v549
    %v698 = vpack.c.b16 %v554, %v550
    %v699 = vpack.c.b16 %v555, %v551
    %v700 = vpack.c.b16 %v556, %v552
    %v701 = vpack.c.b16 %v561, %v557
    %v702 = vpack.c.b16 %v562, %v558
    %v703 = vpack.c.b16 %v563, %v559
    %v704 = vpack.c.b16 %v564, %v560
    %v705 = vpack.c.b16 %v569, %v565
    %v706 = vpack.c.b16 %v570, %v566
    %v707 = vpack.c.b16 %v571, %v567
    %v708 = vpack.c.b16 %v572, %v568
    %v709 = vpack.c.b16 %v577, %v573
    %v710 = vpack.c.b16 %v578, %v574
    %v711 = vpack.c.b16 %v579, %v575
    %v712 = vpack.c.b16 %v580, %v576
    %v713 = vpack.c.b16 %v585, %v581
    %v714 = vpack.c.b16 %v586, %v582
    %v715 = vpack.c.b16 %v587, %v583
    %v716 = vpack.c.b16 %v588, %v584
    %845 = vmatprep.subr.bf16.mxu0 %v590
    %846 = vmatpush1.bf16.msra.mxu0 %v589
    %847 = vmatprep.subr.bf16.mxu0 %v594
    %848 = vmatpush1.bf16.msra.mxu0 %v593
    %849 = vmatprep.subr.bf16.mxu0 %v598
    %850 = vmatpush1.bf16.msra.mxu0 %v597
    %851 = vmatprep.subr.bf16.mxu0 %v602
    %852 = vmatpush1.bf16.msra.mxu0 %v601
    %853 = vmatprep.subr.bf16.mxu0 %v606
    %854 = vmatpush1.bf16.msra.mxu0 %v605
    %855 = vmatprep.subr.bf16.mxu0 %v610
    %856 = vmatpush1.bf16.msra.mxu0 %v609
    %857 = vmatprep.subr.bf16.mxu0 %v614
    %858 = vmatpush1.bf16.msra.mxu0 %v613
    %859 = vmatprep.subr.bf16.mxu0 %v618
    %860 = vmatpush1.bf16.msra.mxu0 %v617
    %861 = vmatprep.subr.bf16.mxu0 %v622
    %862 = vmatpush1.bf16.msra.mxu0 %v621
    %863 = vmatprep.subr.bf16.mxu0 %v626
    %864 = vmatpush1.bf16.msra.mxu0 %v625
    %865 = vmatprep.subr.bf16.mxu0 %v630
    %866 = vmatpush1.bf16.msra.mxu0 %v629
    %867 = vmatprep.subr.bf16.mxu0 %v634
    %868 = vmatpush1.bf16.msra.mxu0 %v633
    %869 = vmatprep.subr.bf16.mxu0 %v638
    %870 = vmatpush1.bf16.msra.mxu0 %v637
    %871 = vmatprep.subr.bf16.mxu0 %v642
    %872 = vmatpush1.bf16.msra.mxu0 %v641
    %873 = vmatprep.subr.bf16.mxu0 %v646
    %874 = vmatpush1.bf16.msra.mxu0 %v645
    %875 = vmatprep.subr.bf16.mxu0 %v650
    %876 = vmatpush1.bf16.msra.mxu0 %v649
    %877 = vmatprep.mubr.bf16.mxu0 %v52
    %878 = vmatmul.mubr.bf16.gmra.mrb[0].mxu0 %v51
    %v879 = vpop.f32.mrb[0].mxu0
    %v880 = vadd.f32 %v188, %v879
    %v881 = vpop.f32.mrb[0].mxu0
    %v882 = vadd.f32 %v192, %v881
    %v883 = vpop.f32.mrb[0].mxu0
    %v884 = vpop.f32.mrb[0].mxu0
    %885 = vdwg.mxu0
    %886 = vmatprep.subr.bf16.mxu0 %v654
    %887 = vmatpush1.bf16.msra.mxu0 %v653
    %888 = vmatprep.subr.bf16.mxu0 %v658
    %889 = vmatpush1.bf16.msra.mxu0 %v657
    %890 = vmatprep.subr.bf16.mxu0 %v662
    %891 = vmatpush1.bf16.msra.mxu0 %v661
    %892 = vmatprep.subr.bf16.mxu0 %v666
    %893 = vmatpush1.bf16.msra.mxu0 %v665
    %894 = vmatprep.subr.bf16.mxu0 %v670
    %895 = vmatpush1.bf16.msra.mxu0 %v669
    %896 = vmatprep.subr.bf16.mxu0 %v674
    %897 = vmatpush1.bf16.msra.mxu0 %v673
    %898 = vmatprep.subr.bf16.mxu0 %v678
    %899 = vmatpush1.bf16.msra.mxu0 %v677
    %900 = vmatprep.subr.bf16.mxu0 %v682
    %901 = vmatpush1.bf16.msra.mxu0 %v681
    %902 = vmatprep.subr.bf16.mxu0 %v686
    %903 = vmatpush1.bf16.msra.mxu0 %v685
    %904 = vmatprep.subr.bf16.mxu0 %v690
    %905 = vmatpush1.bf16.msra.mxu0 %v689
    %906 = vmatprep.subr.bf16.mxu0 %v694
    %907 = vmatpush1.bf16.msra.mxu0 %v693
    %908 = vmatprep.subr.bf16.mxu0 %v698
    %909 = vmatpush1.bf16.msra.mxu0 %v697
    %910 = vmatprep.subr.bf16.mxu0 %v702
    %911 = vmatpush1.bf16.msra.mxu0 %v701
    %912 = vmatprep.subr.bf16.mxu0 %v706
    %913 = vmatpush1.bf16.msra.mxu0 %v705
    %914 = vmatprep.subr.bf16.mxu0 %v710
    %915 = vmatpush1.bf16.msra.mxu0 %v709
    %916 = vmatprep.subr.bf16.mxu0 %v714
    %917 = vmatpush1.bf16.msra.mxu0 %v713
    %918 = vmatprep.mubr.bf16.mxu0 %v54
    %919 = vmatmul.mubr.bf16.gmra.mrb[0].mxu0 %v53
    %v920 = vpop.f32.mrb[0].mxu0
    %v921 = vadd.f32 %v880, %v920
    %v922 = vpop.f32.mrb[0].mxu0
    %v923 = vadd.f32 %v882, %v922
    %v924 = vpop.f32.mrb[0].mxu0
    %v925 = vpop.f32.mrb[0].mxu0
    %926 = vdwg.mxu0
    %927 = vmatprep.subr.bf16.mxu0 %v592
    %928 = vmatpush1.bf16.msra.mxu0 %v591
    %929 = vmatprep.subr.bf16.mxu0 %v596
    %930 = vmatpush1.bf16.msra.mxu0 %v595
    %931 = vmatprep.subr.bf16.mxu0 %v600
    %932 = vmatpush1.bf16.msra.mxu0 %v599
    %933 = vmatprep.subr.bf16.mxu0 %v604
    %934 = vmatpush1.bf16.msra.mxu0 %v603
    %935 = vmatprep.subr.bf16.mxu0 %v608
    %936 = vmatpush1.bf16.msra.mxu0 %v607
    %937 = vmatprep.subr.bf16.mxu0 %v612
    %938 = vmatpush1.bf16.msra.mxu0 %v611
    %939 = vmatprep.subr.bf16.mxu0 %v616
    %940 = vmatpush1.bf16.msra.mxu0 %v615
    %941 = vmatprep.subr.bf16.mxu0 %v620
    %942 = vmatpush1.bf16.msra.mxu0 %v619
    %943 = vmatprep.subr.bf16.mxu0 %v624
    %944 = vmatpush1.bf16.msra.mxu0 %v623
    %945 = vmatprep.subr.bf16.mxu0 %v628
    %946 = vmatpush1.bf16.msra.mxu0 %v627
    %947 = vmatprep.subr.bf16.mxu0 %v632
    %948 = vmatpush1.bf16.msra.mxu0 %v631
    %949 = vmatprep.subr.bf16.mxu0 %v636
    %950 = vmatpush1.bf16.msra.mxu0 %v635
    %951 = vmatprep.subr.bf16.mxu0 %v640
    %952 = vmatpush1.bf16.msra.mxu0 %v639
    %953 = vmatprep.subr.bf16.mxu0 %v644
    %954 = vmatpush1.bf16.msra.mxu0 %v643
    %955 = vmatprep.subr.bf16.mxu0 %v648
    %956 = vmatpush1.bf16.msra.mxu0 %v647
    %957 = vmatprep.subr.bf16.mxu0 %v652
    %958 = vmatpush1.bf16.msra.mxu0 %v651
    %959 = vmatprep.mubr.bf16.mxu0 %v52
    %960 = vmatmul.mubr.bf16.gmra.mrb[0].mxu0 %v51
    %v961 = vpop.f32.mrb[0].mxu0
    %v962 = vadd.f32 %v196, %v961
    %v963 = vpop.f32.mrb[0].mxu0
    %v964 = vadd.f32 %v200, %v963
    %v965 = vpop.f32.mrb[0].mxu0
    %v966 = vpop.f32.mrb[0].mxu0
    %967 = vdwg.mxu0
    %968 = vmatprep.subr.bf16.mxu0 %v656
    %969 = vmatpush1.bf16.msra.mxu0 %v655
    %970 = vmatprep.subr.bf16.mxu0 %v660
    %971 = vmatpush1.bf16.msra.mxu0 %v659
    %972 = vmatprep.subr.bf16.mxu0 %v664
    %973 = vmatpush1.bf16.msra.mxu0 %v663
    %974 = vmatprep.subr.bf16.mxu0 %v668
    %975 = vmatpush1.bf16.msra.mxu0 %v667
    %976 = vmatprep.subr.bf16.mxu0 %v672
    %977 = vmatpush1.bf16.msra.mxu0 %v671
    %978 = vmatprep.subr.bf16.mxu0 %v676
    %979 = vmatpush1.bf16.msra.mxu0 %v675
    %980 = vmatprep.subr.bf16.mxu0 %v680
    %981 = vmatpush1.bf16.msra.mxu0 %v679
    %982 = vmatprep.subr.bf16.mxu0 %v684
    %983 = vmatpush1.bf16.msra.mxu0 %v683
    %984 = vmatprep.subr.bf16.mxu0 %v688
    %985 = vmatpush1.bf16.msra.mxu0 %v687
    %986 = vmatprep.subr.bf16.mxu0 %v692
    %987 = vmatpush1.bf16.msra.mxu0 %v691
    %988 = vmatprep.subr.bf16.mxu0 %v696
    %989 = vmatpush1.bf16.msra.mxu0 %v695
    %990 = vmatprep.subr.bf16.mxu0 %v700
    %991 = vmatpush1.bf16.msra.mxu0 %v699
    %992 = vmatprep.subr.bf16.mxu0 %v704
    %993 = vmatpush1.bf16.msra.mxu0 %v703
    %994 = vmatprep.subr.bf16.mxu0 %v708
    %995 = vmatpush1.bf16.msra.mxu0 %v707
    %996 = vmatprep.subr.bf16.mxu0 %v712
    %997 = vmatpush1.bf16.msra.mxu0 %v711
    %998 = vmatprep.subr.bf16.mxu0 %v716
    %999 = vmatpush1.bf16.msra.mxu0 %v715
    %1000 = vmatprep.mubr.bf16.mxu0 %v54
    %1001 = vmatmul.mubr.bf16.gmra.mrb[0].mxu0 %v53
    %v1002 = vpop.f32.mrb[0].mxu0
    %v1003 = vadd.f32 %v962, %v1002
    %v1004 = vpop.f32.mrb[0].mxu0
    %v1005 = vadd.f32 %v964, %v1004
    %v1006 = vpop.f32.mrb[0].mxu0
    %v1007 = vpop.f32.mrb[0].mxu0
    %1008 = vdwg.mxu0
    %v1009 = vmax.f32 %v921, 0.0
    %v1010 = vmax.f32 %v923, 0.0
    %v1011 = vmax.f32 %v1003, 0.0
    %v1012 = vmax.f32 %v1005, 0.0
    %v1013 = vpack.c.bf16 %v1009, %v1009
    %v1014 = vpack.c.bf16 %v1010, %v1010
    %v1015 = vpack.c.bf16 %v1011, %v1011
    %v1016 = vpack.c.bf16 %v1012, %v1012
    %v1017 = vld [vmem:[%s3] sm:$0xff]
    %v1018 = vld [vmem:[%s3 + $0x8] sm:$0xff]
    %v1019 = vld [vmem:[%s3 + $0x10] sm:$0xff]
    %v1020 = vld [vmem:[%s3 + $0x18] sm:$0xff]
    %v1021 = vld [vmem:[%s3 + $0x20] sm:$0xff]
    %v1022 = vld [vmem:[%s3 + $0x28] sm:$0xff]
    %v1023 = vld [vmem:[%s3 + $0x30] sm:$0xff]
    %v1024 = vld [vmem:[%s3 + $0x38] sm:$0xff]
    %v1025 = vld [vmem:[%s3 + $0x40] sm:$0xff]
    %v1026 = vld [vmem:[%s3 + $0x48] sm:$0xff]
    %v1027 = vld [vmem:[%s3 + $0x50] sm:$0xff]
    %v1028 = vld [vmem:[%s3 + $0x58] sm:$0xff]
    %v1029 = vld [vmem:[%s3 + $0x60] sm:$0xff]
    %v1030 = vld [vmem:[%s3 + $0x68] sm:$0xff]
    %v1031 = vld [vmem:[%s3 + $0x70] sm:$0xff]
    %v1032 = vld [vmem:[%s3 + $0x78] sm:$0xff]
    %v1033 = vld [vmem:[%s3 + $0x80] sm:$0xff]
    %v1034 = vld [vmem:[%s3 + $0x88] sm:$0xff]
    %v1035 = vld [vmem:[%s3 + $0x90] sm:$0xff]
    %v1036 = vld [vmem:[%s3 + $0x98] sm:$0xff]
    %v1037 = vld [vmem:[%s3 + $0xa0] sm:$0xff]
    %v1038 = vld [vmem:[%s3 + $0xa8] sm:$0xff]
    %v1039 = vld [vmem:[%s3 + $0xb0] sm:$0xff]
    %v1040 = vld [vmem:[%s3 + $0xb8] sm:$0xff]
    %v1041 = vld [vmem:[%s3 + $0xc0] sm:$0xff]
    %v1042 = vld [vmem:[%s3 + $0xc8] sm:$0xff]
    %v1043 = vld [vmem:[%s3 + $0xd0] sm:$0xff]
    %v1044 = vld [vmem:[%s3 + $0xd8] sm:$0xff]
    %v1045 = vld [vmem:[%s3 + $0xe0] sm:$0xff]
    %v1046 = vld [vmem:[%s3 + $0xe8] sm:$0xff]
    %v1047 = vld [vmem:[%s3 + $0xf0] sm:$0xff]
    %v1048 = vld [vmem:[%s3 + $0xf8] sm:$0xff]
    %v1049 = vld [vmem:[%s3 + $0x100] sm:$0xff]
    %v1050 = vld [vmem:[%s3 + $0x108] sm:$0xff]
    %v1051 = vld [vmem:[%s3 + $0x110] sm:$0xff]
    %v1052 = vld [vmem:[%s3 + $0x118] sm:$0xff]
    %v1053 = vld [vmem:[%s3 + $0x120] sm:$0xff]
    %v1054 = vld [vmem:[%s3 + $0x128] sm:$0xff]
    %v1055 = vld [vmem:[%s3 + $0x130] sm:$0xff]
    %v1056 = vld [vmem:[%s3 + $0x138] sm:$0xff]
    %v1057 = vld [vmem:[%s3 + $0x140] sm:$0xff]
    %v1058 = vld [vmem:[%s3 + $0x148] sm:$0xff]
    %v1059 = vld [vmem:[%s3 + $0x150] sm:$0xff]
    %v1060 = vld [vmem:[%s3 + $0x158] sm:$0xff]
    %v1061 = vld [vmem:[%s3 + $0x160] sm:$0xff]
    %v1062 = vld [vmem:[%s3 + $0x168] sm:$0xff]
    %v1063 = vld [vmem:[%s3 + $0x170] sm:$0xff]
    %v1064 = vld [vmem:[%s3 + $0x178] sm:$0xff]
    %v1065 = vld [vmem:[%s3 + $0x180] sm:$0xff]
    %v1066 = vld [vmem:[%s3 + $0x188] sm:$0xff]
    %v1067 = vld [vmem:[%s3 + $0x190] sm:$0xff]
    %v1068 = vld [vmem:[%s3 + $0x198] sm:$0xff]
    %v1069 = vld [vmem:[%s3 + $0x1a0] sm:$0xff]
    %v1070 = vld [vmem:[%s3 + $0x1a8] sm:$0xff]
    %v1071 = vld [vmem:[%s3 + $0x1b0] sm:$0xff]
    %v1072 = vld [vmem:[%s3 + $0x1b8] sm:$0xff]
    %v1073 = vld [vmem:[%s3 + $0x1c0] sm:$0xff]
    %v1074 = vld [vmem:[%s3 + $0x1c8] sm:$0xff]
    %v1075 = vld [vmem:[%s3 + $0x1d0] sm:$0xff]
    %v1076 = vld [vmem:[%s3 + $0x1d8] sm:$0xff]
    %v1077 = vld [vmem:[%s3 + $0x1e0] sm:$0xff]
    %v1078 = vld [vmem:[%s3 + $0x1e8] sm:$0xff]
    %v1079 = vld [vmem:[%s3 + $0x1f0] sm:$0xff]
    %v1080 = vld [vmem:[%s3 + $0x1f8] sm:$0xff]
    %v1081 = vld [vmem:[%s4] sm:$0x3]
    %v1083 = vlaneseq
    %v1084 = vshrl.u32 %v1083, 7
    %v1085 = vsub.s32 0, %v1084
    %v1086 = vrot.slane %v1081, %v1085
    %v1087 = vlaneseq
    %v1088 = vshrl.u32 %v1087, 7
    %v1089 = vsub.s32 1, %v1088
    %v1090 = vrot.slane %v1081, %v1089
    %v1157 = vunpack.c.l.b16 %v1017
    %v1158 = vunpack.c.h.b16 %v1017
    %v1159 = vunpack.c.l.b16 %v1018
    %v1160 = vunpack.c.h.b16 %v1018
    %v1161 = vunpack.c.l.b16 %v1019
    %v1162 = vunpack.c.h.b16 %v1019
    %v1163 = vunpack.c.l.b16 %v1020
    %v1164 = vunpack.c.h.b16 %v1020
    %v1165 = vunpack.c.l.b16 %v1021
    %v1166 = vunpack.c.h.b16 %v1021
    %v1167 = vunpack.c.l.b16 %v1022
    %v1168 = vunpack.c.h.b16 %v1022
    %v1169 = vunpack.c.l.b16 %v1023
    %v1170 = vunpack.c.h.b16 %v1023
    %v1171 = vunpack.c.l.b16 %v1024
    %v1172 = vunpack.c.h.b16 %v1024
    %v1173 = vunpack.c.l.b16 %v1025
    %v1174 = vunpack.c.h.b16 %v1025
    %v1175 = vunpack.c.l.b16 %v1026
    %v1176 = vunpack.c.h.b16 %v1026
    %v1177 = vunpack.c.l.b16 %v1027
    %v1178 = vunpack.c.h.b16 %v1027
    %v1179 = vunpack.c.l.b16 %v1028
    %v1180 = vunpack.c.h.b16 %v1028
    %v1181 = vunpack.c.l.b16 %v1029
    %v1182 = vunpack.c.h.b16 %v1029
    %v1183 = vunpack.c.l.b16 %v1030
    %v1184 = vunpack.c.h.b16 %v1030
    %v1185 = vunpack.c.l.b16 %v1031
    %v1186 = vunpack.c.h.b16 %v1031
    %v1187 = vunpack.c.l.b16 %v1032
    %v1188 = vunpack.c.h.b16 %v1032
    %v1189 = vunpack.c.l.b16 %v1033
    %v1190 = vunpack.c.h.b16 %v1033
    %v1191 = vunpack.c.l.b16 %v1034
    %v1192 = vunpack.c.h.b16 %v1034
    %v1193 = vunpack.c.l.b16 %v1035
    %v1194 = vunpack.c.h.b16 %v1035
    %v1195 = vunpack.c.l.b16 %v1036
    %v1196 = vunpack.c.h.b16 %v1036
    %v1197 = vunpack.c.l.b16 %v1037
    %v1198 = vunpack.c.h.b16 %v1037
    %v1199 = vunpack.c.l.b16 %v1038
    %v1200 = vunpack.c.h.b16 %v1038
    %v1201 = vunpack.c.l.b16 %v1039
    %v1202 = vunpack.c.h.b16 %v1039
    %v1203 = vunpack.c.l.b16 %v1040
    %v1204 = vunpack.c.h.b16 %v1040
    %v1205 = vunpack.c.l.b16 %v1041
    %v1206 = vunpack.c.h.b16 %v1041
    %v1207 = vunpack.c.l.b16 %v1042
    %v1208 = vunpack.c.h.b16 %v1042
    %v1209 = vunpack.c.l.b16 %v1043
    %v1210 = vunpack.c.h.b16 %v1043
    %v1211 = vunpack.c.l.b16 %v1044
    %v1212 = vunpack.c.h.b16 %v1044
    %v1213 = vunpack.c.l.b16 %v1045
    %v1214 = vunpack.c.h.b16 %v1045
    %v1215 = vunpack.c.l.b16 %v1046
    %v1216 = vunpack.c.h.b16 %v1046
    %v1217 = vunpack.c.l.b16 %v1047
    %v1218 = vunpack.c.h.b16 %v1047
    %v1219 = vunpack.c.l.b16 %v1048
    %v1220 = vunpack.c.h.b16 %v1048
    %v1221 = vunpack.c.l.b16 %v1049
    %v1222 = vunpack.c.h.b16 %v1049
    %v1223 = vunpack.c.l.b16 %v1050
    %v1224 = vunpack.c.h.b16 %v1050
    %v1225 = vunpack.c.l.b16 %v1051
    %v1226 = vunpack.c.h.b16 %v1051
    %v1227 = vunpack.c.l.b16 %v1052
    %v1228 = vunpack.c.h.b16 %v1052
    %v1229 = vunpack.c.l.b16 %v1053
    %v1230 = vunpack.c.h.b16 %v1053
    %v1231 = vunpack.c.l.b16 %v1054
    %v1232 = vunpack.c.h.b16 %v1054
    %v1233 = vunpack.c.l.b16 %v1055
    %v1234 = vunpack.c.h.b16 %v1055
    %v1235 = vunpack.c.l.b16 %v1056
    %v1236 = vunpack.c.h.b16 %v1056
    %v1237 = vunpack.c.l.b16 %v1057
    %v1238 = vunpack.c.h.b16 %v1057
    %v1239 = vunpack.c.l.b16 %v1058
    %v1240 = vunpack.c.h.b16 %v1058
    %v1241 = vunpack.c.l.b16 %v1059
    %v1242 = vunpack.c.h.b16 %v1059
    %v1243 = vunpack.c.l.b16 %v1060
    %v1244 = vunpack.c.h.b16 %v1060
    %v1245 = vunpack.c.l.b16 %v1061
    %v1246 = vunpack.c.h.b16 %v1061
    %v1247 = vunpack.c.l.b16 %v1062
    %v1248 = vunpack.c.h.b16 %v1062
    %v1249 = vunpack.c.l.b16 %v1063
    %v1250 = vunpack.c.h.b16 %v1063
    %v1251 = vunpack.c.l.b16 %v1064
    %v1252 = vunpack.c.h.b16 %v1064
    %v1253 = vunpack.c.l.b16 %v1065
    %v1254 = vunpack.c.h.b16 %v1065
    %v1255 = vunpack.c.l.b16 %v1066
    %v1256 = vunpack.c.h.b16 %v1066
    %v1257 = vunpack.c.l.b16 %v1067
    %v1258 = vunpack.c.h.b16 %v1067
    %v1259 = vunpack.c.l.b16 %v1068
    %v1260 = vunpack.c.h.b16 %v1068
    %v1261 = vunpack.c.l.b16 %v1069
    %v1262 = vunpack.c.h.b16 %v1069
    %v1263 = vunpack.c.l.b16 %v1070
    %v1264 = vunpack.c.h.b16 %v1070
    %v1265 = vunpack.c.l.b16 %v1071
    %v1266 = vunpack.c.h.b16 %v1071
    %v1267 = vunpack.c.l.b16 %v1072
    %v1268 = vunpack.c.h.b16 %v1072
    %v1269 = vunpack.c.l.b16 %v1073
    %v1270 = vunpack.c.h.b16 %v1073
    %v1271 = vunpack.c.l.b16 %v1074
    %v1272 = vunpack.c.h.b16 %v1074
    %v1273 = vunpack.c.l.b16 %v1075
    %v1274 = vunpack.c.h.b16 %v1075
    %v1275 = vunpack.c.l.b16 %v1076
    %v1276 = vunpack.c.h.b16 %v1076
    %v1277 = vunpack.c.l.b16 %v1077
    %v1278 = vunpack.c.h.b16 %v1077
    %v1279 = vunpack.c.l.b16 %v1078
    %v1280 = vunpack.c.h.b16 %v1078
    %v1281 = vunpack.c.l.b16 %v1079
    %v1282 = vunpack.c.h.b16 %v1079
    %v1283 = vunpack.c.l.b16 %v1080
    %v1284 = vunpack.c.h.b16 %v1080
    %v1285 = vpack.c.b16 %v1159, %v1157
    %v1286 = vpack.c.b16 %v1160, %v1158
    %v1287 = vpack.c.b16 %v1163, %v1161
    %v1288 = vpack.c.b16 %v1164, %v1162
    %v1289 = vpack.c.b16 %v1167, %v1165
    %v1290 = vpack.c.b16 %v1168, %v1166
    %v1291 = vpack.c.b16 %v1171, %v1169
    %v1292 = vpack.c.b16 %v1172, %v1170
    %v1293 = vpack.c.b16 %v1175, %v1173
    %v1294 = vpack.c.b16 %v1176, %v1174
    %v1295 = vpack.c.b16 %v1179, %v1177
    %v1296 = vpack.c.b16 %v1180, %v1178
    %v1297 = vpack.c.b16 %v1183, %v1181
    %v1298 = vpack.c.b16 %v1184, %v1182
    %v1299 = vpack.c.b16 %v1187, %v1185
    %v1300 = vpack.c.b16 %v1188, %v1186
    %v1301 = vpack.c.b16 %v1191, %v1189
    %v1302 = vpack.c.b16 %v1192, %v1190
    %v1303 = vpack.c.b16 %v1195, %v1193
    %v1304 = vpack.c.b16 %v1196, %v1194
    %v1305 = vpack.c.b16 %v1199, %v1197
    %v1306 = vpack.c.b16 %v1200, %v1198
    %v1307 = vpack.c.b16 %v1203, %v1201
    %v1308 = vpack.c.b16 %v1204, %v1202
    %v1309 = vpack.c.b16 %v1207, %v1205
    %v1310 = vpack.c.b16 %v1208, %v1206
    %v1311 = vpack.c.b16 %v1211, %v1209
    %v1312 = vpack.c.b16 %v1212, %v1210
    %v1313 = vpack.c.b16 %v1215, %v1213
    %v1314 = vpack.c.b16 %v1216, %v1214
    %v1315 = vpack.c.b16 %v1219, %v1217
    %v1316 = vpack.c.b16 %v1220, %v1218
    %v1317 = vpack.c.b16 %v1223, %v1221
    %v1318 = vpack.c.b16 %v1224, %v1222
    %v1319 = vpack.c.b16 %v1227, %v1225
    %v1320 = vpack.c.b16 %v1228, %v1226
    %v1321 = vpack.c.b16 %v1231, %v1229
    %v1322 = vpack.c.b16 %v1232, %v1230
    %v1323 = vpack.c.b16 %v1235, %v1233
    %v1324 = vpack.c.b16 %v1236, %v1234
    %v1325 = vpack.c.b16 %v1239, %v1237
    %v1326 = vpack.c.b16 %v1240, %v1238
    %v1327 = vpack.c.b16 %v1243, %v1241
    %v1328 = vpack.c.b16 %v1244, %v1242
    %v1329 = vpack.c.b16 %v1247, %v1245
    %v1330 = vpack.c.b16 %v1248, %v1246
    %v1331 = vpack.c.b16 %v1251, %v1249
    %v1332 = vpack.c.b16 %v1252, %v1250
    %v1333 = vpack.c.b16 %v1255, %v1253
    %v1334 = vpack.c.b16 %v1256, %v1254
    %v1335 = vpack.c.b16 %v1259, %v1257
    %v1336 = vpack.c.b16 %v1260, %v1258
    %v1337 = vpack.c.b16 %v1263, %v1261
    %v1338 = vpack.c.b16 %v1264, %v1262
    %v1339 = vpack.c.b16 %v1267, %v1265
    %v1340 = vpack.c.b16 %v1268, %v1266
    %v1341 = vpack.c.b16 %v1271, %v1269
    %v1342 = vpack.c.b16 %v1272, %v1270
    %v1343 = vpack.c.b16 %v1275, %v1273
    %v1344 = vpack.c.b16 %v1276, %v1274
    %v1345 = vpack.c.b16 %v1279, %v1277
    %v1346 = vpack.c.b16 %v1280, %v1278
    %v1347 = vpack.c.b16 %v1283, %v1281
    %v1348 = vpack.c.b16 %v1284, %v1282
    %1413 = vmatprep.subr.bf16.mxu0 %v1286
    %1414 = vmatpush1.bf16.msra.mxu0 %v1285
    %1415 = vmatprep.subr.bf16.mxu0 %v1288
    %1416 = vmatpush1.bf16.msra.mxu0 %v1287
    %1417 = vmatprep.subr.bf16.mxu0 %v1290
    %1418 = vmatpush1.bf16.msra.mxu0 %v1289
    %1419 = vmatprep.subr.bf16.mxu0 %v1292
    %1420 = vmatpush1.bf16.msra.mxu0 %v1291
    %1421 = vmatprep.subr.bf16.mxu0 %v1294
    %1422 = vmatpush1.bf16.msra.mxu0 %v1293
    %1423 = vmatprep.subr.bf16.mxu0 %v1296
    %1424 = vmatpush1.bf16.msra.mxu0 %v1295
    %1425 = vmatprep.subr.bf16.mxu0 %v1298
    %1426 = vmatpush1.bf16.msra.mxu0 %v1297
    %1427 = vmatprep.subr.bf16.mxu0 %v1300
    %1428 = vmatpush1.bf16.msra.mxu0 %v1299
    %1429 = vmatprep.subr.bf16.mxu0 %v1302
    %1430 = vmatpush1.bf16.msra.mxu0 %v1301
    %1431 = vmatprep.subr.bf16.mxu0 %v1304
    %1432 = vmatpush1.bf16.msra.mxu0 %v1303
    %1433 = vmatprep.subr.bf16.mxu0 %v1306
    %1434 = vmatpush1.bf16.msra.mxu0 %v1305
    %1435 = vmatprep.subr.bf16.mxu0 %v1308
    %1436 = vmatpush1.bf16.msra.mxu0 %v1307
    %1437 = vmatprep.subr.bf16.mxu0 %v1310
    %1438 = vmatpush1.bf16.msra.mxu0 %v1309
    %1439 = vmatprep.subr.bf16.mxu0 %v1312
    %1440 = vmatpush1.bf16.msra.mxu0 %v1311
    %1441 = vmatprep.subr.bf16.mxu0 %v1314
    %1442 = vmatpush1.bf16.msra.mxu0 %v1313
    %1443 = vmatprep.subr.bf16.mxu0 %v1316
    %1444 = vmatpush1.bf16.msra.mxu0 %v1315
    %1445 = vmatprep.mubr.bf16.mxu0 %v1014
    %1446 = vmatmul.mubr.bf16.gmra.mrb[0].mxu0 %v1013
    %v1447 = vpop.f32.mrb[0].mxu0
    %v1448 = vadd.f32 %v1086, %v1447
    %v1449 = vpop.f32.mrb[0].mxu0
    %v1450 = vadd.f32 %v1090, %v1449
    %v1451 = vpop.f32.mrb[0].mxu0
    %v1452 = vpop.f32.mrb[0].mxu0
    %1453 = vdwg.mxu0
    %1454 = vmatprep.subr.bf16.mxu0 %v1318
    %1455 = vmatpush1.bf16.msra.mxu0 %v1317
    %1456 = vmatprep.subr.bf16.mxu0 %v1320
    %1457 = vmatpush1.bf16.msra.mxu0 %v1319
    %1458 = vmatprep.subr.bf16.mxu0 %v1322
    %1459 = vmatpush1.bf16.msra.mxu0 %v1321
    %1460 = vmatprep.subr.bf16.mxu0 %v1324
    %1461 = vmatpush1.bf16.msra.mxu0 %v1323
    %1462 = vmatprep.subr.bf16.mxu0 %v1326
    %1463 = vmatpush1.bf16.msra.mxu0 %v1325
    %1464 = vmatprep.subr.bf16.mxu0 %v1328
    %1465 = vmatpush1.bf16.msra.mxu0 %v1327
    %1466 = vmatprep.subr.bf16.mxu0 %v1330
    %1467 = vmatpush1.bf16.msra.mxu0 %v1329
    %1468 = vmatprep.subr.bf16.mxu0 %v1332
    %1469 = vmatpush1.bf16.msra.mxu0 %v1331
    %1470 = vmatprep.subr.bf16.mxu0 %v1334
    %1471 = vmatpush1.bf16.msra.mxu0 %v1333
    %1472 = vmatprep.subr.bf16.mxu0 %v1336
    %1473 = vmatpush1.bf16.msra.mxu0 %v1335
    %1474 = vmatprep.subr.bf16.mxu0 %v1338
    %1475 = vmatpush1.bf16.msra.mxu0 %v1337
    %1476 = vmatprep.subr.bf16.mxu0 %v1340
    %1477 = vmatpush1.bf16.msra.mxu0 %v1339
    %1478 = vmatprep.subr.bf16.mxu0 %v1342
    %1479 = vmatpush1.bf16.msra.mxu0 %v1341
    %1480 = vmatprep.subr.bf16.mxu0 %v1344
    %1481 = vmatpush1.bf16.msra.mxu0 %v1343
    %1482 = vmatprep.subr.bf16.mxu0 %v1346
    %1483 = vmatpush1.bf16.msra.mxu0 %v1345
    %1484 = vmatprep.subr.bf16.mxu0 %v1348
    %1485 = vmatpush1.bf16.msra.mxu0 %v1347
    %1486 = vmatprep.mubr.bf16.mxu0 %v1016
    %1487 = vmatmul.mubr.bf16.gmra.mrb[0].mxu0 %v1015
    %v1488 = vpop.f32.mrb[0].mxu0
    %v1489 = vadd.f32 %v1448, %v1488
    %v1490 = vpop.f32.mrb[0].mxu0
    %v1491 = vadd.f32 %v1450, %v1490
    %v1492 = vpop.f32.mrb[0].mxu0
    %v1493 = vpop.f32.mrb[0].mxu0
    %1494 = vdwg.mxu0
    %v1495 = vmax.f32 %v1489, 0.0
    %v1496 = vmax.f32 %v1491, 0.0
    %v1497 = vpack.c.bf16 %v1495, %v1495
    %v1498 = vpack.c.bf16 %v1496, %v1496
    %v1499 = vld [vmem:[%s5] sm:$0xf]
    %v1500 = vld [vmem:[%s5 + $0x4] sm:$0xf]
    %v1501 = vld [vmem:[%s5 + $0x8] sm:$0xf]
    %v1502 = vld [vmem:[%s5 + $0xc] sm:$0xf]
    %v1503 = vld [vmem:[%s5 + $0x10] sm:$0xf]
    %v1504 = vld [vmem:[%s5 + $0x14] sm:$0xf]
    %v1505 = vld [vmem:[%s5 + $0x18] sm:$0xf]
    %v1506 = vld [vmem:[%s5 + $0x1c] sm:$0xf]
    %v1507 = vld [vmem:[%s5 + $0x20] sm:$0xf]
    %v1508 = vld [vmem:[%s5 + $0x24] sm:$0xf]
    %v1509 = vld [vmem:[%s5 + $0x28] sm:$0xf]
    %v1510 = vld [vmem:[%s5 + $0x2c] sm:$0xf]
    %v1511 = vld [vmem:[%s5 + $0x30] sm:$0xf]
    %v1512 = vld [vmem:[%s5 + $0x34] sm:$0xf]
    %v1513 = vld [vmem:[%s5 + $0x38] sm:$0xf]
    %v1514 = vld [vmem:[%s5 + $0x3c] sm:$0xf]
    %v1515 = vld [vmem:[%s5 + $0x40] sm:$0xf]
    %v1516 = vld [vmem:[%s5 + $0x44] sm:$0xf]
    %v1517 = vld [vmem:[%s5 + $0x48] sm:$0xf]
    %v1518 = vld [vmem:[%s5 + $0x4c] sm:$0xf]
    %v1519 = vld [vmem:[%s5 + $0x50] sm:$0xf]
    %v1520 = vld [vmem:[%s5 + $0x54] sm:$0xf]
    %v1521 = vld [vmem:[%s5 + $0x58] sm:$0xf]
    %v1522 = vld [vmem:[%s5 + $0x5c] sm:$0xf]
    %v1523 = vld [vmem:[%s5 + $0x60] sm:$0xf]
    %v1524 = vld [vmem:[%s5 + $0x64] sm:$0xf]
    %v1525 = vld [vmem:[%s5 + $0x68] sm:$0xf]
    %v1526 = vld [vmem:[%s5 + $0x6c] sm:$0xf]
    %v1527 = vld [vmem:[%s5 + $0x70] sm:$0xf]
    %v1528 = vld [vmem:[%s5 + $0x74] sm:$0xf]
    %v1529 = vld [vmem:[%s5 + $0x78] sm:$0xf]
    %v1530 = vld [vmem:[%s5 + $0x7c] sm:$0xf]
    %v1531 = vld [vmem:[%s6] sm:$0x1]
    %v1533 = vlaneseq
    %v1534 = vshrl.u32 %v1533, 7
    %v1535 = vsub.s32 0, %v1534
    %v1536 = vrot.slane %v1531, %v1535
    %v1570 = vunpack.c.l.b16 %v1499
    %v1571 = vunpack.c.l.b16 %v1500
    %v1572 = vunpack.c.l.b16 %v1501
    %v1573 = vunpack.c.l.b16 %v1502
    %v1574 = vunpack.c.l.b16 %v1503
    %v1575 = vunpack.c.l.b16 %v1504
    %v1576 = vunpack.c.l.b16 %v1505
    %v1577 = vunpack.c.l.b16 %v1506
    %v1578 = vunpack.c.l.b16 %v1507
    %v1579 = vunpack.c.l.b16 %v1508
    %v1580 = vunpack.c.l.b16 %v1509
    %v1581 = vunpack.c.l.b16 %v1510
    %v1582 = vunpack.c.l.b16 %v1511
    %v1583 = vunpack.c.l.b16 %v1512
    %v1584 = vunpack.c.l.b16 %v1513
    %v1585 = vunpack.c.l.b16 %v1514
    %v1586 = vunpack.c.l.b16 %v1515
    %v1587 = vunpack.c.l.b16 %v1516
    %v1588 = vunpack.c.l.b16 %v1517
    %v1589 = vunpack.c.l.b16 %v1518
    %v1590 = vunpack.c.l.b16 %v1519
    %v1591 = vunpack.c.l.b16 %v1520
    %v1592 = vunpack.c.l.b16 %v1521
    %v1593 = vunpack.c.l.b16 %v1522
    %v1594 = vunpack.c.l.b16 %v1523
    %v1595 = vunpack.c.l.b16 %v1524
    %v1596 = vunpack.c.l.b16 %v1525
    %v1597 = vunpack.c.l.b16 %v1526
    %v1598 = vunpack.c.l.b16 %v1527
    %v1599 = vunpack.c.l.b16 %v1528
    %v1600 = vunpack.c.l.b16 %v1529
    %v1601 = vunpack.c.l.b16 %v1530
    %v1602 = vpack.c.b16 %v1571, %v1570
    %v1603 = vpack.c.b16 %v1573, %v1572
    %v1604 = vpack.c.b16 %v1575, %v1574
    %v1605 = vpack.c.b16 %v1577, %v1576
    %v1606 = vpack.c.b16 %v1579, %v1578
    %v1607 = vpack.c.b16 %v1581, %v1580
    %v1608 = vpack.c.b16 %v1583, %v1582
    %v1609 = vpack.c.b16 %v1585, %v1584
    %v1610 = vpack.c.b16 %v1587, %v1586
    %v1611 = vpack.c.b16 %v1589, %v1588
    %v1612 = vpack.c.b16 %v1591, %v1590
    %v1613 = vpack.c.b16 %v1593, %v1592
    %v1614 = vpack.c.b16 %v1595, %v1594
    %v1615 = vpack.c.b16 %v1597, %v1596
    %v1616 = vpack.c.b16 %v1599, %v1598
    %v1617 = vpack.c.b16 %v1601, %v1600
    %1634 = vmatprep.subr.bf16.mxu0 0
    %1635 = vmatpush1.bf16.msra.mxu0 %v1602
    %1636 = vmatprep.subr.bf16.mxu0 0
    %1637 = vmatpush1.bf16.msra.mxu0 %v1603
    %1638 = vmatprep.subr.bf16.mxu0 0
    %1639 = vmatpush1.bf16.msra.mxu0 %v1604
    %1640 = vmatprep.subr.bf16.mxu0 0
    %1641 = vmatpush1.bf16.msra.mxu0 %v1605
    %1642 = vmatprep.subr.bf16.mxu0 0
    %1643 = vmatpush1.bf16.msra.mxu0 %v1606
    %1644 = vmatprep.subr.bf16.mxu0 0
    %1645 = vmatpush1.bf16.msra.mxu0 %v1607
    %1646 = vmatprep.subr.bf16.mxu0 0
    %1647 = vmatpush1.bf16.msra.mxu0 %v1608
    %1648 = vmatprep.subr.bf16.mxu0 0
    %1649 = vmatpush1.bf16.msra.mxu0 %v1609
    %1650 = vmatprep.subr.bf16.mxu0 0
    %1651 = vmatpush1.bf16.msra.mxu0 %v1610
    %1652 = vmatprep.subr.bf16.mxu0 0
    %1653 = vmatpush1.bf16.msra.mxu0 %v1611
    %1654 = vmatprep.subr.bf16.mxu0 0
    %1655 = vmatpush1.bf16.msra.mxu0 %v1612
    %1656 = vmatprep.subr.bf16.mxu0 0
    %1657 = vmatpush1.bf16.msra.mxu0 %v1613
    %1658 = vmatprep.subr.bf16.mxu0 0
    %1659 = vmatpush1.bf16.msra.mxu0 %v1614
    %1660 = vmatprep.subr.bf16.mxu0 0
    %1661 = vmatpush1.bf16.msra.mxu0 %v1615
    %1662 = vmatprep.subr.bf16.mxu0 0
    %1663 = vmatpush1.bf16.msra.mxu0 %v1616
    %1664 = vmatprep.subr.bf16.mxu0 0
    %1665 = vmatpush1.bf16.msra.mxu0 %v1617
    %1666 = vmatprep.mubr.bf16.mxu0 %v1498
    %1667 = vmatmul.mubr.bf16.gmra.mrb[0].mxu0 %v1497
    %v1668 = vpop.f32.mrb[0].mxu0
    %v1669 = vadd.f32 %v1536, %v1668
    %v1670 = vpop.f32.mrb[0].mxu0
    %v1671 = vpop.f32.mrb[0].mxu0
    %v1672 = vpop.f32.mrb[0].mxu0
    %1673 = vdwg.mxu0
    %vm1674 = vcmask 74752
    %1675 = vst.msk [vmem:[#allocation2] sm:$0x3] %vm1674, %v1669
    // Predicated region
    $region30: #{tinyml_forward.3} parent=1 // pred_check
      _
    $region31: #{tinyml_forward.3} parent=1 // pred_check_branch
      %1677 = sbr.rel (0) target = $region33
    $region32: #{tinyml_forward.3} parent=1 // pred_region
      %s1679 = ssub.s32 32, 32
      %1680 = vsyncadd [#allocation3], %s1679
      %s1682 = sshll.u32 [#allocation2], 4
      %s1683 = int_to_ptr.vmem [resolvable:$true] %s1682
      %1685 = dma.vmem_to_hbm [thread:$0]  %s1683, 32, %s7, [#allocation3]
    $region33: #{tinyml_forward.3} parent=1 // pred_fallthru
      _
    // Predicated region
    $region34: #{tinyml_forward.3} parent=1 // pred_check
      _
    $region35: #{tinyml_forward.3} parent=1 // pred_check_branch
      %1687 = sbr.rel (0) target = $region37
    $region36: #{tinyml_forward.3} parent=1 // pred_region
      %1688 = dma.done [#allocation3], 32
    $region37: #{tinyml_forward.3} parent=1 // pred_fallthru
      _
    %1689 = vsyncpa [#allocation3], 1

// kernel: tinyml_forward.2
$region0: #{tinyml_forward.2}
  #allocation0 [shape = 'u32[]', space=smem, size = 0x4, offset = 0x4, fixed_abs, tag = 'smem constant byte address 0x4 - core index']
  #allocation1 [shape = 'u32[144,128]{1,0:T(1,128)}', space=vmem, size = 0x12000, scoped, tag = 'internal scratch']
  #allocation2 [shape = 'f32[2,16,16,16]{3,2,1,0:T(8,128)}', space=vmem, size = 0x40000, scoped, tag = 'scratch operand']
  #allocation3 [shape = 'f32[2,10,10,16]{3,2,1,0:T(8,128)}', space=vmem, size = 0x28000, scoped, tag = 'scratch operand']
  %s0 = inlined_call_operand.vmem [shape: f32[512,27], index: 0, kind: input, shape index: {}]
  %s1 = inlined_call_operand.vmem [shape: f32[27,16], index: 1, kind: input, shape index: {}]
  %s2 = inlined_call_operand.vmem [shape: f32[1,16], index: 2, kind: input, shape index: {}]
  %s3 = inlined_call_operand.vmem [shape: f32[1,16], index: 3, kind: input, shape index: {}]
  %s4 = inlined_call_operand.vmem [shape: f32[9,16,8], index: 4, kind: input, shape index: {}]
  %s5 = inlined_call_operand.vmem [shape: f32[1,8], index: 5, kind: input, shape index: {}]
  %s6 = inlined_call_operand.vmem [shape: f32[1,8], index: 6, kind: input, shape index: {}]
  %s7 = inlined_call_operand.vmem [shape: f32[2,64,8], index: 7, kind: output, shape index: {}]
  %s8 = sld [smem:[#allocation0]]
  $region38: #{tinyml_forward.2} parent=0
    _
  %s10 = ssub.s32 1, %s8
  %s11 = scalar_select 0, %s10, %s8
  // Predicated region
  $region2: #{tinyml_forward.2} parent=0 // pred_check
    _
  $region3: #{tinyml_forward.2} parent=0 // pred_check_branch
    %13 = sbr.rel (0) target = $region5
  $region4: #{tinyml_forward.2} parent=0 // pred_region
    _
  $region5: #{tinyml_forward.2} parent=0 // pred_fallthru
    _
  // Predicated region
  $region6: #{tinyml_forward.2} parent=0 // pred_check
    _
  $region7: #{tinyml_forward.2} parent=0 // pred_check_branch
    %15 = sbr.rel (0) target = $region9
  $region8: #{tinyml_forward.2} parent=0 // pred_region
    _
  $region9: #{tinyml_forward.2} parent=0 // pred_fallthru
    _
  // Predicated region
  $region10: #{tinyml_forward.2} parent=0 // pred_check
    _
  $region11: #{tinyml_forward.2} parent=0 // pred_check_branch
    %17 = sbr.rel (0) target = $region13
  $region12: #{tinyml_forward.2} parent=0 // pred_region
    _
  $region13: #{tinyml_forward.2} parent=0 // pred_fallthru
    _
  // Predicated region
  $region14: #{tinyml_forward.2} parent=0 // pred_check
    _
  $region15: #{tinyml_forward.2} parent=0 // pred_check_branch
    %19 = sbr.rel (0) target = $region17
  $region16: #{tinyml_forward.2} parent=0 // pred_region
    _
  $region17: #{tinyml_forward.2} parent=0 // pred_fallthru
    _
  // Predicated region
  $region18: #{tinyml_forward.2} parent=0 // pred_check
    _
  $region19: #{tinyml_forward.2} parent=0 // pred_check_branch
    %21 = sbr.rel (0) target = $region21
  $region20: #{tinyml_forward.2} parent=0 // pred_region
    _
  $region21: #{tinyml_forward.2} parent=0 // pred_fallthru
    _
  // Predicated region
  $region22: #{tinyml_forward.2} parent=0 // pred_check
    _
  $region23: #{tinyml_forward.2} parent=0 // pred_check_branch
    %23 = sbr.rel (0) target = $region25
  $region24: #{tinyml_forward.2} parent=0 // pred_region
    _
  $region25: #{tinyml_forward.2} parent=0 // pred_fallthru
    _
  // Predicated region
  $region26: #{tinyml_forward.2} parent=0 // pred_check
    _
  $region27: #{tinyml_forward.2} parent=0 // pred_check_branch
    %25 = sbr.rel (0) target = $region29
  $region28: #{tinyml_forward.2} parent=0 // pred_region
    _
  $region29: #{tinyml_forward.2} parent=0 // pred_fallthru
    _
  %v26 = vld [vmem:[%s0] sm:$0xff]
  %v27 = vld [vmem:[%s0 + $0x8] sm:$0xff]
  %v28 = vld [vmem:[%s0 + $0x10] sm:$0xff]
  %v29 = vld [vmem:[%s0 + $0x18] sm:$0xff]
  %v30 = vld [vmem:[%s0 + $0x20] sm:$0xff]
  %v31 = vld [vmem:[%s0 + $0x28] sm:$0xff]
  %v32 = vld [vmem:[%s0 + $0x30] sm:$0xff]
  %v33 = vld [vmem:[%s0 + $0x38] sm:$0xff]
  %v34 = vld [vmem:[%s0 + $0x40] sm:$0xff]
  %v35 = vld [vmem:[%s0 + $0x48] sm:$0xff]
  %v36 = vld [vmem:[%s0 + $0x50] sm:$0xff]
  %v37 = vld [vmem:[%s0 + $0x58] sm:$0xff]
  %v38 = vld [vmem:[%s0 + $0x60] sm:$0xff]
  %v39 = vld [vmem:[%s0 + $0x68] sm:$0xff]
  %v40 = vld [vmem:[%s0 + $0x70] sm:$0xff]
  %v41 = vld [vmem:[%s0 + $0x78] sm:$0xff]
  %v42 = vld [vmem:[%s0 + $0x80] sm:$0xff]
  %v43 = vld [vmem:[%s0 + $0x88] sm:$0xff]
  %v44 = vld [vmem:[%s0 + $0x90] sm:$0xff]
  %v45 = vld [vmem:[%s0 + $0x98] sm:$0xff]
  %v46 = vld [vmem:[%s0 + $0xa0] sm:$0xff]
  %v47 = vld [vmem:[%s0 + $0xa8] sm:$0xff]
  %v48 = vld [vmem:[%s0 + $0xb0] sm:$0xff]
  %v49 = vld [vmem:[%s0 + $0xb8] sm:$0xff]
  %v50 = vld [vmem:[%s0 + $0xc0] sm:$0xff]
  %v51 = vld [vmem:[%s0 + $0xc8] sm:$0xff]
  %v52 = vld [vmem:[%s0 + $0xd0] sm:$0xff]
  %v53 = vld [vmem:[%s0 + $0xd8] sm:$0xff]
  %v54 = vld [vmem:[%s0 + $0xe0] sm:$0xff]
  %v55 = vld [vmem:[%s0 + $0xe8] sm:$0xff]
  %v56 = vld [vmem:[%s0 + $0xf0] sm:$0xff]
  %v57 = vld [vmem:[%s0 + $0xf8] sm:$0xff]
  %v58 = vld [vmem:[%s0 + $0x100] sm:$0xff]
  %v59 = vld [vmem:[%s0 + $0x108] sm:$0xff]
  %v60 = vld [vmem:[%s0 + $0x110] sm:$0xff]
  %v61 = vld [vmem:[%s0 + $0x118] sm:$0xff]
  %v62 = vld [vmem:[%s0 + $0x120] sm:$0xff]
  %v63 = vld [vmem:[%s0 + $0x128] sm:$0xff]
  %v64 = vld [vmem:[%s0 + $0x130] sm:$0xff]
  %v65 = vld [vmem:[%s0 + $0x138] sm:$0xff]
  %v66 = vld [vmem:[%s0 + $0x140] sm:$0xff]
  %v67 = vld [vmem:[%s0 + $0x148] sm:$0xff]
  %v68 = vld [vmem:[%s0 + $0x150] sm:$0xff]
  %v69 = vld [vmem:[%s0 + $0x158] sm:$0xff]
  %v70 = vld [vmem:[%s0 + $0x160] sm:$0xff]
  %v71 = vld [vmem:[%s0 + $0x168] sm:$0xff]
  %v72 = vld [vmem:[%s0 + $0x170] sm:$0xff]
  %v73 = vld [vmem:[%s0 + $0x178] sm:$0xff]
  %v74 = vld [vmem:[%s0 + $0x180] sm:$0xff]
  %v75 = vld [vmem:[%s0 + $0x188] sm:$0xff]
  %v76 = vld [vmem:[%s0 + $0x190] sm:$0xff]
  %v77 = vld [vmem:[%s0 + $0x198] sm:$0xff]
  %v78 = vld [vmem:[%s0 + $0x1a0] sm:$0xff]
  %v79 = vld [vmem:[%s0 + $0x1a8] sm:$0xff]
  %v80 = vld [vmem:[%s0 + $0x1b0] sm:$0xff]
  %v81 = vld [vmem:[%s0 + $0x1b8] sm:$0xff]
  %v82 = vld [vmem:[%s0 + $0x1c0] sm:$0xff]
  %v83 = vld [vmem:[%s0 + $0x1c8] sm:$0xff]
  %v84 = vld [vmem:[%s0 + $0x1d0] sm:$0xff]
  %v85 = vld [vmem:[%s0 + $0x1d8] sm:$0xff]
  %v86 = vld [vmem:[%s0 + $0x1e0] sm:$0xff]
  %v87 = vld [vmem:[%s0 + $0x1e8] sm:$0xff]
  %v88 = vld [vmem:[%s0 + $0x1f0] sm:$0xff]
  %v89 = vld [vmem:[%s0 + $0x1f8] sm:$0xff]
  %v90 = vld [vmem:[%s1] sm:$0xff]
  %v91 = vld [vmem:[%s1 + $0x8] sm:$0xff]
  %v92 = vld [vmem:[%s1 + $0x10] sm:$0xff]
  %v93 = vld [vmem:[%s1 + $0x18] sm:$0x7]
  %vm94 = vcmask 220160
  %v96 = vsel %vm94, %v26, 0
  %v99 = vsel %vm94, %v27, 0
  %v102 = vsel %vm94, %v28, 0
  %v105 = vsel %vm94, %v29, 0
  %v108 = vsel %vm94, %v30, 0
  %v111 = vsel %vm94, %v31, 0
  %v114 = vsel %vm94, %v32, 0
  %v117 = vsel %vm94, %v33, 0
  %v120 = vsel %vm94, %v34, 0
  %v123 = vsel %vm94, %v35, 0
  %v126 = vsel %vm94, %v36, 0
  %v129 = vsel %vm94, %v37, 0
  %v132 = vsel %vm94, %v38, 0
  %v135 = vsel %vm94, %v39, 0
  %v138 = vsel %vm94, %v40, 0
  %v141 = vsel %vm94, %v41, 0
  %v144 = vsel %vm94, %v42, 0
  %v147 = vsel %vm94, %v43, 0
  %v150 = vsel %vm94, %v44, 0
  %v153 = vsel %vm94, %v45, 0
  %v156 = vsel %vm94, %v46, 0
  %v159 = vsel %vm94, %v47, 0
  %v162 = vsel %vm94, %v48, 0
  %v165 = vsel %vm94, %v49, 0
  %v168 = vsel %vm94, %v50, 0
  %v171 = vsel %vm94, %v51, 0
  %v174 = vsel %vm94, %v52, 0
  %v177 = vsel %vm94, %v53, 0
  %v180 = vsel %vm94, %v54, 0
  %v183 = vsel %vm94, %v55, 0
  %v186 = vsel %vm94, %v56, 0
  %v189 = vsel %vm94, %v57, 0
  %v192 = vsel %vm94, %v58, 0
  %v195 = vsel %vm94, %v59, 0
  %v198 = vsel %vm94, %v60, 0
  %v201 = vsel %vm94, %v61, 0
  %v204 = vsel %vm94, %v62, 0
  %v207 = vsel %vm94, %v63, 0
  %v210 = vsel %vm94, %v64, 0
  %v213 = vsel %vm94, %v65, 0
  %v216 = vsel %vm94, %v66, 0
  %v219 = vsel %vm94, %v67, 0
  %v222 = vsel %vm94, %v68, 0
  %v225 = vsel %vm94, %v69, 0
  %v228 = vsel %vm94, %v70, 0
  %v231 = vsel %vm94, %v71, 0
  %v234 = vsel %vm94, %v72, 0
  %v237 = vsel %vm94, %v73, 0
  %v240 = vsel %vm94, %v74, 0
  %v243 = vsel %vm94, %v75, 0
  %v246 = vsel %vm94, %v76, 0
  %v249 = vsel %vm94, %v77, 0
  %v252 = vsel %vm94, %v78, 0
  %v255 = vsel %vm94, %v79, 0
  %v258 = vsel %vm94, %v80, 0
  %v261 = vsel %vm94, %v81, 0
  %v264 = vsel %vm94, %v82, 0
  %v267 = vsel %vm94, %v83, 0
  %v270 = vsel %vm94, %v84, 0
  %v273 = vsel %vm94, %v85, 0
  %v276 = vsel %vm94, %v86, 0
  %v279 = vsel %vm94, %v87, 0
  %v282 = vsel %vm94, %v88, 0
  %v285 = vsel %vm94, %v89, 0
  %vm287 = vcmask 1042432
  %v289 = vsel %vm287, %v93, 0
  %291 = vmatprep.subr.mxu0 0.0
  %292 = vmatpush1.msra.mxu0 %v90
  %293 = vmatprep.subr.mxu0 0.0
  %294 = vmatpush1.msra.mxu0 %v91
  %295 = vmatprep.subr.mxu0 0.0
  %296 = vmatpush1.msra.mxu0 %v92
  %297 = vmatprep.subr.mxu0 0.0
  %298 = vmatpush1.msra.mxu0 %v289
  %299 = vmatprep.subr.mxu0 0.0
  %300 = vmatpush1.msra.mxu0 0.0
  %301 = vmatprep.subr.mxu0 0.0
  %302 = vmatpush1.msra.mxu0 0.0
  %303 = vmatprep.subr.mxu0 0.0
  %304 = vmatpush1.msra.mxu0 0.0
  %305 = vmatprep.subr.mxu0 0.0
  %306 = vmatpush1.msra.mxu0 0.0
  %307 = vmatprep.subr.mxu0 0.0
  %308 = vmatpush1.msra.mxu0 0.0
  %309 = vmatprep.subr.mxu0 0.0
  %310 = vmatpush1.msra.mxu0 0.0
  %311 = vmatprep.subr.mxu0 0.0
  %312 = vmatpush1.msra.mxu0 0.0
  %313 = vmatprep.subr.mxu0 0.0
  %314 = vmatpush1.msra.mxu0 0.0
  %315 = vmatprep.subr.mxu0 0.0
  %316 = vmatpush1.msra.mxu0 0.0
  %317 = vmatprep.subr.mxu0 0.0
  %318 = vmatpush1.msra.mxu0 0.0
  %319 = vmatprep.subr.mxu0 0.0
  %320 = vmatpush1.msra.mxu0 0.0
  %321 = vmatprep.subr.mxu0 0.0
  %322 = vmatpush1.msra.mxu0 0.0
  %323 = vmatprep.subr.mxu0 0.0
  %324 = vmatpush1.msra.mxu0 0.0
  %325 = vmatprep.subr.mxu0 0.0
  %326 = vmatpush1.msra.mxu0 0.0
  %327 = vmatprep.subr.mxu0 0.0
  %328 = vmatpush1.msra.mxu0 0.0
  %329 = vmatprep.subr.mxu0 0.0
  %330 = vmatpush1.msra.mxu0 0.0
  %331 = vmatprep.subr.mxu0 0.0
  %332 = vmatpush1.msra.mxu0 0.0
  %333 = vmatprep.subr.mxu0 0.0
  %334 = vmatpush1.msra.mxu0 0.0
  %335 = vmatprep.subr.mxu0 0.0
  %336 = vmatpush1.msra.mxu0 0.0
  %337 = vmatprep.subr.mxu0 0.0
  %338 = vmatpush1.msra.mxu0 0.0
  %339 = vmatprep.subr.mxu0 0.0
  %340 = vmatpush1.msra.mxu0 0.0
  %341 = vmatprep.subr.mxu0 0.0
  %342 = vmatpush1.msra.mxu0 0.0
  %343 = vmatprep.subr.mxu0 0.0
  %344 = vmatpush1.msra.mxu0 0.0
  %345 = vmatprep.subr.mxu0 0.0
  %346 = vmatpush1.msra.mxu0 0.0
  %347 = vmatprep.subr.mxu0 0.0
  %348 = vmatpush1.msra.mxu0 0.0
  %349 = vmatprep.subr.mxu0 0.0
  %350 = vmatpush1.msra.mxu0 0.0
  %351 = vmatprep.subr.mxu0 0.0
  %352 = vmatpush1.msra.mxu0 0.0
  %353 = vmatprep.subr.mxu0 0.0
  %354 = vmatpush1.msra.mxu0 0.0
  %355 = vmatprep.mubr.f32.mxu0 0.0
  %356 = vmatmul.mubr.f32.gmra.mrb[0].mxu0 %v96
  %v357 = vpop.f32.mrb[0].mxu0
  %v358 = vadd.f32 0.0, %v357
  %v359 = vpop.f32.mrb[0].mxu0
  %360 = vmatprep.mubr.f32.mxu0 0.0
  %361 = vmatmul.mubr.f32.gmra.mrb[0].mxu0 %v99
  %v362 = vpop.f32.mrb[0].mxu0
  %v363 = vadd.f32 0.0, %v362
  %v364 = vpop.f32.mrb[0].mxu0
  %365 = vmatprep.mubr.f32.mxu0 0.0
  %366 = vmatmul.mubr.f32.gmra.mrb[0].mxu0 %v102
  %v367 = vpop.f32.mrb[0].mxu0
  %v368 = vadd.f32 0.0, %v367
  %v369 = vpop.f32.mrb[0].mxu0
  %370 = vmatprep.mubr.f32.mxu0 0.0
  %371 = vmatmul.mubr.f32.gmra.mrb[0].mxu0 %v105
  %v372 = vpop.f32.mrb[0].mxu0
  %v373 = vadd.f32 0.0, %v372
  %v374 = vpop.f32.mrb[0].mxu0
  %375 = vmatprep.mubr.f32.mxu0 0.0
  %376 = vmatmul.mubr.f32.gmra.mrb[0].mxu0 %v108
  %v377 = vpop.f32.mrb[0].mxu0
  %v378 = vadd.f32 0.0, %v377
  %v379 = vpop.f32.mrb[0].mxu0
  %380 = vmatprep.mubr.f32.mxu0 0.0
  %381 = vmatmul.mubr.f32.gmra.mrb[0].mxu0 %v111
  %v382 = vpop.f32.mrb[0].mxu0
  %v383 = vadd.f32 0.0, %v382
  %v384 = vpop.f32.mrb[0].mxu0
  %385 = vmatprep.mubr.f32.mxu0 0.0
  %386 = vmatmul.mubr.f32.gmra.mrb[0].mxu0 %v114
  %v387 = vpop.f32.mrb[0].mxu0
  %v388 = vadd.f32 0.0, %v387
  %v389 = vpop.f32.mrb[0].mxu0
  %390 = vmatprep.mubr.f32.mxu0 0.0
  %391 = vmatmul.mubr.f32.gmra.mrb[0].mxu0 %v117
  %v392 = vpop.f32.mrb[0].mxu0
  %v393 = vadd.f32 0.0, %v392
  %v394 = vpop.f32.mrb[0].mxu0
  %395 = vmatprep.mubr.f32.mxu0 0.0
  %396 = vmatmul.mubr.f32.gmra.mrb[0].mxu0 %v120
  %v397 = vpop.f32.mrb[0].mxu0
  %v398 = vadd.f32 0.0, %v397
  %v399 = vpop.f32.mrb[0].mxu0
  %400 = vmatprep.mubr.f32.mxu0 0.0
  %401 = vmatmul.mubr.f32.gmra.mrb[0].mxu0 %v123
  %v402 = vpop.f32.mrb[0].mxu0
  %v403 = vadd.f32 0.0, %v402
  %v404 = vpop.f32.mrb[0].mxu0
  %405 = vmatprep.mubr.f32.mxu0 0.0
  %406 = vmatmul.mubr.f32.gmra.mrb[0].mxu0 %v126
  %v407 = vpop.f32.mrb[0].mxu0
  %v408 = vadd.f32 0.0, %v407
  %v409 = vpop.f32.mrb[0].mxu0
  %410 = vmatprep.mubr.f32.mxu0 0.0
  %411 = vmatmul.mubr.f32.gmra.mrb[0].mxu0 %v129
  %v412 = vpop.f32.mrb[0].mxu0
  %v413 = vadd.f32 0.0, %v412
  %v414 = vpop.f32.mrb[0].mxu0
  %415 = vmatprep.mubr.f32.mxu0 0.0
  %416 = vmatmul.mubr.f32.gmra.mrb[0].mxu0 %v132
  %v417 = vpop.f32.mrb[0].mxu0
  %v418 = vadd.f32 0.0, %v417
  %v419 = vpop.f32.mrb[0].mxu0
  %420 = vmatprep.mubr.f32.mxu0 0.0
  %421 = vmatmul.mubr.f32.gmra.mrb[0].mxu0 %v135
  %v422 = vpop.f32.mrb[0].mxu0
  %v423 = vadd.f32 0.0, %v422
  %v424 = vpop.f32.mrb[0].mxu0
  %425 = vmatprep.mubr.f32.mxu0 0.0
  %426 = vmatmul.mubr.f32.gmra.mrb[0].mxu0 %v138
  %v427 = vpop.f32.mrb[0].mxu0
  %v428 = vadd.f32 0.0, %v427
  %v429 = vpop.f32.mrb[0].mxu0
  %430 = vmatprep.mubr.f32.mxu0 0.0
  %431 = vmatmul.mubr.f32.gmra.mrb[0].mxu0 %v141
  %v432 = vpop.f32.mrb[0].mxu0
  %v433 = vadd.f32 0.0, %v432
  %v434 = vpop.f32.mrb[0].mxu0
  %435 = vmatprep.mubr.f32.mxu0 0.0
  %436 = vmatmul.mubr.f32.gmra.mrb[0].mxu0 %v144
  %v437 = vpop.f32.mrb[0].mxu0
  %v438 = vadd.f32 0.0, %v437
  %v439 = vpop.f32.mrb[0].mxu0
  %440 = vmatprep.mubr.f32.mxu0 0.0
  %441 = vmatmul.mubr.f32.gmra.mrb[0].mxu0 %v147
  %v442 = vpop.f32.mrb[0].mxu0
  %v443 = vadd.f32 0.0, %v442
  %v444 = vpop.f32.mrb[0].mxu0
  %445 = vmatprep.mubr.f32.mxu0 0.0
  %446 = vmatmul.mubr.f32.gmra.mrb[0].mxu0 %v150
  %v447 = vpop.f32.mrb[0].mxu0
  %v448 = vadd.f32 0.0, %v447
  %v449 = vpop.f32.mrb[0].mxu0
  %450 = vmatprep.mubr.f32.mxu0 0.0
  %451 = vmatmul.mubr.f32.gmra.mrb[0].mxu0 %v153
  %v452 = vpop.f32.mrb[0].mxu0
  %v453 = vadd.f32 0.0, %v452
  %v454 = vpop.f32.mrb[0].mxu0
  %455 = vmatprep.mubr.f32.mxu0 0.0
  %456 = vmatmul.mubr.f32.gmra.mrb[0].mxu0 %v156
  %v457 = vpop.f32.mrb[0].mxu0
  %v458 = vadd.f32 0.0, %v457
  %v459 = vpop.f32.mrb[0].mxu0
  %460 = vmatprep.mubr.f32.mxu0 0.0
  %461 = vmatmul.mubr.f32.gmra.mrb[0].mxu0 %v159
  %v462 = vpop.f32.mrb[0].mxu0
  %v463 = vadd.f32 0.0, %v462
  %v464 = vpop.f32.mrb[0].mxu0
  %465 = vmatprep.mubr.f32.mxu0 0.0
  %466 = vmatmul.mubr.f32.gmra.mrb[0].mxu0 %v162
  %v467 = vpop.f32.mrb[0].mxu0
  %v468 = vadd.f32 0.0, %v467
  %v469 = vpop.f32.mrb[0].mxu0
  %470 = vmatprep.mubr.f32.mxu0 0.0
  %471 = vmatmul.mubr.f32.gmra.mrb[0].mxu0 %v165
  %v472 = vpop.f32.mrb[0].mxu0
  %v473 = vadd.f32 0.0, %v472
  %v474 = vpop.f32.mrb[0].mxu0
  %475 = vmatprep.mubr.f32.mxu0 0.0
  %476 = vmatmul.mubr.f32.gmra.mrb[0].mxu0 %v168
  %v477 = vpop.f32.mrb[0].mxu0
  %v478 = vadd.f32 0.0, %v477
  %v479 = vpop.f32.mrb[0].mxu0
  %480 = vmatprep.mubr.f32.mxu0 0.0
  %481 = vmatmul.mubr.f32.gmra.mrb[0].mxu0 %v171
  %v482 = vpop.f32.mrb[0].mxu0
  %v483 = vadd.f32 0.0, %v482
  %v484 = vpop.f32.mrb[0].mxu0
  %485 = vmatprep.mubr.f32.mxu0 0.0
  %486 = vmatmul.mubr.f32.gmra.mrb[0].mxu0 %v174
  %v487 = vpop.f32.mrb[0].mxu0
  %v488 = vadd.f32 0.0, %v487
  %v489 = vpop.f32.mrb[0].mxu0
  %490 = vmatprep.mubr.f32.mxu0 0.0
  %491 = vmatmul.mubr.f32.gmra.mrb[0].mxu0 %v177
  %v492 = vpop.f32.mrb[0].mxu0
  %v493 = vadd.f32 0.0, %v492
  %v494 = vpop.f32.mrb[0].mxu0
  %495 = vmatprep.mubr.f32.mxu0 0.0
  %496 = vmatmul.mubr.f32.gmra.mrb[0].mxu0 %v180
  %v497 = vpop.f32.mrb[0].mxu0
  %v498 = vadd.f32 0.0, %v497
  %v499 = vpop.f32.mrb[0].mxu0
  %500 = vmatprep.mubr.f32.mxu0 0.0
  %501 = vmatmul.mubr.f32.gmra.mrb[0].mxu0 %v183
  %v502 = vpop.f32.mrb[0].mxu0
  %v503 = vadd.f32 0.0, %v502
  %v504 = vpop.f32.mrb[0].mxu0
  %505 = vmatprep.mubr.f32.mxu0 0.0
  %506 = vmatmul.mubr.f32.gmra.mrb[0].mxu0 %v186
  %v507 = vpop.f32.mrb[0].mxu0
  %v508 = vadd.f32 0.0, %v507
  %v509 = vpop.f32.mrb[0].mxu0
  %510 = vmatprep.mubr.f32.mxu0 0.0
  %511 = vmatmul.mubr.f32.gmra.mrb[0].mxu0 %v189
  %v512 = vpop.f32.mrb[0].mxu0
  %v513 = vadd.f32 0.0, %v512
  %v514 = vpop.f32.mrb[0].mxu0
  %515 = vmatprep.mubr.f32.mxu0 0.0
  %516 = vmatmul.mubr.f32.gmra.mrb[0].mxu0 %v192
  %v517 = vpop.f32.mrb[0].mxu0
  %v518 = vadd.f32 0.0, %v517
  %v519 = vpop.f32.mrb[0].mxu0
  %520 = vmatprep.mubr.f32.mxu0 0.0
  %521 = vmatmul.mubr.f32.gmra.mrb[0].mxu0 %v195
  %v522 = vpop.f32.mrb[0].mxu0
  %v523 = vadd.f32 0.0, %v522
  %v524 = vpop.f32.mrb[0].mxu0
  %525 = vmatprep.mubr.f32.mxu0 0.0
  %526 = vmatmul.mubr.f32.gmra.mrb[0].mxu0 %v198
  %v527 = vpop.f32.mrb[0].mxu0
  %v528 = vadd.f32 0.0, %v527
  %v529 = vpop.f32.mrb[0].mxu0
  %530 = vmatprep.mubr.f32.mxu0 0.0
  %531 = vmatmul.mubr.f32.gmra.mrb[0].mxu0 %v201
  %v532 = vpop.f32.mrb[0].mxu0
  %v533 = vadd.f32 0.0, %v532
  %v534 = vpop.f32.mrb[0].mxu0
  %535 = vmatprep.mubr.f32.mxu0 0.0
  %536 = vmatmul.mubr.f32.gmra.mrb[0].mxu0 %v204
  %v537 = vpop.f32.mrb[0].mxu0
  %v538 = vadd.f32 0.0, %v537
  %v539 = vpop.f32.mrb[0].mxu0
  %540 = vmatprep.mubr.f32.mxu0 0.0
  %541 = vmatmul.mubr.f32.gmra.mrb[0].mxu0 %v207
  %v542 = vpop.f32.mrb[0].mxu0
  %v543 = vadd.f32 0.0, %v542
  %v544 = vpop.f32.mrb[0].mxu0
  %545 = vmatprep.mubr.f32.mxu0 0.0
  %546 = vmatmul.mubr.f32.gmra.mrb[0].mxu0 %v210
  %v547 = vpop.f32.mrb[0].mxu0
  %v548 = vadd.f32 0.0, %v547
  %v549 = vpop.f32.mrb[0].mxu0
  %550 = vmatprep.mubr.f32.mxu0 0.0
  %551 = vmatmul.mubr.f32.gmra.mrb[0].mxu0 %v213
  %v552 = vpop.f32.mrb[0].mxu0
  %v553 = vadd.f32 0.0, %v552
  %v554 = vpop.f32.mrb[0].mxu0
  %555 = vmatprep.mubr.f32.mxu0 0.0
  %556 = vmatmul.mubr.f32.gmra.mrb[0].mxu0 %v216
  %v557 = vpop.f32.mrb[0].mxu0
  %v558 = vadd.f32 0.0, %v557
  %v559 = vpop.f32.mrb[0].mxu0
  %560 = vmatprep.mubr.f32.mxu0 0.0
  %561 = vmatmul.mubr.f32.gmra.mrb[0].mxu0 %v219
  %v562 = vpop.f32.mrb[0].mxu0
  %v563 = vadd.f32 0.0, %v562
  %v564 = vpop.f32.mrb[0].mxu0
  %565 = vmatprep.mubr.f32.mxu0 0.0
  %566 = vmatmul.mubr.f32.gmra.mrb[0].mxu0 %v222
  %v567 = vpop.f32.mrb[0].mxu0
  %v568 = vadd.f32 0.0, %v567
  %v569 = vpop.f32.mrb[0].mxu0
  %570 = vmatprep.mubr.f32.mxu0 0.0
  %571 = vmatmul.mubr.f32.gmra.mrb[0].mxu0 %v225
  %v572 = vpop.f32.mrb[0].mxu0
  %v573 = vadd.f32 0.0, %v572
  %v574 = vpop.f32.mrb[0].mxu0
  %575 = vmatprep.mubr.f32.mxu0 0.0
  %576 = vmatmul.mubr.f32.gmra.mrb[0].mxu0 %v228
  %v577 = vpop.f32.mrb[0].mxu0
  %v578 = vadd.f32 0.0, %v577
  %v579 = vpop.f32.mrb[0].mxu0
  %580 = vmatprep.mubr.f32.mxu0 0.0
  %581 = vmatmul.mubr.f32.gmra.mrb[0].mxu0 %v231
  %v582 = vpop.f32.mrb[0].mxu0
  %v583 = vadd.f32 0.0, %v582
  %v584 = vpop.f32.mrb[0].mxu0
  %585 = vmatprep.mubr.f32.mxu0 0.0
  %586 = vmatmul.mubr.f32.gmra.mrb[0].mxu0 %v234
  %v587 = vpop.f32.mrb[0].mxu0
  %v588 = vadd.f32 0.0, %v587
  %v589 = vpop.f32.mrb[0].mxu0
  %590 = vmatprep.mubr.f32.mxu0 0.0
  %591 = vmatmul.mubr.f32.gmra.mrb[0].mxu0 %v237
  %v592 = vpop.f32.mrb[0].mxu0
  %v593 = vadd.f32 0.0, %v592
  %v594 = vpop.f32.mrb[0].mxu0
  %595 = vmatprep.mubr.f32.mxu0 0.0
  %596 = vmatmul.mubr.f32.gmra.mrb[0].mxu0 %v240
  %v597 = vpop.f32.mrb[0].mxu0
  %v598 = vadd.f32 0.0, %v597
  %v599 = vpop.f32.mrb[0].mxu0
  %600 = vmatprep.mubr.f32.mxu0 0.0
  %601 = vmatmul.mubr.f32.gmra.mrb[0].mxu0 %v243
  %v602 = vpop.f32.mrb[0].mxu0
  %v603 = vadd.f32 0.0, %v602
  %v604 = vpop.f32.mrb[0].mxu0
  %605 = vmatprep.mubr.f32.mxu0 0.0
  %606 = vmatmul.mubr.f32.gmra.mrb[0].mxu0 %v246
  %v607 = vpop.f32.mrb[0].mxu0
  %v608 = vadd.f32 0.0, %v607
  %v609 = vpop.f32.mrb[0].mxu0
  %610 = vmatprep.mubr.f32.mxu0 0.0
  %611 = vmatmul.mubr.f32.gmra.mrb[0].mxu0 %v249
  %v612 = vpop.f32.mrb[0].mxu0
  %v613 = vadd.f32 0.0, %v612
  %v614 = vpop.f32.mrb[0].mxu0
  %615 = vmatprep.mubr.f32.mxu0 0.0
  %616 = vmatmul.mubr.f32.gmra.mrb[0].mxu0 %v252
  %v617 = vpop.f32.mrb[0].mxu0
  %v618 = vadd.f32 0.0, %v617
  %v619 = vpop.f32.mrb[0].mxu0
  %620 = vmatprep.mubr.f32.mxu0 0.0
  %621 = vmatmul.mubr.f32.gmra.mrb[0].mxu0 %v255
  %v622 = vpop.f32.mrb[0].mxu0
  %v623 = vadd.f32 0.0, %v622
  %v624 = vpop.f32.mrb[0].mxu0
  %625 = vmatprep.mubr.f32.mxu0 0.0
  %626 = vmatmul.mubr.f32.gmra.mrb[0].mxu0 %v258
  %v627 = vpop.f32.mrb[0].mxu0
  %v628 = vadd.f32 0.0, %v627
  %v629 = vpop.f32.mrb[0].mxu0
  %630 = vmatprep.mubr.f32.mxu0 0.0
  %631 = vmatmul.mubr.f32.gmra.mrb[0].mxu0 %v261
  %v632 = vpop.f32.mrb[0].mxu0
  %v633 = vadd.f32 0.0, %v632
  %v634 = vpop.f32.mrb[0].mxu0
  %635 = vmatprep.mubr.f32.mxu0 0.0
  %636 = vmatmul.mubr.f32.gmra.mrb[0].mxu0 %v264
  %v637 = vpop.f32.mrb[0].mxu0
  %v638 = vadd.f32 0.0, %v637
  %v639 = vpop.f32.mrb[0].mxu0
  %640 = vmatprep.mubr.f32.mxu0 0.0
  %641 = vmatmul.mubr.f32.gmra.mrb[0].mxu0 %v267
  %v642 = vpop.f32.mrb[0].mxu0
  %v643 = vadd.f32 0.0, %v642
  %v644 = vpop.f32.mrb[0].mxu0
  %645 = vmatprep.mubr.f32.mxu0 0.0
  %646 = vmatmul.mubr.f32.gmra.mrb[0].mxu0 %v270
  %v647 = vpop.f32.mrb[0].mxu0
  %v648 = vadd.f32 0.0, %v647
  %v649 = vpop.f32.mrb[0].mxu0
  %650 = vmatprep.mubr.f32.mxu0 0.0
  %651 = vmatmul.mubr.f32.gmra.mrb[0].mxu0 %v273
  %v652 = vpop.f32.mrb[0].mxu0
  %v653 = vadd.f32 0.0, %v652
  %v654 = vpop.f32.mrb[0].mxu0
  %655 = vmatprep.mubr.f32.mxu0 0.0
  %656 = vmatmul.mubr.f32.gmra.mrb[0].mxu0 %v276
  %v657 = vpop.f32.mrb[0].mxu0
  %v658 = vadd.f32 0.0, %v657
  %v659 = vpop.f32.mrb[0].mxu0
  %660 = vmatprep.mubr.f32.mxu0 0.0
  %661 = vmatmul.mubr.f32.gmra.mrb[0].mxu0 %v279
  %v662 = vpop.f32.mrb[0].mxu0
  %v663 = vadd.f32 0.0, %v662
  %v664 = vpop.f32.mrb[0].mxu0
  %665 = vmatprep.mubr.f32.mxu0 0.0
  %666 = vmatmul.mubr.f32.gmra.mrb[0].mxu0 %v282
  %v667 = vpop.f32.mrb[0].mxu0
  %v668 = vadd.f32 0.0, %v667
  %v669 = vpop.f32.mrb[0].mxu0
  %670 = vmatprep.mubr.f32.mxu0 0.0
  %671 = vmatmul.mubr.f32.gmra.mrb[0].mxu0 %v285
  %v672 = vpop.f32.mrb[0].mxu0
  %v673 = vadd.f32 0.0, %v672
  %v674 = vpop.f32.mrb[0].mxu0
  %675 = vdwg.mxu0
  %v676 = vld [vmem:[%s2] sm:$0x1]
  %v678 = vlaneseq
  %v679 = vshrl.u32 %v678, 7
  %v680 = vsub.s32 0, %v679
  %v681 = vrot.slane %v676, %v680
  %v683 = vmul.f32 %v358, %v681
  %v684 = vmul.f32 %v363, %v681
  %v685 = vmul.f32 %v368, %v681
  %v686 = vmul.f32 %v373, %v681
  %v687 = vmul.f32 %v378, %v681
  %v688 = vmul.f32 %v383, %v681
  %v689 = vmul.f32 %v388, %v681
  %v690 = vmul.f32 %v393, %v681
  %v691 = vmul.f32 %v398, %v681
  %v692 = vmul.f32 %v403, %v681
  %v693 = vmul.f32 %v408, %v681
  %v694 = vmul.f32 %v413, %v681
  %v695 = vmul.f32 %v418, %v681
  %v696 = vmul.f32 %v423, %v681
  %v697 = vmul.f32 %v428, %v681
  %v698 = vmul.f32 %v433, %v681
  %v699 = vmul.f32 %v438, %v681
  %v700 = vmul.f32 %v443, %v681
  %v701 = vmul.f32 %v448, %v681
  %v702 = vmul.f32 %v453, %v681
  %v703 = vmul.f32 %v458, %v681
  %v704 = vmul.f32 %v463, %v681
  %v705 = vmul.f32 %v468, %v681
  %v706 = vmul.f32 %v473, %v681
  %v707 = vmul.f32 %v478, %v681
  %v708 = vmul.f32 %v483, %v681
  %v709 = vmul.f32 %v488, %v681
  %v710 = vmul.f32 %v493, %v681
  %v711 = vmul.f32 %v498, %v681
  %v712 = vmul.f32 %v503, %v681
  %v713 = vmul.f32 %v508, %v681
  %v714 = vmul.f32 %v513, %v681
  %v715 = vmul.f32 %v518, %v681
  %v716 = vmul.f32 %v523, %v681
  %v717 = vmul.f32 %v528, %v681
  %v718 = vmul.f32 %v533, %v681
  %v719 = vmul.f32 %v538, %v681
  %v720 = vmul.f32 %v543, %v681
  %v721 = vmul.f32 %v548, %v681
  %v722 = vmul.f32 %v553, %v681
  %v723 = vmul.f32 %v558, %v681
  %v724 = vmul.f32 %v563, %v681
  %v725 = vmul.f32 %v568, %v681
  %v726 = vmul.f32 %v573, %v681
  %v727 = vmul.f32 %v578, %v681
  %v728 = vmul.f32 %v583, %v681
  %v729 = vmul.f32 %v588, %v681
  %v730 = vmul.f32 %v593, %v681
  %v731 = vmul.f32 %v598, %v681
  %v732 = vmul.f32 %v603, %v681
  %v733 = vmul.f32 %v608, %v681
  %v734 = vmul.f32 %v613, %v681
  %v735 = vmul.f32 %v618, %v681
  %v736 = vmul.f32 %v623, %v681
  %v737 = vmul.f32 %v628, %v681
  %v738 = vmul.f32 %v633, %v681
  %v739 = vmul.f32 %v638, %v681
  %v740 = vmul.f32 %v643, %v681
  %v741 = vmul.f32 %v648, %v681
  %v742 = vmul.f32 %v653, %v681
  %v743 = vmul.f32 %v658, %v681
  %v744 = vmul.f32 %v663, %v681
  %v745 = vmul.f32 %v668, %v681
  %v746 = vmul.f32 %v673, %v681
  %v747 = vld [vmem:[%s3] sm:$0x1]
  %v749 = vlaneseq
  %v750 = vshrl.u32 %v749, 7
  %v751 = vsub.s32 0, %v750
  %v752 = vrot.slane %v747, %v751
  %v754 = vadd.f32 %v683, %v752
  %v755 = vadd.f32 %v684, %v752
  %v756 = vadd.f32 %v685, %v752
  %v757 = vadd.f32 %v686, %v752
  %v758 = vadd.f32 %v687, %v752
  %v759 = vadd.f32 %v688, %v752
  %v760 = vadd.f32 %v689, %v752
  %v761 = vadd.f32 %v690, %v752
  %v762 = vadd.f32 %v691, %v752
  %v763 = vadd.f32 %v692, %v752
  %v764 = vadd.f32 %v693, %v752
  %v765 = vadd.f32 %v694, %v752
  %v766 = vadd.f32 %v695, %v752
  %v767 = vadd.f32 %v696, %v752
  %v768 = vadd.f32 %v697, %v752
  %v769 = vadd.f32 %v698, %v752
  %v770 = vadd.f32 %v699, %v752
  %v771 = vadd.f32 %v700, %v752
  %v772 = vadd.f32 %v701, %v752
  %v773 = vadd.f32 %v702, %v752
  %v774 = vadd.f32 %v703, %v752
  %v775 = vadd.f32 %v704, %v752
  %v776 = vadd.f32 %v705, %v752
  %v777 = vadd.f32 %v706, %v752
  %v778 = vadd.f32 %v707, %v752
  %v779 = vadd.f32 %v708, %v752
  %v780 = vadd.f32 %v709, %v752
  %v781 = vadd.f32 %v710, %v752
  %v782 = vadd.f32 %v711, %v752
  %v783 = vadd.f32 %v712, %v752
  %v784 = vadd.f32 %v713, %v752
  %v785 = vadd.f32 %v714, %v752
  %v786 = vadd.f32 %v715, %v752
  %v787 = vadd.f32 %v716, %v752
  %v788 = vadd.f32 %v717, %v752
  %v789 = vadd.f32 %v718, %v752
  %v790 = vadd.f32 %v719, %v752
  %v791 = vadd.f32 %v720, %v752
  %v792 = vadd.f32 %v721, %v752
  %v793 = vadd.f32 %v722, %v752
  %v794 = vadd.f32 %v723, %v752
  %v795 = vadd.f32 %v724, %v752
  %v796 = vadd.f32 %v725, %v752
  %v797 = vadd.f32 %v726, %v752
  %v798 = vadd.f32 %v727, %v752
  %v799 = vadd.f32 %v728, %v752
  %v800 = vadd.f32 %v729, %v752
  %v801 = vadd.f32 %v730, %v752
  %v802 = vadd.f32 %v731, %v752
  %v803 = vadd.f32 %v732, %v752
  %v804 = vadd.f32 %v733, %v752
  %v805 = vadd.f32 %v734, %v752
  %v806 = vadd.f32 %v735, %v752
  %v807 = vadd.f32 %v736, %v752
  %v808 = vadd.f32 %v737, %v752
  %v809 = vadd.f32 %v738, %v752
  %v810 = vadd.f32 %v739, %v752
  %v811 = vadd.f32 %v740, %v752
  %v812 = vadd.f32 %v741, %v752
  %v813 = vadd.f32 %v742, %v752
  %v814 = vadd.f32 %v743, %v752
  %v815 = vadd.f32 %v744, %v752
  %v816 = vadd.f32 %v745, %v752
  %v817 = vadd.f32 %v746, %v752
  %v818 = vmax.f32 %v754, 0.0
  %v819 = vmax.f32 %v755, 0.0
  %v820 = vmax.f32 %v756, 0.0
  %v821 = vmax.f32 %v757, 0.0
  %v822 = vmax.f32 %v758, 0.0
  %v823 = vmax.f32 %v759, 0.0
  %v824 = vmax.f32 %v760, 0.0
  %v825 = vmax.f32 %v761, 0.0
  %v826 = vmax.f32 %v762, 0.0
  %v827 = vmax.f32 %v763, 0.0
  %v828 = vmax.f32 %v764, 0.0
  %v829 = vmax.f32 %v765, 0.0
  %v830 = vmax.f32 %v766, 0.0
  %v831 = vmax.f32 %v767, 0.0
  %v832 = vmax.f32 %v768, 0.0
  %v833 = vmax.f32 %v769, 0.0
  %v834 = vmax.f32 %v770, 0.0
  %v835 = vmax.f32 %v771, 0.0
  %v836 = vmax.f32 %v772, 0.0
  %v837 = vmax.f32 %v773, 0.0
  %v838 = vmax.f32 %v774, 0.0
  %v839 = vmax.f32 %v775, 0.0
  %v840 = vmax.f32 %v776, 0.0
  %v841 = vmax.f32 %v777, 0.0
  %v842 = vmax.f32 %v778, 0.0
  %v843 = vmax.f32 %v779, 0.0
  %v844 = vmax.f32 %v780, 0.0
  %v845 = vmax.f32 %v781, 0.0
  %v846 = vmax.f32 %v782, 0.0
  %v847 = vmax.f32 %v783, 0.0
  %v848 = vmax.f32 %v784, 0.0
  %v849 = vmax.f32 %v785, 0.0
  %v850 = vmax.f32 %v786, 0.0
  %v851 = vmax.f32 %v787, 0.0
  %v852 = vmax.f32 %v788, 0.0
  %v853 = vmax.f32 %v789, 0.0
  %v854 = vmax.f32 %v790, 0.0
  %v855 = vmax.f32 %v791, 0.0
  %v856 = vmax.f32 %v792, 0.0
  %v857 = vmax.f32 %v793, 0.0
  %v858 = vmax.f32 %v794, 0.0
  %v859 = vmax.f32 %v795, 0.0
  %v860 = vmax.f32 %v796, 0.0
  %v861 = vmax.f32 %v797, 0.0
  %v862 = vmax.f32 %v798, 0.0
  %v863 = vmax.f32 %v799, 0.0
  %v864 = vmax.f32 %v800, 0.0
  %v865 = vmax.f32 %v801, 0.0
  %v866 = vmax.f32 %v802, 0.0
  %v867 = vmax.f32 %v803, 0.0
  %v868 = vmax.f32 %v804, 0.0
  %v869 = vmax.f32 %v805, 0.0
  %v870 = vmax.f32 %v806, 0.0
  %v871 = vmax.f32 %v807, 0.0
  %v872 = vmax.f32 %v808, 0.0
  %v873 = vmax.f32 %v809, 0.0
  %v874 = vmax.f32 %v810, 0.0
  %v875 = vmax.f32 %v811, 0.0
  %v876 = vmax.f32 %v812, 0.0
  %v877 = vmax.f32 %v813, 0.0
  %v878 = vmax.f32 %v814, 0.0
  %v879 = vmax.f32 %v815, 0.0
  %v880 = vmax.f32 %v816, 0.0
  %v881 = vmax.f32 %v817, 0.0
  %vm882 = vcmask 130048
  %883 = vst.msk [vmem:[#allocation2] sm:$0xff] %vm882, %v818
  %884 = vst.msk [vmem:[#allocation2 + $0x8] sm:$0xff] %vm882, %v819
  %885 = vst.msk [vmem:[#allocation2 + $0x10] sm:$0xff] %vm882, %v820
  %886 = vst.msk [vmem:[#allocation2 + $0x18] sm:$0xff] %vm882, %v821
  %887 = vst.msk [vmem:[#allocation2 + $0x20] sm:$0xff] %vm882, %v822
  %888 = vst.msk [vmem:[#allocation2 + $0x28] sm:$0xff] %vm882, %v823
  %889 = vst.msk [vmem:[#allocation2 + $0x30] sm:$0xff] %vm882, %v824
  %890 = vst.msk [vmem:[#allocation2 + $0x38] sm:$0xff] %vm882, %v825
  %891 = vst.msk [vmem:[#allocation2 + $0x40] sm:$0xff] %vm882, %v826
  %892 = vst.msk [vmem:[#allocation2 + $0x48] sm:$0xff] %vm882, %v827
  %893 = vst.msk [vmem:[#allocation2 + $0x50] sm:$0xff] %vm882, %v828
  %894 = vst.msk [vmem:[#allocation2 + $0x58] sm:$0xff] %vm882, %v829
  %895 = vst.msk [vmem:[#allocation2 + $0x60] sm:$0xff] %vm882, %v830
  %896 = vst.msk [vmem:[#allocation2 + $0x68] sm:$0xff] %vm882, %v831
  %897 = vst.msk [vmem:[#allocation2 + $0x70] sm:$0xff] %vm882, %v832
  %898 = vst.msk [vmem:[#allocation2 + $0x78] sm:$0xff] %vm882, %v833
  %899 = vst.msk [vmem:[#allocation2 + $0x80] sm:$0xff] %vm882, %v834
  %900 = vst.msk [vmem:[#allocation2 + $0x88] sm:$0xff] %vm882, %v835
  %901 = vst.msk [vmem:[#allocation2 + $0x90] sm:$0xff] %vm882, %v836
  %902 = vst.msk [vmem:[#allocation2 + $0x98] sm:$0xff] %vm882, %v837
  %903 = vst.msk [vmem:[#allocation2 + $0xa0] sm:$0xff] %vm882, %v838
  %904 = vst.msk [vmem:[#allocation2 + $0xa8] sm:$0xff] %vm882, %v839
  %905 = vst.msk [vmem:[#allocation2 + $0xb0] sm:$0xff] %vm882, %v840
  %906 = vst.msk [vmem:[#allocation2 + $0xb8] sm:$0xff] %vm882, %v841
  %907 = vst.msk [vmem:[#allocation2 + $0xc0] sm:$0xff] %vm882, %v842
  %908 = vst.msk [vmem:[#allocation2 + $0xc8] sm:$0xff] %vm882, %v843
  %909 = vst.msk [vmem:[#allocation2 + $0xd0] sm:$0xff] %vm882, %v844
  %910 = vst.msk [vmem:[#allocation2 + $0xd8] sm:$0xff] %vm882, %v845
  %911 = vst.msk [vmem:[#allocation2 + $0xe0] sm:$0xff] %vm882, %v846
  %912 = vst.msk [vmem:[#allocation2 + $0xe8] sm:$0xff] %vm882, %v847
  %913 = vst.msk [vmem:[#allocation2 + $0xf0] sm:$0xff] %vm882, %v848
  %914 = vst.msk [vmem:[#allocation2 + $0xf8] sm:$0xff] %vm882, %v849
  %915 = vst.msk [vmem:[#allocation2 + $0x100] sm:$0xff] %vm882, %v850
  %916 = vst.msk [vmem:[#allocation2 + $0x108] sm:$0xff] %vm882, %v851
  %917 = vst.msk [vmem:[#allocation2 + $0x110] sm:$0xff] %vm882, %v852
  %918 = vst.msk [vmem:[#allocation2 + $0x118] sm:$0xff] %vm882, %v853
  %919 = vst.msk [vmem:[#allocation2 + $0x120] sm:$0xff] %vm882, %v854
  %920 = vst.msk [vmem:[#allocation2 + $0x128] sm:$0xff] %vm882, %v855
  %921 = vst.msk [vmem:[#allocation2 + $0x130] sm:$0xff] %vm882, %v856
  %922 = vst.msk [vmem:[#allocation2 + $0x138] sm:$0xff] %vm882, %v857
  %923 = vst.msk [vmem:[#allocation2 + $0x140] sm:$0xff] %vm882, %v858
  %924 = vst.msk [vmem:[#allocation2 + $0x148] sm:$0xff] %vm882, %v859
  %925 = vst.msk [vmem:[#allocation2 + $0x150] sm:$0xff] %vm882, %v860
  %926 = vst.msk [vmem:[#allocation2 + $0x158] sm:$0xff] %vm882, %v861
  %927 = vst.msk [vmem:[#allocation2 + $0x160] sm:$0xff] %vm882, %v862
  %928 = vst.msk [vmem:[#allocation2 + $0x168] sm:$0xff] %vm882, %v863
  %929 = vst.msk [vmem:[#allocation2 + $0x170] sm:$0xff] %vm882, %v864
  %930 = vst.msk [vmem:[#allocation2 + $0x178] sm:$0xff] %vm882, %v865
  %931 = vst.msk [vmem:[#allocation2 + $0x180] sm:$0xff] %vm882, %v866
  %932 = vst.msk [vmem:[#allocation2 + $0x188] sm:$0xff] %vm882, %v867
  %933 = vst.msk [vmem:[#allocation2 + $0x190] sm:$0xff] %vm882, %v868
  %934 = vst.msk [vmem:[#allocation2 + $0x198] sm:$0xff] %vm882, %v869
  %935 = vst.msk [vmem:[#allocation2 + $0x1a0] sm:$0xff] %vm882, %v870
  %936 = vst.msk [vmem:[#allocation2 + $0x1a8] sm:$0xff] %vm882, %v871
  %937 = vst.msk [vmem:[#allocation2 + $0x1b0] sm:$0xff] %vm882, %v872
  %938 = vst.msk [vmem:[#allocation2 + $0x1b8] sm:$0xff] %vm882, %v873
  %939 = vst.msk [vmem:[#allocation2 + $0x1c0] sm:$0xff] %vm882, %v874
  %940 = vst.msk [vmem:[#allocation2 + $0x1c8] sm:$0xff] %vm882, %v875
  %941 = vst.msk [vmem:[#allocation2 + $0x1d0] sm:$0xff] %vm882, %v876
  %942 = vst.msk [vmem:[#allocation2 + $0x1d8] sm:$0xff] %vm882, %v877
  %943 = vst.msk [vmem:[#allocation2 + $0x1e0] sm:$0xff] %vm882, %v878
  %944 = vst.msk [vmem:[#allocation2 + $0x1e8] sm:$0xff] %vm882, %v879
  %945 = vst.msk [vmem:[#allocation2 + $0x1f0] sm:$0xff] %vm882, %v880
  %946 = vst.msk [vmem:[#allocation2 + $0x1f8] sm:$0xff] %vm882, %v881
  %v947 = vld [vmem:[#allocation2] ss:$2 sm:$0xff]
  %s948 = scalar_lea.vmem [#allocation2], 16
  %v949 = vld [vmem:[%s948] ss:$2 sm:$0xff]
  %s950 = scalar_lea.vmem [#allocation2], 32
  %v951 = vld [vmem:[%s950] ss:$2 sm:$0xff]
  %s952 = scalar_lea.vmem [#allocation2], 48
  %v953 = vld [vmem:[%s952] ss:$2 sm:$0xff]
  %s954 = scalar_lea.vmem [#allocation2], 64
  %v955 = vld [vmem:[%s954] ss:$2 sm:$0xff]
  %s956 = scalar_lea.vmem [#allocation2], 80
  %v957 = vld [vmem:[%s956] ss:$2 sm:$0xff]
  %s958 = scalar_lea.vmem [#allocation2], 96
  %v959 = vld [vmem:[%s958] ss:$2 sm:$0xff]
  %s960 = scalar_lea.vmem [#allocation2], 112
  %v961 = vld [vmem:[%s960] ss:$2 sm:$0xff]
  %s962 = scalar_lea.vmem [#allocation2], 128
  %v963 = vld [vmem:[%s962] ss:$2 sm:$0xff]
  %s964 = scalar_lea.vmem [#allocation2], 144
  %v965 = vld [vmem:[%s964] ss:$2 sm:$0xff]
  %s966 = scalar_lea.vmem [#allocation2], 160
  %v967 = vld [vmem:[%s966] ss:$2 sm:$0xff]
  %s968 = scalar_lea.vmem [#allocation2], 176
  %v969 = vld [vmem:[%s968] ss:$2 sm:$0xff]
  %s970 = scalar_lea.vmem [#allocation2], 192
  %v971 = vld [vmem:[%s970] ss:$2 sm:$0xff]
  %s972 = scalar_lea.vmem [#allocation2], 208
  %v973 = vld [vmem:[%s972] ss:$2 sm:$0xff]
  %s974 = scalar_lea.vmem [#allocation2], 224
  %v975 = vld [vmem:[%s974] ss:$2 sm:$0xff]
  %s976 = scalar_lea.vmem [#allocation2], 240
  %v977 = vld [vmem:[%s976] ss:$2 sm:$0xff]
  %s978 = scalar_lea.vmem [#allocation2], 256
  %v979 = vld [vmem:[%s978] ss:$2 sm:$0xff]
  %s980 = scalar_lea.vmem [#allocation2], 272
  %v981 = vld [vmem:[%s980] ss:$2 sm:$0xff]
  %s982 = scalar_lea.vmem [#allocation2], 288
  %v983 = vld [vmem:[%s982] ss:$2 sm:$0xff]
  %s984 = scalar_lea.vmem [#allocation2], 304
  %v985 = vld [vmem:[%s984] ss:$2 sm:$0xff]
  %s986 = scalar_lea.vmem [#allocation2], 320
  %v987 = vld [vmem:[%s986] ss:$2 sm:$0xff]
  %s988 = scalar_lea.vmem [#allocation2], 336
  %v989 = vld [vmem:[%s988] ss:$2 sm:$0xff]
  %s990 = scalar_lea.vmem [#allocation2], 352
  %v991 = vld [vmem:[%s990] ss:$2 sm:$0xff]
  %s992 = scalar_lea.vmem [#allocation2], 368
  %v993 = vld [vmem:[%s992] ss:$2 sm:$0xff]
  %s994 = scalar_lea.vmem [#allocation2], 384
  %v995 = vld [vmem:[%s994] ss:$2 sm:$0xff]
  %s996 = scalar_lea.vmem [#allocation2], 400
  %v997 = vld [vmem:[%s996] ss:$2 sm:$0xff]
  %s998 = scalar_lea.vmem [#allocation2], 416
  %v999 = vld [vmem:[%s998] ss:$2 sm:$0xff]
  %s1000 = scalar_lea.vmem [#allocation2], 432
  %v1001 = vld [vmem:[%s1000] ss:$2 sm:$0xff]
  %s1002 = scalar_lea.vmem [#allocation2], 448
  %v1003 = vld [vmem:[%s1002] ss:$2 sm:$0xff]
  %s1004 = scalar_lea.vmem [#allocation2], 464
  %v1005 = vld [vmem:[%s1004] ss:$2 sm:$0xff]
  %s1006 = scalar_lea.vmem [#allocation2], 480
  %v1007 = vld [vmem:[%s1006] ss:$2 sm:$0xff]
  %s1008 = scalar_lea.vmem [#allocation2], 496
  %v1009 = vld [vmem:[%s1008] ss:$2 sm:$0xff]
  %s1010 = scalar_lea.vmem [#allocation2], 1
  %v1011 = vld [vmem:[%s1010] ss:$2 sm:$0xff]
  %s1012 = scalar_lea.vmem [#allocation2], 17
  %v1013 = vld [vmem:[%s1012] ss:$2 sm:$0xff]
  %s1014 = scalar_lea.vmem [#allocation2], 33
  %v1015 = vld [vmem:[%s1014] ss:$2 sm:$0xff]
  %s1016 = scalar_lea.vmem [#allocation2], 49
  %v1017 = vld [vmem:[%s1016] ss:$2 sm:$0xff]
  %s1018 = scalar_lea.vmem [#allocation2], 65
  %v1019 = vld [vmem:[%s1018] ss:$2 sm:$0xff]
  %s1020 = scalar_lea.vmem [#allocation2], 81
  %v1021 = vld [vmem:[%s1020] ss:$2 sm:$0xff]
  %s1022 = scalar_lea.vmem [#allocation2], 97
  %v1023 = vld [vmem:[%s1022] ss:$2 sm:$0xff]
  %s1024 = scalar_lea.vmem [#allocation2], 113
  %v1025 = vld [vmem:[%s1024] ss:$2 sm:$0xff]
  %s1026 = scalar_lea.vmem [#allocation2], 129
  %v1027 = vld [vmem:[%s1026] ss:$2 sm:$0xff]
  %s1028 = scalar_lea.vmem [#allocation2], 145
  %v1029 = vld [vmem:[%s1028] ss:$2 sm:$0xff]
  %s1030 = scalar_lea.vmem [#allocation2], 161
  %v1031 = vld [vmem:[%s1030] ss:$2 sm:$0xff]
  %s1032 = scalar_lea.vmem [#allocation2], 177
  %v1033 = vld [vmem:[%s1032] ss:$2 sm:$0xff]
  %s1034 = scalar_lea.vmem [#allocation2], 193
  %v1035 = vld [vmem:[%s1034] ss:$2 sm:$0xff]
  %s1036 = scalar_lea.vmem [#allocation2], 209
  %v1037 = vld [vmem:[%s1036] ss:$2 sm:$0xff]
  %s1038 = scalar_lea.vmem [#allocation2], 225
  %v1039 = vld [vmem:[%s1038] ss:$2 sm:$0xff]
  %s1040 = scalar_lea.vmem [#allocation2], 241
  %v1041 = vld [vmem:[%s1040] ss:$2 sm:$0xff]
  %s1042 = scalar_lea.vmem [#allocation2], 257
  %v1043 = vld [vmem:[%s1042] ss:$2 sm:$0xff]
  %s1044 = scalar_lea.vmem [#allocation2], 273
  %v1045 = vld [vmem:[%s1044] ss:$2 sm:$0xff]
  %s1046 = scalar_lea.vmem [#allocation2], 289
  %v1047 = vld [vmem:[%s1046] ss:$2 sm:$0xff]
  %s1048 = scalar_lea.vmem [#allocation2], 305
  %v1049 = vld [vmem:[%s1048] ss:$2 sm:$0xff]
  %s1050 = scalar_lea.vmem [#allocation2], 321
  %v1051 = vld [vmem:[%s1050] ss:$2 sm:$0xff]
  %s1052 = scalar_lea.vmem [#allocation2], 337
  %v1053 = vld [vmem:[%s1052] ss:$2 sm:$0xff]
  %s1054 = scalar_lea.vmem [#allocation2], 353
  %v1055 = vld [vmem:[%s1054] ss:$2 sm:$0xff]
  %s1056 = scalar_lea.vmem [#allocation2], 369
  %v1057 = vld [vmem:[%s1056] ss:$2 sm:$0xff]
  %s1058 = scalar_lea.vmem [#allocation2], 385
  %v1059 = vld [vmem:[%s1058] ss:$2 sm:$0xff]
  %s1060 = scalar_lea.vmem [#allocation2], 401
  %v1061 = vld [vmem:[%s1060] ss:$2 sm:$0xff]
  %s1062 = scalar_lea.vmem [#allocation2], 417
  %v1063 = vld [vmem:[%s1062] ss:$2 sm:$0xff]
  %s1064 = scalar_lea.vmem [#allocation2], 433
  %v1065 = vld [vmem:[%s1064] ss:$2 sm:$0xff]
  %s1066 = scalar_lea.vmem [#allocation2], 449
  %v1067 = vld [vmem:[%s1066] ss:$2 sm:$0xff]
  %s1068 = scalar_lea.vmem [#allocation2], 465
  %v1069 = vld [vmem:[%s1068] ss:$2 sm:$0xff]
  %s1070 = scalar_lea.vmem [#allocation2], 481
  %v1071 = vld [vmem:[%s1070] ss:$2 sm:$0xff]
  %s1072 = scalar_lea.vmem [#allocation2], 497
  %v1073 = vld [vmem:[%s1072] ss:$2 sm:$0xff]
  %v1074 = vmax.f32 %v947, %v1011
  %v1075 = vmax.f32 %v949, %v1013
  %v1076 = vmax.f32 %v951, %v1015
  %v1077 = vmax.f32 %v953, %v1017
  %v1078 = vmax.f32 %v955, %v1019
  %v1079 = vmax.f32 %v957, %v1021
  %v1080 = vmax.f32 %v959, %v1023
  %v1081 = vmax.f32 %v961, %v1025
  %v1082 = vmax.f32 %v963, %v1027
  %v1083 = vmax.f32 %v965, %v1029
  %v1084 = vmax.f32 %v967, %v1031
  %v1085 = vmax.f32 %v969, %v1033
  %v1086 = vmax.f32 %v971, %v1035
  %v1087 = vmax.f32 %v973, %v1037
  %v1088 = vmax.f32 %v975, %v1039
  %v1089 = vmax.f32 %v977, %v1041
  %v1090 = vmax.f32 %v979, %v1043
  %v1091 = vmax.f32 %v981, %v1045
  %v1092 = vmax.f32 %v983, %v1047
  %v1093 = vmax.f32 %v985, %v1049
  %v1094 = vmax.f32 %v987, %v1051
  %v1095 = vmax.f32 %v989, %v1053
  %v1096 = vmax.f32 %v991, %v1055
  %v1097 = vmax.f32 %v993, %v1057
  %v1098 = vmax.f32 %v995, %v1059
  %v1099 = vmax.f32 %v997, %v1061
  %v1100 = vmax.f32 %v999, %v1063
  %v1101 = vmax.f32 %v1001, %v1065
  %v1102 = vmax.f32 %v1003, %v1067
  %v1103 = vmax.f32 %v1005, %v1069
  %v1104 = vmax.f32 %v1007, %v1071
  %v1105 = vmax.f32 %v1009, %v1073
  %v1106 = vmax.f32 %v1074, %v1075
  %v1107 = vmax.f32 %v1076, %v1077
  %v1108 = vmax.f32 %v1078, %v1079
  %v1109 = vmax.f32 %v1080, %v1081
  %v1110 = vmax.f32 %v1082, %v1083
  %v1111 = vmax.f32 %v1084, %v1085
  %v1112 = vmax.f32 %v1086, %v1087
  %v1113 = vmax.f32 %v1088, %v1089
  %v1114 = vmax.f32 %v1090, %v1091
  %v1115 = vmax.f32 %v1092, %v1093
  %v1116 = vmax.f32 %v1094, %v1095
  %v1117 = vmax.f32 %v1096, %v1097
  %v1118 = vmax.f32 %v1098, %v1099
  %v1119 = vmax.f32 %v1100, %v1101
  %v1120 = vmax.f32 %v1102, %v1103
  %v1121 = vmax.f32 %v1104, %v1105
  %1122 = vst.msk [vmem:[#allocation3] sm:$0xff] %vm882, 0.0
  %vm1123 = vcmask 123904
  %1124 = vst.msk [vmem:[#allocation3 + $0x8] sm:$0x3] %vm1123, 0.0
  %1125 = vst.msk [vmem:[#allocation3 + $0x10] sm:$0xff] %vm882, 0.0
  %1126 = vst.msk [vmem:[#allocation3 + $0x18] sm:$0x3] %vm1123, 0.0
  %1127 = vst.msk [vmem:[#allocation3 + $0x20] sm:$0xff] %vm882, 0.0
  %1128 = vst.msk [vmem:[#allocation3 + $0x28] sm:$0x3] %vm1123, 0.0
  %1129 = vst.msk [vmem:[#allocation3 + $0x30] sm:$0xff] %vm882, 0.0
  %1130 = vst.msk [vmem:[#allocation3 + $0x38] sm:$0x3] %vm1123, 0.0
  %1131 = vst.msk [vmem:[#allocation3 + $0x40] sm:$0xff] %vm882, 0.0
  %1132 = vst.msk [vmem:[#allocation3 + $0x48] sm:$0x3] %vm1123, 0.0
  %1133 = vst.msk [vmem:[#allocation3 + $0x50] sm:$0xff] %vm882, 0.0
  %1134 = vst.msk [vmem:[#allocation3 + $0x58] sm:$0x3] %vm1123, 0.0
  %1135 = vst.msk [vmem:[#allocation3 + $0x60] sm:$0xff] %vm882, 0.0
  %1136 = vst.msk [vmem:[#allocation3 + $0x68] sm:$0x3] %vm1123, 0.0
  %1137 = vst.msk [vmem:[#allocation3 + $0x70] sm:$0xff] %vm882, 0.0
  %1138 = vst.msk [vmem:[#allocation3 + $0x78] sm:$0x3] %vm1123, 0.0
  %1139 = vst.msk [vmem:[#allocation3 + $0x80] sm:$0xff] %vm882, 0.0
  %1140 = vst.msk [vmem:[#allocation3 + $0x88] sm:$0x3] %vm1123, 0.0
  %1141 = vst.msk [vmem:[#allocation3 + $0x90] sm:$0xff] %vm882, 0.0
  %1142 = vst.msk [vmem:[#allocation3 + $0x98] sm:$0x3] %vm1123, 0.0
  %1143 = vst.msk [vmem:[#allocation3 + $0xa0] sm:$0xff] %vm882, 0.0
  %1144 = vst.msk [vmem:[#allocation3 + $0xa8] sm:$0x3] %vm1123, 0.0
  %1145 = vst.msk [vmem:[#allocation3 + $0xb0] sm:$0xff] %vm882, 0.0
  %1146 = vst.msk [vmem:[#allocation3 + $0xb8] sm:$0x3] %vm1123, 0.0
  %1147 = vst.msk [vmem:[#allocation3 + $0xc0] sm:$0xff] %vm882, 0.0
  %1148 = vst.msk [vmem:[#allocation3 + $0xc8] sm:$0x3] %vm1123, 0.0
  %1149 = vst.msk [vmem:[#allocation3 + $0xd0] sm:$0xff] %vm882, 0.0
  %1150 = vst.msk [vmem:[#allocation3 + $0xd8] sm:$0x3] %vm1123, 0.0
  %1151 = vst.msk [vmem:[#allocation3 + $0xe0] sm:$0xff] %vm882, 0.0
  %1152 = vst.msk [vmem:[#allocation3 + $0xe8] sm:$0x3] %vm1123, 0.0
  %1153 = vst.msk [vmem:[#allocation3 + $0xf0] sm:$0xff] %vm882, 0.0
  %1154 = vst.msk [vmem:[#allocation3 + $0xf8] sm:$0x3] %vm1123, 0.0
  %1155 = vst.msk [vmem:[#allocation3 + $0x100] sm:$0xff] %vm882, 0.0
  %1156 = vst.msk [vmem:[#allocation3 + $0x108] sm:$0x3] %vm1123, 0.0
  %1157 = vst.msk [vmem:[#allocation3 + $0x110] sm:$0xff] %vm882, 0.0
  %1158 = vst.msk [vmem:[#allocation3 + $0x118] sm:$0x3] %vm1123, 0.0
  %1159 = vst.msk [vmem:[#allocation3 + $0x120] sm:$0xff] %vm882, 0.0
  %1160 = vst.msk [vmem:[#allocation3 + $0x128] sm:$0x3] %vm1123, 0.0
  %1161 = vst.msk [vmem:[#allocation3 + $0x130] sm:$0xff] %vm882, 0.0
  %1162 = vst.msk [vmem:[#allocation3 + $0x138] sm:$0x3] %vm1123, 0.0
  %s1163 = scalar_lea.vmem [#allocation3], 16
  %1164 = vst.msk [vmem:[%s1163 + $0x1] sm:$0xff] %vm882, %v1106
  %1165 = vst.msk [vmem:[%s1163 + $0x11] sm:$0xff] %vm882, %v1107
  %1166 = vst.msk [vmem:[%s1163 + $0x21] sm:$0xff] %vm882, %v1108
  %1167 = vst.msk [vmem:[%s1163 + $0x31] sm:$0xff] %vm882, %v1109
  %1168 = vst.msk [vmem:[%s1163 + $0x41] sm:$0xff] %vm882, %v1110
  %1169 = vst.msk [vmem:[%s1163 + $0x51] sm:$0xff] %vm882, %v1111
  %1170 = vst.msk [vmem:[%s1163 + $0x61] sm:$0xff] %vm882, %v1112
  %1171 = vst.msk [vmem:[%s1163 + $0x71] sm:$0xff] %vm882, %v1113
  %1172 = vst.msk [vmem:[%s1163 + $0xa1] sm:$0xff] %vm882, %v1114
  %1173 = vst.msk [vmem:[%s1163 + $0xb1] sm:$0xff] %vm882, %v1115
  %1174 = vst.msk [vmem:[%s1163 + $0xc1] sm:$0xff] %vm882, %v1116
  %1175 = vst.msk [vmem:[%s1163 + $0xd1] sm:$0xff] %vm882, %v1117
  %1176 = vst.msk [vmem:[%s1163 + $0xe1] sm:$0xff] %vm882, %v1118
  %1177 = vst.msk [vmem:[%s1163 + $0xf1] sm:$0xff] %vm882, %v1119
  %1178 = vst.msk [vmem:[%s1163 + $0x101] sm:$0xff] %vm882, %v1120
  %1179 = vst.msk [vmem:[%s1163 + $0x111] sm:$0xff] %vm882, %v1121
  %v1180 = vld [vmem:[#allocation3] sm:$0xff]
  %v1181 = vld [vmem:[#allocation3 + $0x10] sm:$0xff]
  %v1182 = vld [vmem:[#allocation3 + $0x20] sm:$0xff]
  %v1183 = vld [vmem:[#allocation3 + $0x30] sm:$0xff]
  %v1184 = vld [vmem:[#allocation3 + $0x40] sm:$0xff]
  %v1185 = vld [vmem:[#allocation3 + $0x50] sm:$0xff]
  %v1186 = vld [vmem:[#allocation3 + $0x60] sm:$0xff]
  %v1187 = vld [vmem:[#allocation3 + $0x70] sm:$0xff]
  %v1188 = vld [vmem:[#allocation3 + $0xa0] sm:$0xff]
  %v1189 = vld [vmem:[#allocation3 + $0xb0] sm:$0xff]
  %v1190 = vld [vmem:[#allocation3 + $0xc0] sm:$0xff]
  %v1191 = vld [vmem:[#allocation3 + $0xd0] sm:$0xff]
  %v1192 = vld [vmem:[#allocation3 + $0xe0] sm:$0xff]
  %v1193 = vld [vmem:[#allocation3 + $0xf0] sm:$0xff]
  %v1194 = vld [vmem:[#allocation3 + $0x100] sm:$0xff]
  %v1195 = vld [vmem:[#allocation3 + $0x110] sm:$0xff]
  %v1196 = vld [vmem:[%s4] sm:$0xff]
  %v1197 = vld [vmem:[%s4 + $0x8] sm:$0xff]
  %v1198 = vld [vmem:[#allocation3 + $0x1] sm:$0xff]
  %v1199 = vld [vmem:[#allocation3 + $0x11] sm:$0xff]
  %v1200 = vld [vmem:[#allocation3 + $0x21] sm:$0xff]
  %v1201 = vld [vmem:[#allocation3 + $0x31] sm:$0xff]
  %v1202 = vld [vmem:[#allocation3 + $0x41] sm:$0xff]
  %v1203 = vld [vmem:[#allocation3 + $0x51] sm:$0xff]
  %v1204 = vld [vmem:[#allocation3 + $0x61] sm:$0xff]
  %v1205 = vld [vmem:[#allocation3 + $0x71] sm:$0xff]
  %v1206 = vld [vmem:[#allocation3 + $0xa1] sm:$0xff]
  %v1207 = vld [vmem:[#allocation3 + $0xb1] sm:$0xff]
  %v1208 = vld [vmem:[#allocation3 + $0xc1] sm:$0xff]
  %v1209 = vld [vmem:[#allocation3 + $0xd1] sm:$0xff]
  %v1210 = vld [vmem:[#allocation3 + $0xe1] sm:$0xff]
  %v1211 = vld [vmem:[#allocation3 + $0xf1] sm:$0xff]
  %v1212 = vld [vmem:[#allocation3 + $0x101] sm:$0xff]
  %v1213 = vld [vmem:[#allocation3 + $0x111] sm:$0xff]
  %s1214 = scalar_lea.vmem %s4, 16
  %v1215 = vld [vmem:[%s1214] sm:$0xff]
  %v1216 = vld [vmem:[%s1214 + $0x8] sm:$0xff]
  %v1218 = vsel %vm882, %v1198, 0
  %v1221 = vsel %vm882, %v1199, 0
  %v1224 = vsel %vm882, %v1200, 0
  %v1227 = vsel %vm882, %v1201, 0
  %v1230 = vsel %vm882, %v1202, 0
  %v1233 = vsel %vm882, %v1203, 0
  %v1236 = vsel %vm882, %v1204, 0
  %v1239 = vsel %vm882, %v1205, 0
  %v1242 = vsel %vm882, %v1206, 0
  %v1245 = vsel %vm882, %v1207, 0
  %v1248 = vsel %vm882, %v1208, 0
  %v1251 = vsel %vm882, %v1209, 0
  %v1254 = vsel %vm882, %v1210, 0
  %v1257 = vsel %vm882, %v1211, 0
  %v1260 = vsel %vm882, %v1212, 0
  %v1263 = vsel %vm882, %v1213, 0
  %1265 = vmatprep.subr.mxu0 0.0
  %1266 = vmatpush1.msra.mxu0 %v1215
  %1267 = vmatprep.subr.mxu0 0.0
  %1268 = vmatpush1.msra.mxu0 %v1216
  %1269 = vmatprep.subr.mxu0 0.0
  %1270 = vmatpush1.msra.mxu0 0.0
  %1271 = vmatprep.subr.mxu0 0.0
  %1272 = vmatpush1.msra.mxu0 0.0
  %1273 = vmatprep.subr.mxu0 0.0
  %1274 = vmatpush1.msra.mxu0 0.0
  %1275 = vmatprep.subr.mxu0 0.0
  %1276 = vmatpush1.msra.mxu0 0.0
  %1277 = vmatprep.subr.mxu0 0.0
  %1278 = vmatpush1.msra.mxu0 0.0
  %1279 = vmatprep.subr.mxu0 0.0
  %1280 = vmatpush1.msra.mxu0 0.0
  %1281 = vmatprep.subr.mxu0 0.0
  %1282 = vmatpush1.msra.mxu0 0.0
  %1283 = vmatprep.subr.mxu0 0.0
  %1284 = vmatpush1.msra.mxu0 0.0
  %1285 = vmatprep.subr.mxu0 0.0
  %1286 = vmatpush1.msra.mxu0 0.0
  %1287 = vmatprep.subr.mxu0 0.0
  %1288 = vmatpush1.msra.mxu0 0.0
  %1289 = vmatprep.subr.mxu0 0.0
  %1290 = vmatpush1.msra.mxu0 0.0
  %1291 = vmatprep.subr.mxu0 0.0
  %1292 = vmatpush1.msra.mxu0 0.0
  %1293 = vmatprep.subr.mxu0 0.0
  %1294 = vmatpush1.msra.mxu0 0.0
  %1295 = vmatprep.subr.mxu0 0.0
  %1296 = vmatpush1.msra.mxu0 0.0
  %1297 = vmatprep.subr.mxu0 0.0
  %1298 = vmatpush1.msra.mxu0 0.0
  %1299 = vmatprep.subr.mxu0 0.0
  %1300 = vmatpush1.msra.mxu0 0.0
  %1301 = vmatprep.subr.mxu0 0.0
  %1302 = vmatpush1.msra.mxu0 0.0
  %1303 = vmatprep.subr.mxu0 0.0
  %1304 = vmatpush1.msra.mxu0 0.0
  %1305 = vmatprep.subr.mxu0 0.0
  %1306 = vmatpush1.msra.mxu0 0.0
  %1307 = vmatprep.subr.mxu0 0.0
  %1308 = vmatpush1.msra.mxu0 0.0
  %1309 = vmatprep.subr.mxu0 0.0
  %1310 = vmatpush1.msra.mxu0 0.0
  %1311 = vmatprep.subr.mxu0 0.0
  %1312 = vmatpush1.msra.mxu0 0.0
  %1313 = vmatprep.subr.mxu0 0.0
  %1314 = vmatpush1.msra.mxu0 0.0
  %1315 = vmatprep.subr.mxu0 0.0
  %1316 = vmatpush1.msra.mxu0 0.0
  %1317 = vmatprep.subr.mxu0 0.0
  %1318 = vmatpush1.msra.mxu0 0.0
  %1319 = vmatprep.subr.mxu0 0.0
  %1320 = vmatpush1.msra.mxu0 0.0
  %1321 = vmatprep.subr.mxu0 0.0
  %1322 = vmatpush1.msra.mxu0 0.0
  %1323 = vmatprep.subr.mxu0 0.0
  %1324 = vmatpush1.msra.mxu0 0.0
  %1325 = vmatprep.subr.mxu0 0.0
  %1326 = vmatpush1.msra.mxu0 0.0
  %1327 = vmatprep.subr.mxu0 0.0
  %1328 = vmatpush1.msra.mxu0 0.0
  %1329 = vmatprep.mubr.f32.mxu0 0.0
  %1330 = vmatmul.mubr.f32.gmra.mrb[0].mxu0 %v1218
  %v1331 = vpop.f32.mrb[0].mxu0
  %v1332 = vadd.f32 0.0, %v1331
  %v1333 = vpop.f32.mrb[0].mxu0
  %1334 = vmatprep.mubr.f32.mxu0 0.0
  %1335 = vmatmul.mubr.f32.gmra.mrb[0].mxu0 %v1221
  %v1336 = vpop.f32.mrb[0].mxu0
  %v1337 = vadd.f32 0.0, %v1336
  %v1338 = vpop.f32.mrb[0].mxu0
  %1339 = vmatprep.mubr.f32.mxu0 0.0
  %1340 = vmatmul.mubr.f32.gmra.mrb[0].mxu0 %v1224
  %v1341 = vpop.f32.mrb[0].mxu0
  %v1342 = vadd.f32 0.0, %v1341
  %v1343 = vpop.f32.mrb[0].mxu0
  %1344 = vmatprep.mubr.f32.mxu0 0.0
  %1345 = vmatmul.mubr.f32.gmra.mrb[0].mxu0 %v1227
  %v1346 = vpop.f32.mrb[0].mxu0
  %v1347 = vadd.f32 0.0, %v1346
  %v1348 = vpop.f32.mrb[0].mxu0
  %1349 = vmatprep.mubr.f32.mxu0 0.0
  %1350 = vmatmul.mubr.f32.gmra.mrb[0].mxu0 %v1230
  %v1351 = vpop.f32.mrb[0].mxu0
  %v1352 = vadd.f32 0.0, %v1351
  %v1353 = vpop.f32.mrb[0].mxu0
  %1354 = vmatprep.mubr.f32.mxu0 0.0
  %1355 = vmatmul.mubr.f32.gmra.mrb[0].mxu0 %v1233
  %v1356 = vpop.f32.mrb[0].mxu0
  %v1357 = vadd.f32 0.0, %v1356
  %v1358 = vpop.f32.mrb[0].mxu0
  %1359 = vmatprep.mubr.f32.mxu0 0.0
  %1360 = vmatmul.mubr.f32.gmra.mrb[0].mxu0 %v1236
  %v1361 = vpop.f32.mrb[0].mxu0
  %v1362 = vadd.f32 0.0, %v1361
  %v1363 = vpop.f32.mrb[0].mxu0
  %1364 = vmatprep.mubr.f32.mxu0 0.0
  %1365 = vmatmul.mubr.f32.gmra.mrb[0].mxu0 %v1239
  %v1366 = vpop.f32.mrb[0].mxu0
  %v1367 = vadd.f32 0.0, %v1366
  %v1368 = vpop.f32.mrb[0].mxu0
  %1369 = vmatprep.mubr.f32.mxu0 0.0
  %1370 = vmatmul.mubr.f32.gmra.mrb[0].mxu0 %v1242
  %v1371 = vpop.f32.mrb[0].mxu0
  %v1372 = vadd.f32 0.0, %v1371
  %v1373 = vpop.f32.mrb[0].mxu0
  %1374 = vmatprep.mubr.f32.mxu0 0.0
  %1375 = vmatmul.mubr.f32.gmra.mrb[0].mxu0 %v1245
  %v1376 = vpop.f32.mrb[0].mxu0
  %v1377 = vadd.f32 0.0, %v1376
  %v1378 = vpop.f32.mrb[0].mxu0
  %1379 = vmatprep.mubr.f32.mxu0 0.0
  %1380 = vmatmul.mubr.f32.gmra.mrb[0].mxu0 %v1248
  %v1381 = vpop.f32.mrb[0].mxu0
  %v1382 = vadd.f32 0.0, %v1381
  %v1383 = vpop.f32.mrb[0].mxu0
  %1384 = vmatprep.mubr.f32.mxu0 0.0
  %1385 = vmatmul.mubr.f32.gmra.mrb[0].mxu0 %v1251
  %v1386 = vpop.f32.mrb[0].mxu0
  %v1387 = vadd.f32 0.0, %v1386
  %v1388 = vpop.f32.mrb[0].mxu0
  %1389 = vmatprep.mubr.f32.mxu0 0.0
  %1390 = vmatmul.mubr.f32.gmra.mrb[0].mxu0 %v1254
  %v1391 = vpop.f32.mrb[0].mxu0
  %v1392 = vadd.f32 0.0, %v1391
  %v1393 = vpop.f32.mrb[0].mxu0
  %1394 = vmatprep.mubr.f32.mxu0 0.0
  %1395 = vmatmul.mubr.f32.gmra.mrb[0].mxu0 %v1257
  %v1396 = vpop.f32.mrb[0].mxu0
  %v1397 = vadd.f32 0.0, %v1396
  %v1398 = vpop.f32.mrb[0].mxu0
  %1399 = vmatprep.mubr.f32.mxu0 0.0
  %1400 = vmatmul.mubr.f32.gmra.mrb[0].mxu0 %v1260
  %v1401 = vpop.f32.mrb[0].mxu0
  %v1402 = vadd.f32 0.0, %v1401
  %v1403 = vpop.f32.mrb[0].mxu0
  %1404 = vmatprep.mubr.f32.mxu0 0.0
  %1405 = vmatmul.mubr.f32.gmra.mrb[0].mxu0 %v1263
  %v1406 = vpop.f32.mrb[0].mxu0
  %v1407 = vadd.f32 0.0, %v1406
  %v1408 = vpop.f32.mrb[0].mxu0
  %1409 = vdwg.mxu0
  %v1411 = vsel %vm882, %v1180, 0
  %v1414 = vsel %vm882, %v1181, 0
  %v1417 = vsel %vm882, %v1182, 0
  %v1420 = vsel %vm882, %v1183, 0
  %v1423 = vsel %vm882, %v1184, 0
  %v1426 = vsel %vm882, %v1185, 0
  %v1429 = vsel %vm882, %v1186, 0
  %v1432 = vsel %vm882, %v1187, 0
  %v1435 = vsel %vm882, %v1188, 0
  %v1438 = vsel %vm882, %v1189, 0
  %v1441 = vsel %vm882, %v1190, 0
  %v1444 = vsel %vm882, %v1191, 0
  %v1447 = vsel %vm882, %v1192, 0
  %v1450 = vsel %vm882, %v1193, 0
  %v1453 = vsel %vm882, %v1194, 0
  %v1456 = vsel %vm882, %v1195, 0
  %1458 = vmatprep.subr.mxu0 0.0
  %1459 = vmatpush1.msra.mxu0 %v1196
  %1460 = vmatprep.subr.mxu0 0.0
  %1461 = vmatpush1.msra.mxu0 %v1197
  %1462 = vmatprep.subr.mxu0 0.0
  %1463 = vmatpush1.msra.mxu0 0.0
  %1464 = vmatprep.subr.mxu0 0.0
  %1465 = vmatpush1.msra.mxu0 0.0
  %1466 = vmatprep.subr.mxu0 0.0
  %1467 = vmatpush1.msra.mxu0 0.0
  %1468 = vmatprep.subr.mxu0 0.0
  %1469 = vmatpush1.msra.mxu0 0.0
  %1470 = vmatprep.subr.mxu0 0.0
  %1471 = vmatpush1.msra.mxu0 0.0
  %1472 = vmatprep.subr.mxu0 0.0
  %1473 = vmatpush1.msra.mxu0 0.0
  %1474 = vmatprep.subr.mxu0 0.0
  %1475 = vmatpush1.msra.mxu0 0.0
  %1476 = vmatprep.subr.mxu0 0.0
  %1477 = vmatpush1.msra.mxu0 0.0
  %1478 = vmatprep.subr.mxu0 0.0
  %1479 = vmatpush1.msra.mxu0 0.0
  %1480 = vmatprep.subr.mxu0 0.0
  %1481 = vmatpush1.msra.mxu0 0.0
  %1482 = vmatprep.subr.mxu0 0.0
  %1483 = vmatpush1.msra.mxu0 0.0
  %1484 = vmatprep.subr.mxu0 0.0
  %1485 = vmatpush1.msra.mxu0 0.0
  %1486 = vmatprep.subr.mxu0 0.0
  %1487 = vmatpush1.msra.mxu0 0.0
  %1488 = vmatprep.subr.mxu0 0.0
  %1489 = vmatpush1.msra.mxu0 0.0
  %1490 = vmatprep.subr.mxu0 0.0
  %1491 = vmatpush1.msra.mxu0 0.0
  %1492 = vmatprep.subr.mxu0 0.0
  %1493 = vmatpush1.msra.mxu0 0.0
  %1494 = vmatprep.subr.mxu0 0.0
  %1495 = vmatpush1.msra.mxu0 0.0
  %1496 = vmatprep.subr.mxu0 0.0
  %1497 = vmatpush1.msra.mxu0 0.0
  %1498 = vmatprep.subr.mxu0 0.0
  %1499 = vmatpush1.msra.mxu0 0.0
  %1500 = vmatprep.subr.mxu0 0.0
  %1501 = vmatpush1.msra.mxu0 0.0
  %1502 = vmatprep.subr.mxu0 0.0
  %1503 = vmatpush1.msra.mxu0 0.0
  %1504 = vmatprep.subr.mxu0 0.0
  %1505 = vmatpush1.msra.mxu0 0.0
  %1506 = vmatprep.subr.mxu0 0.0
  %1507 = vmatpush1.msra.mxu0 0.0
  %1508 = vmatprep.subr.mxu0 0.0
  %1509 = vmatpush1.msra.mxu0 0.0
  %1510 = vmatprep.subr.mxu0 0.0
  %1511 = vmatpush1.msra.mxu0 0.0
  %1512 = vmatprep.subr.mxu0 0.0
  %1513 = vmatpush1.msra.mxu0 0.0
  %1514 = vmatprep.subr.mxu0 0.0
  %1515 = vmatpush1.msra.mxu0 0.0
  %1516 = vmatprep.subr.mxu0 0.0
  %1517 = vmatpush1.msra.mxu0 0.0
  %1518 = vmatprep.subr.mxu0 0.0
  %1519 = vmatpush1.msra.mxu0 0.0
  %1520 = vmatprep.subr.mxu0 0.0
  %1521 = vmatpush1.msra.mxu0 0.0
  %1522 = vmatprep.mubr.f32.mxu0 0.0
  %1523 = vmatmul.mubr.f32.gmra.mrb[0].mxu0 %v1411
  %v1524 = vpop.f32.mrb[0].mxu0
  %v1525 = vadd.f32 %v1332, %v1524
  %v1526 = vpop.f32.mrb[0].mxu0
  %1527 = vmatprep.mubr.f32.mxu0 0.0
  %1528 = vmatmul.mubr.f32.gmra.mrb[0].mxu0 %v1414
  %v1529 = vpop.f32.mrb[0].mxu0
  %v1530 = vadd.f32 %v1337, %v1529
  %v1531 = vpop.f32.mrb[0].mxu0
  %1532 = vmatprep.mubr.f32.mxu0 0.0
  %1533 = vmatmul.mubr.f32.gmra.mrb[0].mxu0 %v1417
  %v1534 = vpop.f32.mrb[0].mxu0
  %v1535 = vadd.f32 %v1342, %v1534
  %v1536 = vpop.f32.mrb[0].mxu0
  %1537 = vmatprep.mubr.f32.mxu0 0.0
  %1538 = vmatmul.mubr.f32.gmra.mrb[0].mxu0 %v1420
  %v1539 = vpop.f32.mrb[0].mxu0
  %v1540 = vadd.f32 %v1347, %v1539
  %v1541 = vpop.f32.mrb[0].mxu0
  %1542 = vmatprep.mubr.f32.mxu0 0.0
  %1543 = vmatmul.mubr.f32.gmra.mrb[0].mxu0 %v1423
  %v1544 = vpop.f32.mrb[0].mxu0
  %v1545 = vadd.f32 %v1352, %v1544
  %v1546 = vpop.f32.mrb[0].mxu0
  %1547 = vmatprep.mubr.f32.mxu0 0.0
  %1548 = vmatmul.mubr.f32.gmra.mrb[0].mxu0 %v1426
  %v1549 = vpop.f32.mrb[0].mxu0
  %v1550 = vadd.f32 %v1357, %v1549
  %v1551 = vpop.f32.mrb[0].mxu0
  %1552 = vmatprep.mubr.f32.mxu0 0.0
  %1553 = vmatmul.mubr.f32.gmra.mrb[0].mxu0 %v1429
  %v1554 = vpop.f32.mrb[0].mxu0
  %v1555 = vadd.f32 %v1362, %v1554
  %v1556 = vpop.f32.mrb[0].mxu0
  %1557 = vmatprep.mubr.f32.mxu0 0.0
  %1558 = vmatmul.mubr.f32.gmra.mrb[0].mxu0 %v1432
  %v1559 = vpop.f32.mrb[0].mxu0
  %v1560 = vadd.f32 %v1367, %v1559
  %v1561 = vpop.f32.mrb[0].mxu0
  %1562 = vmatprep.mubr.f32.mxu0 0.0
  %1563 = vmatmul.mubr.f32.gmra.mrb[0].mxu0 %v1435
  %v1564 = vpop.f32.mrb[0].mxu0
  %v1565 = vadd.f32 %v1372, %v1564
  %v1566 = vpop.f32.mrb[0].mxu0
  %1567 = vmatprep.mubr.f32.mxu0 0.0
  %1568 = vmatmul.mubr.f32.gmra.mrb[0].mxu0 %v1438
  %v1569 = vpop.f32.mrb[0].mxu0
  %v1570 = vadd.f32 %v1377, %v1569
  %v1571 = vpop.f32.mrb[0].mxu0
  %1572 = vmatprep.mubr.f32.mxu0 0.0
  %1573 = vmatmul.mubr.f32.gmra.mrb[0].mxu0 %v1441
  %v1574 = vpop.f32.mrb[0].mxu0
  %v1575 = vadd.f32 %v1382, %v1574
  %v1576 = vpop.f32.mrb[0].mxu0
  %1577 = vmatprep.mubr.f32.mxu0 0.0
  %1578 = vmatmul.mubr.f32.gmra.mrb[0].mxu0 %v1444
  %v1579 = vpop.f32.mrb[0].mxu0
  %v1580 = vadd.f32 %v1387, %v1579
  %v1581 = vpop.f32.mrb[0].mxu0
  %1582 = vmatprep.mubr.f32.mxu0 0.0
  %1583 = vmatmul.mubr.f32.gmra.mrb[0].mxu0 %v1447
  %v1584 = vpop.f32.mrb[0].mxu0
  %v1585 = vadd.f32 %v1392, %v1584
  %v1586 = vpop.f32.mrb[0].mxu0
  %1587 = vmatprep.mubr.f32.mxu0 0.0
  %1588 = vmatmul.mubr.f32.gmra.mrb[0].mxu0 %v1450
  %v1589 = vpop.f32.mrb[0].mxu0
  %v1590 = vadd.f32 %v1397, %v1589
  %v1591 = vpop.f32.mrb[0].mxu0
  %1592 = vmatprep.mubr.f32.mxu0 0.0
  %1593 = vmatmul.mubr.f32.gmra.mrb[0].mxu0 %v1453
  %v1594 = vpop.f32.mrb[0].mxu0
  %v1595 = vadd.f32 %v1402, %v1594
  %v1596 = vpop.f32.mrb[0].mxu0
  %1597 = vmatprep.mubr.f32.mxu0 0.0
  %1598 = vmatmul.mubr.f32.gmra.mrb[0].mxu0 %v1456
  %v1599 = vpop.f32.mrb[0].mxu0
  %v1600 = vadd.f32 %v1407, %v1599
  %v1601 = vpop.f32.mrb[0].mxu0
  %1602 = vdwg.mxu0
  %v1603 = vld [vmem:[#allocation3 + $0x2] sm:$0xff]
  %v1604 = vld [vmem:[#allocation3 + $0x12] sm:$0xff]
  %v1605 = vld [vmem:[#allocation3 + $0x22] sm:$0xff]
  %v1606 = vld [vmem:[#allocation3 + $0x32] sm:$0xff]
  %v1607 = vld [vmem:[#allocation3 + $0x42] sm:$0xff]
  %v1608 = vld [vmem:[#allocation3 + $0x52] sm:$0xff]
  %v1609 = vld [vmem:[#allocation3 + $0x62] sm:$0xff]
  %v1610 = vld [vmem:[#allocation3 + $0x72] sm:$0xff]
  %v1611 = vld [vmem:[#allocation3 + $0xa2] sm:$0xff]
  %v1612 = vld [vmem:[#allocation3 + $0xb2] sm:$0xff]
  %v1613 = vld [vmem:[#allocation3 + $0xc2] sm:$0xff]
  %v1614 = vld [vmem:[#allocation3 + $0xd2] sm:$0xff]
  %v1615 = vld [vmem:[#allocation3 + $0xe2] sm:$0xff]
  %v1616 = vld [vmem:[#allocation3 + $0xf2] sm:$0xff]
  %v1617 = vld [vmem:[#allocation3 + $0x102] sm:$0xff]
  %v1618 = vld [vmem:[#allocation3 + $0x112] sm:$0xff]
  %s1619 = scalar_lea.vmem %s4, 32
  %v1620 = vld [vmem:[%s1619] sm:$0xff]
  %v1621 = vld [vmem:[%s1619 + $0x8] sm:$0xff]
  %v1623 = vsel %vm882, %v1603, 0
  %v1626 = vsel %vm882, %v1604, 0
  %v1629 = vsel %vm882, %v1605, 0
  %v1632 = vsel %vm882, %v1606, 0
  %v1635 = vsel %vm882, %v1607, 0
  %v1638 = vsel %vm882, %v1608, 0
  %v1641 = vsel %vm882, %v1609, 0
  %v1644 = vsel %vm882, %v1610, 0
  %v1647 = vsel %vm882, %v1611, 0
  %v1650 = vsel %vm882, %v1612, 0
  %v1653 = vsel %vm882, %v1613, 0
  %v1656 = vsel %vm882, %v1614, 0
  %v1659 = vsel %vm882, %v1615, 0
  %v1662 = vsel %vm882, %v1616, 0
  %v1665 = vsel %vm882, %v1617, 0
  %v1668 = vsel %vm882, %v1618, 0
  %1670 = vmatprep.subr.mxu0 0.0
  %1671 = vmatpush1.msra.mxu0 %v1620
  %1672 = vmatprep.subr.mxu0 0.0
  %1673 = vmatpush1.msra.mxu0 %v1621
  %1674 = vmatprep.subr.mxu0 0.0
  %1675 = vmatpush1.msra.mxu0 0.0
  %1676 = vmatprep.subr.mxu0 0.0
  %1677 = vmatpush1.msra.mxu0 0.0
  %1678 = vmatprep.subr.mxu0 0.0
  %1679 = vmatpush1.msra.mxu0 0.0
  %1680 = vmatprep.subr.mxu0 0.0
  %1681 = vmatpush1.msra.mxu0 0.0
  %1682 = vmatprep.subr.mxu0 0.0
  %1683 = vmatpush1.msra.mxu0 0.0
  %1684 = vmatprep.subr.mxu0 0.0
  %1685 = vmatpush1.msra.mxu0 0.0
  %1686 = vmatprep.subr.mxu0 0.0
  %1687 = vmatpush1.msra.mxu0 0.0
  %1688 = vmatprep.subr.mxu0 0.0
  %1689 = vmatpush1.msra.mxu0 0.0
  %1690 = vmatprep.subr.mxu0 0.0
  %1691 = vmatpush1.msra.mxu0 0.0
  %1692 = vmatprep.subr.mxu0 0.0
  %1693 = vmatpush1.msra.mxu0 0.0
  %1694 = vmatprep.subr.mxu0 0.0
  %1695 = vmatpush1.msra.mxu0 0.0
  %1696 = vmatprep.subr.mxu0 0.0
  %1697 = vmatpush1.msra.mxu0 0.0
  %1698 = vmatprep.subr.mxu0 0.0
  %1699 = vmatpush1.msra.mxu0 0.0
  %1700 = vmatprep.subr.mxu0 0.0
  %1701 = vmatpush1.msra.mxu0 0.0
  %1702 = vmatprep.subr.mxu0 0.0
  %1703 = vmatpush1.msra.mxu0 0.0
  %1704 = vmatprep.subr.mxu0 0.0
  %1705 = vmatpush1.msra.mxu0 0.0
  %1706 = vmatprep.subr.mxu0 0.0
  %1707 = vmatpush1.msra.mxu0 0.0
  %1708 = vmatprep.subr.mxu0 0.0
  %1709 = vmatpush1.msra.mxu0 0.0
  %1710 = vmatprep.subr.mxu0 0.0
  %1711 = vmatpush1.msra.mxu0 0.0
  %1712 = vmatprep.subr.mxu0 0.0
  %1713 = vmatpush1.msra.mxu0 0.0
  %1714 = vmatprep.subr.mxu0 0.0
  %1715 = vmatpush1.msra.mxu0 0.0
  %1716 = vmatprep.subr.mxu0 0.0
  %1717 = vmatpush1.msra.mxu0 0.0
  %1718 = vmatprep.subr.mxu0 0.0
  %1719 = vmatpush1.msra.mxu0 0.0
  %1720 = vmatprep.subr.mxu0 0.0
  %1721 = vmatpush1.msra.mxu0 0.0
  %1722 = vmatprep.subr.mxu0 0.0
  %1723 = vmatpush1.msra.mxu0 0.0
  %1724 = vmatprep.subr.mxu0 0.0
  %1725 = vmatpush1.msra.mxu0 0.0
  %1726 = vmatprep.subr.mxu0 0.0
  %1727 = vmatpush1.msra.mxu0 0.0
  %1728 = vmatprep.subr.mxu0 0.0
  %1729 = vmatpush1.msra.mxu0 0.0
  %1730 = vmatprep.subr.mxu0 0.0
  %1731 = vmatpush1.msra.mxu0 0.0
  %1732 = vmatprep.subr.mxu0 0.0
  %1733 = vmatpush1.msra.mxu0 0.0
  %1734 = vmatprep.mubr.f32.mxu0 0.0
  %1735 = vmatmul.mubr.f32.gmra.mrb[0].mxu0 %v1623
  %v1736 = vpop.f32.mrb[0].mxu0
  %v1737 = vadd.f32 0.0, %v1736
  %v1738 = vpop.f32.mrb[0].mxu0
  %1739 = vmatprep.mubr.f32.mxu0 0.0
  %1740 = vmatmul.mubr.f32.gmra.mrb[0].mxu0 %v1626
  %v1741 = vpop.f32.mrb[0].mxu0
  %v1742 = vadd.f32 0.0, %v1741
  %v1743 = vpop.f32.mrb[0].mxu0
  %1744 = vmatprep.mubr.f32.mxu0 0.0
  %1745 = vmatmul.mubr.f32.gmra.mrb[0].mxu0 %v1629
  %v1746 = vpop.f32.mrb[0].mxu0
  %v1747 = vadd.f32 0.0, %v1746
  %v1748 = vpop.f32.mrb[0].mxu0
  %1749 = vmatprep.mubr.f32.mxu0 0.0
  %1750 = vmatmul.mubr.f32.gmra.mrb[0].mxu0 %v1632
  %v1751 = vpop.f32.mrb[0].mxu0
  %v1752 = vadd.f32 0.0, %v1751
  %v1753 = vpop.f32.mrb[0].mxu0
  %1754 = vmatprep.mubr.f32.mxu0 0.0
  %1755 = vmatmul.mubr.f32.gmra.mrb[0].mxu0 %v1635
  %v1756 = vpop.f32.mrb[0].mxu0
  %v1757 = vadd.f32 0.0, %v1756
  %v1758 = vpop.f32.mrb[0].mxu0
  %1759 = vmatprep.mubr.f32.mxu0 0.0
  %1760 = vmatmul.mubr.f32.gmra.mrb[0].mxu0 %v1638
  %v1761 = vpop.f32.mrb[0].mxu0
  %v1762 = vadd.f32 0.0, %v1761
  %v1763 = vpop.f32.mrb[0].mxu0
  %1764 = vmatprep.mubr.f32.mxu0 0.0
  %1765 = vmatmul.mubr.f32.gmra.mrb[0].mxu0 %v1641
  %v1766 = vpop.f32.mrb[0].mxu0
  %v1767 = vadd.f32 0.0, %v1766
  %v1768 = vpop.f32.mrb[0].mxu0
  %1769 = vmatprep.mubr.f32.mxu0 0.0
  %1770 = vmatmul.mubr.f32.gmra.mrb[0].mxu0 %v1644
  %v1771 = vpop.f32.mrb[0].mxu0
  %v1772 = vadd.f32 0.0, %v1771
  %v1773 = vpop.f32.mrb[0].mxu0
  %1774 = vmatprep.mubr.f32.mxu0 0.0
  %1775 = vmatmul.mubr.f32.gmra.mrb[0].mxu0 %v1647
  %v1776 = vpop.f32.mrb[0].mxu0
  %v1777 = vadd.f32 0.0, %v1776
  %v1778 = vpop.f32.mrb[0].mxu0
  %1779 = vmatprep.mubr.f32.mxu0 0.0
  %1780 = vmatmul.mubr.f32.gmra.mrb[0].mxu0 %v1650
  %v1781 = vpop.f32.mrb[0].mxu0
  %v1782 = vadd.f32 0.0, %v1781
  %v1783 = vpop.f32.mrb[0].mxu0
  %1784 = vmatprep.mubr.f32.mxu0 0.0
  %1785 = vmatmul.mubr.f32.gmra.mrb[0].mxu0 %v1653
  %v1786 = vpop.f32.mrb[0].mxu0
  %v1787 = vadd.f32 0.0, %v1786
  %v1788 = vpop.f32.mrb[0].mxu0
  %1789 = vmatprep.mubr.f32.mxu0 0.0
  %1790 = vmatmul.mubr.f32.gmra.mrb[0].mxu0 %v1656
  %v1791 = vpop.f32.mrb[0].mxu0
  %v1792 = vadd.f32 0.0, %v1791
  %v1793 = vpop.f32.mrb[0].mxu0
  %1794 = vmatprep.mubr.f32.mxu0 0.0
  %1795 = vmatmul.mubr.f32.gmra.mrb[0].mxu0 %v1659
  %v1796 = vpop.f32.mrb[0].mxu0
  %v1797 = vadd.f32 0.0, %v1796
  %v1798 = vpop.f32.mrb[0].mxu0
  %1799 = vmatprep.mubr.f32.mxu0 0.0
  %1800 = vmatmul.mubr.f32.gmra.mrb[0].mxu0 %v1662
  %v1801 = vpop.f32.mrb[0].mxu0
  %v1802 = vadd.f32 0.0, %v1801
  %v1803 = vpop.f32.mrb[0].mxu0
  %1804 = vmatprep.mubr.f32.mxu0 0.0
  %1805 = vmatmul.mubr.f32.gmra.mrb[0].mxu0 %v1665
  %v1806 = vpop.f32.mrb[0].mxu0
  %v1807 = vadd.f32 0.0, %v1806
  %v1808 = vpop.f32.mrb[0].mxu0
  %1809 = vmatprep.mubr.f32.mxu0 0.0
  %1810 = vmatmul.mubr.f32.gmra.mrb[0].mxu0 %v1668
  %v1811 = vpop.f32.mrb[0].mxu0
  %v1812 = vadd.f32 0.0, %v1811
  %v1813 = vpop.f32.mrb[0].mxu0
  %1814 = vdwg.mxu0
  %v1815 = vadd.f32 %v1525, %v1737
  %v1816 = vadd.f32 %v1530, %v1742
  %v1817 = vadd.f32 %v1535, %v1747
  %v1818 = vadd.f32 %v1540, %v1752
  %v1819 = vadd.f32 %v1545, %v1757
  %v1820 = vadd.f32 %v1550, %v1762
  %v1821 = vadd.f32 %v1555, %v1767
  %v1822 = vadd.f32 %v1560, %v1772
  %v1823 = vadd.f32 %v1565, %v1777
  %v1824 = vadd.f32 %v1570, %v1782
  %v1825 = vadd.f32 %v1575, %v1787
  %v1826 = vadd.f32 %v1580, %v1792
  %v1827 = vadd.f32 %v1585, %v1797
  %v1828 = vadd.f32 %v1590, %v1802
  %v1829 = vadd.f32 %v1595, %v1807
  %v1830 = vadd.f32 %v1600, %v1812
  %v1831 = vld [vmem:[%s1163] sm:$0xff]
  %v1832 = vld [vmem:[%s1163 + $0x10] sm:$0xff]
  %v1833 = vld [vmem:[%s1163 + $0x20] sm:$0xff]
  %v1834 = vld [vmem:[%s1163 + $0x30] sm:$0xff]
  %v1835 = vld [vmem:[%s1163 + $0x40] sm:$0xff]
  %v1836 = vld [vmem:[%s1163 + $0x50] sm:$0xff]
  %v1837 = vld [vmem:[%s1163 + $0x60] sm:$0xff]
  %v1838 = vld [vmem:[%s1163 + $0x70] sm:$0xff]
  %v1839 = vld [vmem:[%s1163 + $0xa0] sm:$0xff]
  %v1840 = vld [vmem:[%s1163 + $0xb0] sm:$0xff]
  %v1841 = vld [vmem:[%s1163 + $0xc0] sm:$0xff]
  %v1842 = vld [vmem:[%s1163 + $0xd0] sm:$0xff]
  %v1843 = vld [vmem:[%s1163 + $0xe0] sm:$0xff]
  %v1844 = vld [vmem:[%s1163 + $0xf0] sm:$0xff]
  %v1845 = vld [vmem:[%s1163 + $0x100] sm:$0xff]
  %v1846 = vld [vmem:[%s1163 + $0x110] sm:$0xff]
  %s1847 = scalar_lea.vmem %s4, 48
  %v1848 = vld [vmem:[%s1847] sm:$0xff]
  %v1849 = vld [vmem:[%s1847 + $0x8] sm:$0xff]
  %v1851 = vsel %vm882, %v1831, 0
  %v1854 = vsel %vm882, %v1832, 0
  %v1857 = vsel %vm882, %v1833, 0
  %v1860 = vsel %vm882, %v1834, 0
  %v1863 = vsel %vm882, %v1835, 0
  %v1866 = vsel %vm882, %v1836, 0
  %v1869 = vsel %vm882, %v1837, 0
  %v1872 = vsel %vm882, %v1838, 0
  %v1875 = vsel %vm882, %v1839, 0
  %v1878 = vsel %vm882, %v1840, 0
  %v1881 = vsel %vm882, %v1841, 0
  %v1884 = vsel %vm882, %v1842, 0
  %v1887 = vsel %vm882, %v1843, 0
  %v1890 = vsel %vm882, %v1844, 0
  %v1893 = vsel %vm882, %v1845, 0
  %v1896 = vsel %vm882, %v1846, 0
  %1898 = vmatprep.subr.mxu0 0.0
  %1899 = vmatpush1.msra.mxu0 %v1848
  %1900 = vmatprep.subr.mxu0 0.0
  %1901 = vmatpush1.msra.mxu0 %v1849
  %1902 = vmatprep.subr.mxu0 0.0
  %1903 = vmatpush1.msra.mxu0 0.0
  %1904 = vmatprep.subr.mxu0 0.0
  %1905 = vmatpush1.msra.mxu0 0.0
  %1906 = vmatprep.subr.mxu0 0.0
  %1907 = vmatpush1.msra.mxu0 0.0
  %1908 = vmatprep.subr.mxu0 0.0
  %1909 = vmatpush1.msra.mxu0 0.0
  %1910 = vmatprep.subr.mxu0 0.0
  %1911 = vmatpush1.msra.mxu0 0.0
  %1912 = vmatprep.subr.mxu0 0.0
  %1913 = vmatpush1.msra.mxu0 0.0
  %1914 = vmatprep.subr.mxu0 0.0
  %1915 = vmatpush1.msra.mxu0 0.0
  %1916 = vmatprep.subr.mxu0 0.0
  %1917 = vmatpush1.msra.mxu0 0.0
  %1918 = vmatprep.subr.mxu0 0.0
  %1919 = vmatpush1.msra.mxu0 0.0
  %1920 = vmatprep.subr.mxu0 0.0
  %1921 = vmatpush1.msra.mxu0 0.0
  %1922 = vmatprep.subr.mxu0 0.0
  %1923 = vmatpush1.msra.mxu0 0.0
  %1924 = vmatprep.subr.mxu0 0.0
  %1925 = vmatpush1.msra.mxu0 0.0
  %1926 = vmatprep.subr.mxu0 0.0
  %1927 = vmatpush1.msra.mxu0 0.0
  %1928 = vmatprep.subr.mxu0 0.0
  %1929 = vmatpush1.msra.mxu0 0.0
  %1930 = vmatprep.subr.mxu0 0.0
  %1931 = vmatpush1.msra.mxu0 0.0
  %1932 = vmatprep.subr.mxu0 0.0
  %1933 = vmatpush1.msra.mxu0 0.0
  %1934 = vmatprep.subr.mxu0 0.0
  %1935 = vmatpush1.msra.mxu0 0.0
  %1936 = vmatprep.subr.mxu0 0.0
  %1937 = vmatpush1.msra.mxu0 0.0
  %1938 = vmatprep.subr.mxu0 0.0
  %1939 = vmatpush1.msra.mxu0 0.0
  %1940 = vmatprep.subr.mxu0 0.0
  %1941 = vmatpush1.msra.mxu0 0.0
  %1942 = vmatprep.subr.mxu0 0.0
  %1943 = vmatpush1.msra.mxu0 0.0
  %1944 = vmatprep.subr.mxu0 0.0
  %1945 = vmatpush1.msra.mxu0 0.0
  %1946 = vmatprep.subr.mxu0 0.0
  %1947 = vmatpush1.msra.mxu0 0.0
  %1948 = vmatprep.subr.mxu0 0.0
  %1949 = vmatpush1.msra.mxu0 0.0
  %1950 = vmatprep.subr.mxu0 0.0
  %1951 = vmatpush1.msra.mxu0 0.0
  %1952 = vmatprep.subr.mxu0 0.0
  %1953 = vmatpush1.msra.mxu0 0.0
  %1954 = vmatprep.subr.mxu0 0.0
  %1955 = vmatpush1.msra.mxu0 0.0
  %1956 = vmatprep.subr.mxu0 0.0
  %1957 = vmatpush1.msra.mxu0 0.0
  %1958 = vmatprep.subr.mxu0 0.0
  %1959 = vmatpush1.msra.mxu0 0.0
  %1960 = vmatprep.subr.mxu0 0.0
  %1961 = vmatpush1.msra.mxu0 0.0
  %1962 = vmatprep.mubr.f32.mxu0 0.0
  %1963 = vmatmul.mubr.f32.gmra.mrb[0].mxu0 %v1851
  %v1964 = vpop.f32.mrb[0].mxu0
  %v1965 = vadd.f32 0.0, %v1964
  %v1966 = vpop.f32.mrb[0].mxu0
  %1967 = vmatprep.mubr.f32.mxu0 0.0
  %1968 = vmatmul.mubr.f32.gmra.mrb[0].mxu0 %v1854
  %v1969 = vpop.f32.mrb[0].mxu0
  %v1970 = vadd.f32 0.0, %v1969
  %v1971 = vpop.f32.mrb[0].mxu0
  %1972 = vmatprep.mubr.f32.mxu0 0.0
  %1973 = vmatmul.mubr.f32.gmra.mrb[0].mxu0 %v1857
  %v1974 = vpop.f32.mrb[0].mxu0
  %v1975 = vadd.f32 0.0, %v1974
  %v1976 = vpop.f32.mrb[0].mxu0
  %1977 = vmatprep.mubr.f32.mxu0 0.0
  %1978 = vmatmul.mubr.f32.gmra.mrb[0].mxu0 %v1860
  %v1979 = vpop.f32.mrb[0].mxu0
  %v1980 = vadd.f32 0.0, %v1979
  %v1981 = vpop.f32.mrb[0].mxu0
  %1982 = vmatprep.mubr.f32.mxu0 0.0
  %1983 = vmatmul.mubr.f32.gmra.mrb[0].mxu0 %v1863
  %v1984 = vpop.f32.mrb[0].mxu0
  %v1985 = vadd.f32 0.0, %v1984
  %v1986 = vpop.f32.mrb[0].mxu0
  %1987 = vmatprep.mubr.f32.mxu0 0.0
  %1988 = vmatmul.mubr.f32.gmra.mrb[0].mxu0 %v1866
  %v1989 = vpop.f32.mrb[0].mxu0
  %v1990 = vadd.f32 0.0, %v1989
  %v1991 = vpop.f32.mrb[0].mxu0
  %1992 = vmatprep.mubr.f32.mxu0 0.0
  %1993 = vmatmul.mubr.f32.gmra.mrb[0].mxu0 %v1869
  %v1994 = vpop.f32.mrb[0].mxu0
  %v1995 = vadd.f32 0.0, %v1994
  %v1996 = vpop.f32.mrb[0].mxu0
  %1997 = vmatprep.mubr.f32.mxu0 0.0
  %1998 = vmatmul.mubr.f32.gmra.mrb[0].mxu0 %v1872
  %v1999 = vpop.f32.mrb[0].mxu0
  %v2000 = vadd.f32 0.0, %v1999
  %v2001 = vpop.f32.mrb[0].mxu0
  %2002 = vmatprep.mubr.f32.mxu0 0.0
  %2003 = vmatmul.mubr.f32.gmra.mrb[0].mxu0 %v1875
  %v2004 = vpop.f32.mrb[0].mxu0
  %v2005 = vadd.f32 0.0, %v2004
  %v2006 = vpop.f32.mrb[0].mxu0
  %2007 = vmatprep.mubr.f32.mxu0 0.0
  %2008 = vmatmul.mubr.f32.gmra.mrb[0].mxu0 %v1878
  %v2009 = vpop.f32.mrb[0].mxu0
  %v2010 = vadd.f32 0.0, %v2009
  %v2011 = vpop.f32.mrb[0].mxu0
  %2012 = vmatprep.mubr.f32.mxu0 0.0
  %2013 = vmatmul.mubr.f32.gmra.mrb[0].mxu0 %v1881
  %v2014 = vpop.f32.mrb[0].mxu0
  %v2015 = vadd.f32 0.0, %v2014
  %v2016 = vpop.f32.mrb[0].mxu0
  %2017 = vmatprep.mubr.f32.mxu0 0.0
  %2018 = vmatmul.mubr.f32.gmra.mrb[0].mxu0 %v1884
  %v2019 = vpop.f32.mrb[0].mxu0
  %v2020 = vadd.f32 0.0, %v2019
  %v2021 = vpop.f32.mrb[0].mxu0
  %2022 = vmatprep.mubr.f32.mxu0 0.0
  %2023 = vmatmul.mubr.f32.gmra.mrb[0].mxu0 %v1887
  %v2024 = vpop.f32.mrb[0].mxu0
  %v2025 = vadd.f32 0.0, %v2024
  %v2026 = vpop.f32.mrb[0].mxu0
  %2027 = vmatprep.mubr.f32.mxu0 0.0
  %2028 = vmatmul.mubr.f32.gmra.mrb[0].mxu0 %v1890
  %v2029 = vpop.f32.mrb[0].mxu0
  %v2030 = vadd.f32 0.0, %v2029
  %v2031 = vpop.f32.mrb[0].mxu0
  %2032 = vmatprep.mubr.f32.mxu0 0.0
  %2033 = vmatmul.mubr.f32.gmra.mrb[0].mxu0 %v1893
  %v2034 = vpop.f32.mrb[0].mxu0
  %v2035 = vadd.f32 0.0, %v2034
  %v2036 = vpop.f32.mrb[0].mxu0
  %2037 = vmatprep.mubr.f32.mxu0 0.0
  %2038 = vmatmul.mubr.f32.gmra.mrb[0].mxu0 %v1896
  %v2039 = vpop.f32.mrb[0].mxu0
  %v2040 = vadd.f32 0.0, %v2039
  %v2041 = vpop.f32.mrb[0].mxu0
  %2042 = vdwg.mxu0
  %v2043 = vadd.f32 %v1815, %v1965
  %v2044 = vadd.f32 %v1816, %v1970
  %v2045 = vadd.f32 %v1817, %v1975
  %v2046 = vadd.f32 %v1818, %v1980
  %v2047 = vadd.f32 %v1819, %v1985
  %v2048 = vadd.f32 %v1820, %v1990
  %v2049 = vadd.f32 %v1821, %v1995
  %v2050 = vadd.f32 %v1822, %v2000
  %v2051 = vadd.f32 %v1823, %v2005
  %v2052 = vadd.f32 %v1824, %v2010
  %v2053 = vadd.f32 %v1825, %v2015
  %v2054 = vadd.f32 %v1826, %v2020
  %v2055 = vadd.f32 %v1827, %v2025
  %v2056 = vadd.f32 %v1828, %v2030
  %v2057 = vadd.f32 %v1829, %v2035
  %v2058 = vadd.f32 %v1830, %v2040
  %v2059 = vld [vmem:[%s1163 + $0x1] sm:$0xff]
  %v2060 = vld [vmem:[%s1163 + $0x11] sm:$0xff]
  %v2061 = vld [vmem:[%s1163 + $0x21] sm:$0xff]
  %v2062 = vld [vmem:[%s1163 + $0x31] sm:$0xff]
  %v2063 = vld [vmem:[%s1163 + $0x41] sm:$0xff]
  %v2064 = vld [vmem:[%s1163 + $0x51] sm:$0xff]
  %v2065 = vld [vmem:[%s1163 + $0x61] sm:$0xff]
  %v2066 = vld [vmem:[%s1163 + $0x71] sm:$0xff]
  %v2067 = vld [vmem:[%s1163 + $0xa1] sm:$0xff]
  %v2068 = vld [vmem:[%s1163 + $0xb1] sm:$0xff]
  %v2069 = vld [vmem:[%s1163 + $0xc1] sm:$0xff]
  %v2070 = vld [vmem:[%s1163 + $0xd1] sm:$0xff]
  %v2071 = vld [vmem:[%s1163 + $0xe1] sm:$0xff]
  %v2072 = vld [vmem:[%s1163 + $0xf1] sm:$0xff]
  %v2073 = vld [vmem:[%s1163 + $0x101] sm:$0xff]
  %v2074 = vld [vmem:[%s1163 + $0x111] sm:$0xff]
  %s2075 = scalar_lea.vmem %s4, 64
  %v2076 = vld [vmem:[%s2075] sm:$0xff]
  %v2077 = vld [vmem:[%s2075 + $0x8] sm:$0xff]
  %v2079 = vsel %vm882, %v2059, 0
  %v2082 = vsel %vm882, %v2060, 0
  %v2085 = vsel %vm882, %v2061, 0
  %v2088 = vsel %vm882, %v2062, 0
  %v2091 = vsel %vm882, %v2063, 0
  %v2094 = vsel %vm882, %v2064, 0
  %v2097 = vsel %vm882, %v2065, 0
  %v2100 = vsel %vm882, %v2066, 0
  %v2103 = vsel %vm882, %v2067, 0
  %v2106 = vsel %vm882, %v2068, 0
  %v2109 = vsel %vm882, %v2069, 0
  %v2112 = vsel %vm882, %v2070, 0
  %v2115 = vsel %vm882, %v2071, 0
  %v2118 = vsel %vm882, %v2072, 0
  %v2121 = vsel %vm882, %v2073, 0
  %v2124 = vsel %vm882, %v2074, 0
  %2126 = vmatprep.subr.mxu0 0.0
  %2127 = vmatpush1.msra.mxu0 %v2076
  %2128 = vmatprep.subr.mxu0 0.0
  %2129 = vmatpush1.msra.mxu0 %v2077
  %2130 = vmatprep.subr.mxu0 0.0
  %2131 = vmatpush1.msra.mxu0 0.0
  %2132 = vmatprep.subr.mxu0 0.0
  %2133 = vmatpush1.msra.mxu0 0.0
  %2134 = vmatprep.subr.mxu0 0.0
  %2135 = vmatpush1.msra.mxu0 0.0
  %2136 = vmatprep.subr.mxu0 0.0
  %2137 = vmatpush1.msra.mxu0 0.0
  %2138 = vmatprep.subr.mxu0 0.0
  %2139 = vmatpush1.msra.mxu0 0.0
  %2140 = vmatprep.subr.mxu0 0.0
  %2141 = vmatpush1.msra.mxu0 0.0
  %2142 = vmatprep.subr.mxu0 0.0
  %2143 = vmatpush1.msra.mxu0 0.0
  %2144 = vmatprep.subr.mxu0 0.0
  %2145 = vmatpush1.msra.mxu0 0.0
  %2146 = vmatprep.subr.mxu0 0.0
  %2147 = vmatpush1.msra.mxu0 0.0
  %2148 = vmatprep.subr.mxu0 0.0
  %2149 = vmatpush1.msra.mxu0 0.0
  %2150 = vmatprep.subr.mxu0 0.0
  %2151 = vmatpush1.msra.mxu0 0.0
  %2152 = vmatprep.subr.mxu0 0.0
  %2153 = vmatpush1.msra.mxu0 0.0
  %2154 = vmatprep.subr.mxu0 0.0
  %2155 = vmatpush1.msra.mxu0 0.0
  %2156 = vmatprep.subr.mxu0 0.0
  %2157 = vmatpush1.msra.mxu0 0.0
  %2158 = vmatprep.subr.mxu0 0.0
  %2159 = vmatpush1.msra.mxu0 0.0
  %2160 = vmatprep.subr.mxu0 0.0
  %2161 = vmatpush1.msra.mxu0 0.0
  %2162 = vmatprep.subr.mxu0 0.0
  %2163 = vmatpush1.msra.mxu0 0.0
  %2164 = vmatprep.subr.mxu0 0.0
  %2165 = vmatpush1.msra.mxu0 0.0
  %2166 = vmatprep.subr.mxu0 0.0
  %2167 = vmatpush1.msra.mxu0 0.0
  %2168 = vmatprep.subr.mxu0 0.0
  %2169 = vmatpush1.msra.mxu0 0.0
  %2170 = vmatprep.subr.mxu0 0.0
  %2171 = vmatpush1.msra.mxu0 0.0
  %2172 = vmatprep.subr.mxu0 0.0
  %2173 = vmatpush1.msra.mxu0 0.0
  %2174 = vmatprep.subr.mxu0 0.0
  %2175 = vmatpush1.msra.mxu0 0.0
  %2176 = vmatprep.subr.mxu0 0.0
  %2177 = vmatpush1.msra.mxu0 0.0
  %2178 = vmatprep.subr.mxu0 0.0
  %2179 = vmatpush1.msra.mxu0 0.0
  %2180 = vmatprep.subr.mxu0 0.0
  %2181 = vmatpush1.msra.mxu0 0.0
  %2182 = vmatprep.subr.mxu0 0.0
  %2183 = vmatpush1.msra.mxu0 0.0
  %2184 = vmatprep.subr.mxu0 0.0
  %2185 = vmatpush1.msra.mxu0 0.0
  %2186 = vmatprep.subr.mxu0 0.0
  %2187 = vmatpush1.msra.mxu0 0.0
  %2188 = vmatprep.subr.mxu0 0.0
  %2189 = vmatpush1.msra.mxu0 0.0
  %2190 = vmatprep.mubr.f32.mxu0 0.0
  %2191 = vmatmul.mubr.f32.gmra.mrb[0].mxu0 %v2079
  %v2192 = vpop.f32.mrb[0].mxu0
  %v2193 = vadd.f32 0.0, %v2192
  %v2194 = vpop.f32.mrb[0].mxu0
  %2195 = vmatprep.mubr.f32.mxu0 0.0
  %2196 = vmatmul.mubr.f32.gmra.mrb[0].mxu0 %v2082
  %v2197 = vpop.f32.mrb[0].mxu0
  %v2198 = vadd.f32 0.0, %v2197
  %v2199 = vpop.f32.mrb[0].mxu0
  %2200 = vmatprep.mubr.f32.mxu0 0.0
  %2201 = vmatmul.mubr.f32.gmra.mrb[0].mxu0 %v2085
  %v2202 = vpop.f32.mrb[0].mxu0
  %v2203 = vadd.f32 0.0, %v2202
  %v2204 = vpop.f32.mrb[0].mxu0
  %2205 = vmatprep.mubr.f32.mxu0 0.0
  %2206 = vmatmul.mubr.f32.gmra.mrb[0].mxu0 %v2088
  %v2207 = vpop.f32.mrb[0].mxu0
  %v2208 = vadd.f32 0.0, %v2207
  %v2209 = vpop.f32.mrb[0].mxu0
  %2210 = vmatprep.mubr.f32.mxu0 0.0
  %2211 = vmatmul.mubr.f32.gmra.mrb[0].mxu0 %v2091
  %v2212 = vpop.f32.mrb[0].mxu0
  %v2213 = vadd.f32 0.0, %v2212
  %v2214 = vpop.f32.mrb[0].mxu0
  %2215 = vmatprep.mubr.f32.mxu0 0.0
  %2216 = vmatmul.mubr.f32.gmra.mrb[0].mxu0 %v2094
  %v2217 = vpop.f32.mrb[0].mxu0
  %v2218 = vadd.f32 0.0, %v2217
  %v2219 = vpop.f32.mrb[0].mxu0
  %2220 = vmatprep.mubr.f32.mxu0 0.0
  %2221 = vmatmul.mubr.f32.gmra.mrb[0].mxu0 %v2097
  %v2222 = vpop.f32.mrb[0].mxu0
  %v2223 = vadd.f32 0.0, %v2222
  %v2224 = vpop.f32.mrb[0].mxu0
  %2225 = vmatprep.mubr.f32.mxu0 0.0
  %2226 = vmatmul.mubr.f32.gmra.mrb[0].mxu0 %v2100
  %v2227 = vpop.f32.mrb[0].mxu0
  %v2228 = vadd.f32 0.0, %v2227
  %v2229 = vpop.f32.mrb[0].mxu0
  %2230 = vmatprep.mubr.f32.mxu0 0.0
  %2231 = vmatmul.mubr.f32.gmra.mrb[0].mxu0 %v2103
  %v2232 = vpop.f32.mrb[0].mxu0
  %v2233 = vadd.f32 0.0, %v2232
  %v2234 = vpop.f32.mrb[0].mxu0
  %2235 = vmatprep.mubr.f32.mxu0 0.0
  %2236 = vmatmul.mubr.f32.gmra.mrb[0].mxu0 %v2106
  %v2237 = vpop.f32.mrb[0].mxu0
  %v2238 = vadd.f32 0.0, %v2237
  %v2239 = vpop.f32.mrb[0].mxu0
  %2240 = vmatprep.mubr.f32.mxu0 0.0
  %2241 = vmatmul.mubr.f32.gmra.mrb[0].mxu0 %v2109
  %v2242 = vpop.f32.mrb[0].mxu0
  %v2243 = vadd.f32 0.0, %v2242
  %v2244 = vpop.f32.mrb[0].mxu0
  %2245 = vmatprep.mubr.f32.mxu0 0.0
  %2246 = vmatmul.mubr.f32.gmra.mrb[0].mxu0 %v2112
  %v2247 = vpop.f32.mrb[0].mxu0
  %v2248 = vadd.f32 0.0, %v2247
  %v2249 = vpop.f32.mrb[0].mxu0
  %2250 = vmatprep.mubr.f32.mxu0 0.0
  %2251 = vmatmul.mubr.f32.gmra.mrb[0].mxu0 %v2115
  %v2252 = vpop.f32.mrb[0].mxu0
  %v2253 = vadd.f32 0.0, %v2252
  %v2254 = vpop.f32.mrb[0].mxu0
  %2255 = vmatprep.mubr.f32.mxu0 0.0
  %2256 = vmatmul.mubr.f32.gmra.mrb[0].mxu0 %v2118
  %v2257 = vpop.f32.mrb[0].mxu0
  %v2258 = vadd.f32 0.0, %v2257
  %v2259 = vpop.f32.mrb[0].mxu0
  %2260 = vmatprep.mubr.f32.mxu0 0.0
  %2261 = vmatmul.mubr.f32.gmra.mrb[0].mxu0 %v2121
  %v2262 = vpop.f32.mrb[0].mxu0
  %v2263 = vadd.f32 0.0, %v2262
  %v2264 = vpop.f32.mrb[0].mxu0
  %2265 = vmatprep.mubr.f32.mxu0 0.0
  %2266 = vmatmul.mubr.f32.gmra.mrb[0].mxu0 %v2124
  %v2267 = vpop.f32.mrb[0].mxu0
  %v2268 = vadd.f32 0.0, %v2267
  %v2269 = vpop.f32.mrb[0].mxu0
  %2270 = vdwg.mxu0
  %v2271 = vadd.f32 %v2043, %v2193
  %v2272 = vadd.f32 %v2044, %v2198
  %v2273 = vadd.f32 %v2045, %v2203
  %v2274 = vadd.f32 %v2046, %v2208
  %v2275 = vadd.f32 %v2047, %v2213
  %v2276 = vadd.f32 %v2048, %v2218
  %v2277 = vadd.f32 %v2049, %v2223
  %v2278 = vadd.f32 %v2050, %v2228
  %v2279 = vadd.f32 %v2051, %v2233
  %v2280 = vadd.f32 %v2052, %v2238
  %v2281 = vadd.f32 %v2053, %v2243
  %v2282 = vadd.f32 %v2054, %v2248
  %v2283 = vadd.f32 %v2055, %v2253
  %v2284 = vadd.f32 %v2056, %v2258
  %v2285 = vadd.f32 %v2057, %v2263
  %v2286 = vadd.f32 %v2058, %v2268
  %v2287 = vld [vmem:[%s1163 + $0x2] sm:$0xff]
  %v2288 = vld [vmem:[%s1163 + $0x12] sm:$0xff]
  %v2289 = vld [vmem:[%s1163 + $0x22] sm:$0xff]
  %v2290 = vld [vmem:[%s1163 + $0x32] sm:$0xff]
  %v2291 = vld [vmem:[%s1163 + $0x42] sm:$0xff]
  %v2292 = vld [vmem:[%s1163 + $0x52] sm:$0xff]
  %v2293 = vld [vmem:[%s1163 + $0x62] sm:$0xff]
  %v2294 = vld [vmem:[%s1163 + $0x72] sm:$0xff]
  %v2295 = vld [vmem:[%s1163 + $0xa2] sm:$0xff]
  %v2296 = vld [vmem:[%s1163 + $0xb2] sm:$0xff]
  %v2297 = vld [vmem:[%s1163 + $0xc2] sm:$0xff]
  %v2298 = vld [vmem:[%s1163 + $0xd2] sm:$0xff]
  %v2299 = vld [vmem:[%s1163 + $0xe2] sm:$0xff]
  %v2300 = vld [vmem:[%s1163 + $0xf2] sm:$0xff]
  %v2301 = vld [vmem:[%s1163 + $0x102] sm:$0xff]
  %v2302 = vld [vmem:[%s1163 + $0x112] sm:$0xff]
  %s2303 = scalar_lea.vmem %s4, 80
  %v2304 = vld [vmem:[%s2303] sm:$0xff]
  %v2305 = vld [vmem:[%s2303 + $0x8] sm:$0xff]
  %v2307 = vsel %vm882, %v2287, 0
  %v2310 = vsel %vm882, %v2288, 0
  %v2313 = vsel %vm882, %v2289, 0
  %v2316 = vsel %vm882, %v2290, 0
  %v2319 = vsel %vm882, %v2291, 0
  %v2322 = vsel %vm882, %v2292, 0
  %v2325 = vsel %vm882, %v2293, 0
  %v2328 = vsel %vm882, %v2294, 0
  %v2331 = vsel %vm882, %v2295, 0
  %v2334 = vsel %vm882, %v2296, 0
  %v2337 = vsel %vm882, %v2297, 0
  %v2340 = vsel %vm882, %v2298, 0
  %v2343 = vsel %vm882, %v2299, 0
  %v2346 = vsel %vm882, %v2300, 0
  %v2349 = vsel %vm882, %v2301, 0
  %v2352 = vsel %vm882, %v2302, 0
  %2354 = vmatprep.subr.mxu0 0.0
  %2355 = vmatpush1.msra.mxu0 %v2304
  %2356 = vmatprep.subr.mxu0 0.0
  %2357 = vmatpush1.msra.mxu0 %v2305
  %2358 = vmatprep.subr.mxu0 0.0
  %2359 = vmatpush1.msra.mxu0 0.0
  %2360 = vmatprep.subr.mxu0 0.0
  %2361 = vmatpush1.msra.mxu0 0.0
  %2362 = vmatprep.subr.mxu0 0.0
  %2363 = vmatpush1.msra.mxu0 0.0
  %2364 = vmatprep.subr.mxu0 0.0
  %2365 = vmatpush1.msra.mxu0 0.0
  %2366 = vmatprep.subr.mxu0 0.0
  %2367 = vmatpush1.msra.mxu0 0.0
  %2368 = vmatprep.subr.mxu0 0.0
  %2369 = vmatpush1.msra.mxu0 0.0
  %2370 = vmatprep.subr.mxu0 0.0
  %2371 = vmatpush1.msra.mxu0 0.0
  %2372 = vmatprep.subr.mxu0 0.0
  %2373 = vmatpush1.msra.mxu0 0.0
  %2374 = vmatprep.subr.mxu0 0.0
  %2375 = vmatpush1.msra.mxu0 0.0
  %2376 = vmatprep.subr.mxu0 0.0
  %2377 = vmatpush1.msra.mxu0 0.0
  %2378 = vmatprep.subr.mxu0 0.0
  %2379 = vmatpush1.msra.mxu0 0.0
  %2380 = vmatprep.subr.mxu0 0.0
  %2381 = vmatpush1.msra.mxu0 0.0
  %2382 = vmatprep.subr.mxu0 0.0
  %2383 = vmatpush1.msra.mxu0 0.0
  %2384 = vmatprep.subr.mxu0 0.0
  %2385 = vmatpush1.msra.mxu0 0.0
  %2386 = vmatprep.subr.mxu0 0.0
  %2387 = vmatpush1.msra.mxu0 0.0
  %2388 = vmatprep.subr.mxu0 0.0
  %2389 = vmatpush1.msra.mxu0 0.0
  %2390 = vmatprep.subr.mxu0 0.0
  %2391 = vmatpush1.msra.mxu0 0.0
  %2392 = vmatprep.subr.mxu0 0.0
  %2393 = vmatpush1.msra.mxu0 0.0
  %2394 = vmatprep.subr.mxu0 0.0
  %2395 = vmatpush1.msra.mxu0 0.0
  %2396 = vmatprep.subr.mxu0 0.0
  %2397 = vmatpush1.msra.mxu0 0.0
  %2398 = vmatprep.subr.mxu0 0.0
  %2399 = vmatpush1.msra.mxu0 0.0
  %2400 = vmatprep.subr.mxu0 0.0
  %2401 = vmatpush1.msra.mxu0 0.0
  %2402 = vmatprep.subr.mxu0 0.0
  %2403 = vmatpush1.msra.mxu0 0.0
  %2404 = vmatprep.subr.mxu0 0.0
  %2405 = vmatpush1.msra.mxu0 0.0
  %2406 = vmatprep.subr.mxu0 0.0
  %2407 = vmatpush1.msra.mxu0 0.0
  %2408 = vmatprep.subr.mxu0 0.0
  %2409 = vmatpush1.msra.mxu0 0.0
  %2410 = vmatprep.subr.mxu0 0.0
  %2411 = vmatpush1.msra.mxu0 0.0
  %2412 = vmatprep.subr.mxu0 0.0
  %2413 = vmatpush1.msra.mxu0 0.0
  %2414 = vmatprep.subr.mxu0 0.0
  %2415 = vmatpush1.msra.mxu0 0.0
  %2416 = vmatprep.subr.mxu0 0.0
  %2417 = vmatpush1.msra.mxu0 0.0
  %2418 = vmatprep.mubr.f32.mxu0 0.0
  %2419 = vmatmul.mubr.f32.gmra.mrb[0].mxu0 %v2307
  %v2420 = vpop.f32.mrb[0].mxu0
  %v2421 = vadd.f32 0.0, %v2420
  %v2422 = vpop.f32.mrb[0].mxu0
  %2423 = vmatprep.mubr.f32.mxu0 0.0
  %2424 = vmatmul.mubr.f32.gmra.mrb[0].mxu0 %v2310
  %v2425 = vpop.f32.mrb[0].mxu0
  %v2426 = vadd.f32 0.0, %v2425
  %v2427 = vpop.f32.mrb[0].mxu0
  %2428 = vmatprep.mubr.f32.mxu0 0.0
  %2429 = vmatmul.mubr.f32.gmra.mrb[0].mxu0 %v2313
  %v2430 = vpop.f32.mrb[0].mxu0
  %v2431 = vadd.f32 0.0, %v2430
  %v2432 = vpop.f32.mrb[0].mxu0
  %2433 = vmatprep.mubr.f32.mxu0 0.0
  %2434 = vmatmul.mubr.f32.gmra.mrb[0].mxu0 %v2316
  %v2435 = vpop.f32.mrb[0].mxu0
  %v2436 = vadd.f32 0.0, %v2435
  %v2437 = vpop.f32.mrb[0].mxu0
  %2438 = vmatprep.mubr.f32.mxu0 0.0
  %2439 = vmatmul.mubr.f32.gmra.mrb[0].mxu0 %v2319
  %v2440 = vpop.f32.mrb[0].mxu0
  %v2441 = vadd.f32 0.0, %v2440
  %v2442 = vpop.f32.mrb[0].mxu0
  %2443 = vmatprep.mubr.f32.mxu0 0.0
  %2444 = vmatmul.mubr.f32.gmra.mrb[0].mxu0 %v2322
  %v2445 = vpop.f32.mrb[0].mxu0
  %v2446 = vadd.f32 0.0, %v2445
  %v2447 = vpop.f32.mrb[0].mxu0
  %2448 = vmatprep.mubr.f32.mxu0 0.0
  %2449 = vmatmul.mubr.f32.gmra.mrb[0].mxu0 %v2325
  %v2450 = vpop.f32.mrb[0].mxu0
  %v2451 = vadd.f32 0.0, %v2450
  %v2452 = vpop.f32.mrb[0].mxu0
  %2453 = vmatprep.mubr.f32.mxu0 0.0
  %2454 = vmatmul.mubr.f32.gmra.mrb[0].mxu0 %v2328
  %v2455 = vpop.f32.mrb[0].mxu0
  %v2456 = vadd.f32 0.0, %v2455
  %v2457 = vpop.f32.mrb[0].mxu0
  %2458 = vmatprep.mubr.f32.mxu0 0.0
  %2459 = vmatmul.mubr.f32.gmra.mrb[0].mxu0 %v2331
  %v2460 = vpop.f32.mrb[0].mxu0
  %v2461 = vadd.f32 0.0, %v2460
  %v2462 = vpop.f32.mrb[0].mxu0
  %2463 = vmatprep.mubr.f32.mxu0 0.0
  %2464 = vmatmul.mubr.f32.gmra.mrb[0].mxu0 %v2334
  %v2465 = vpop.f32.mrb[0].mxu0
  %v2466 = vadd.f32 0.0, %v2465
  %v2467 = vpop.f32.mrb[0].mxu0
  %2468 = vmatprep.mubr.f32.mxu0 0.0
  %2469 = vmatmul.mubr.f32.gmra.mrb[0].mxu0 %v2337
  %v2470 = vpop.f32.mrb[0].mxu0
  %v2471 = vadd.f32 0.0, %v2470
  %v2472 = vpop.f32.mrb[0].mxu0
  %2473 = vmatprep.mubr.f32.mxu0 0.0
  %2474 = vmatmul.mubr.f32.gmra.mrb[0].mxu0 %v2340
  %v2475 = vpop.f32.mrb[0].mxu0
  %v2476 = vadd.f32 0.0, %v2475
  %v2477 = vpop.f32.mrb[0].mxu0
  %2478 = vmatprep.mubr.f32.mxu0 0.0
  %2479 = vmatmul.mubr.f32.gmra.mrb[0].mxu0 %v2343
  %v2480 = vpop.f32.mrb[0].mxu0
  %v2481 = vadd.f32 0.0, %v2480
  %v2482 = vpop.f32.mrb[0].mxu0
  %2483 = vmatprep.mubr.f32.mxu0 0.0
  %2484 = vmatmul.mubr.f32.gmra.mrb[0].mxu0 %v2346
  %v2485 = vpop.f32.mrb[0].mxu0
  %v2486 = vadd.f32 0.0, %v2485
  %v2487 = vpop.f32.mrb[0].mxu0
  %2488 = vmatprep.mubr.f32.mxu0 0.0
  %2489 = vmatmul.mubr.f32.gmra.mrb[0].mxu0 %v2349
  %v2490 = vpop.f32.mrb[0].mxu0
  %v2491 = vadd.f32 0.0, %v2490
  %v2492 = vpop.f32.mrb[0].mxu0
  %2493 = vmatprep.mubr.f32.mxu0 0.0
  %2494 = vmatmul.mubr.f32.gmra.mrb[0].mxu0 %v2352
  %v2495 = vpop.f32.mrb[0].mxu0
  %v2496 = vadd.f32 0.0, %v2495
  %v2497 = vpop.f32.mrb[0].mxu0
  %2498 = vdwg.mxu0
  %v2499 = vadd.f32 %v2271, %v2421
  %v2500 = vadd.f32 %v2272, %v2426
  %v2501 = vadd.f32 %v2273, %v2431
  %v2502 = vadd.f32 %v2274, %v2436
  %v2503 = vadd.f32 %v2275, %v2441
  %v2504 = vadd.f32 %v2276, %v2446
  %v2505 = vadd.f32 %v2277, %v2451
  %v2506 = vadd.f32 %v2278, %v2456
  %v2507 = vadd.f32 %v2279, %v2461
  %v2508 = vadd.f32 %v2280, %v2466
  %v2509 = vadd.f32 %v2281, %v2471
  %v2510 = vadd.f32 %v2282, %v2476
  %v2511 = vadd.f32 %v2283, %v2481
  %v2512 = vadd.f32 %v2284, %v2486
  %v2513 = vadd.f32 %v2285, %v2491
  %v2514 = vadd.f32 %v2286, %v2496
  %s2515 = scalar_lea.vmem [#allocation3], 32
  %v2516 = vld [vmem:[%s2515] sm:$0xff]
  %v2517 = vld [vmem:[%s2515 + $0x10] sm:$0xff]
  %v2518 = vld [vmem:[%s2515 + $0x20] sm:$0xff]
  %v2519 = vld [vmem:[%s2515 + $0x30] sm:$0xff]
  %v2520 = vld [vmem:[%s2515 + $0x40] sm:$0xff]
  %v2521 = vld [vmem:[%s2515 + $0x50] sm:$0xff]
  %v2522 = vld [vmem:[%s2515 + $0x60] sm:$0xff]
  %v2523 = vld [vmem:[%s2515 + $0x70] sm:$0xff]
  %v2524 = vld [vmem:[%s2515 + $0xa0] sm:$0xff]
  %v2525 = vld [vmem:[%s2515 + $0xb0] sm:$0xff]
  %v2526 = vld [vmem:[%s2515 + $0xc0] sm:$0xff]
  %v2527 = vld [vmem:[%s2515 + $0xd0] sm:$0xff]
  %v2528 = vld [vmem:[%s2515 + $0xe0] sm:$0xff]
  %v2529 = vld [vmem:[%s2515 + $0xf0] sm:$0xff]
  %v2530 = vld [vmem:[%s2515 + $0x100] sm:$0xff]
  %v2531 = vld [vmem:[%s2515 + $0x110] sm:$0xff]
  %s2532 = scalar_lea.vmem %s4, 96
  %v2533 = vld [vmem:[%s2532] sm:$0xff]
  %v2534 = vld [vmem:[%s2532 + $0x8] sm:$0xff]
  %v2536 = vsel %vm882, %v2516, 0
  %v2539 = vsel %vm882, %v2517, 0
  %v2542 = vsel %vm882, %v2518, 0
  %v2545 = vsel %vm882, %v2519, 0
  %v2548 = vsel %vm882, %v2520, 0
  %v2551 = vsel %vm882, %v2521, 0
  %v2554 = vsel %vm882, %v2522, 0
  %v2557 = vsel %vm882, %v2523, 0
  %v2560 = vsel %vm882, %v2524, 0
  %v2563 = vsel %vm882, %v2525, 0
  %v2566 = vsel %vm882, %v2526, 0
  %v2569 = vsel %vm882, %v2527, 0
  %v2572 = vsel %vm882, %v2528, 0
  %v2575 = vsel %vm882, %v2529, 0
  %v2578 = vsel %vm882, %v2530, 0
  %v2581 = vsel %vm882, %v2531, 0
  %2583 = vmatprep.subr.mxu0 0.0
  %2584 = vmatpush1.msra.mxu0 %v2533
  %2585 = vmatprep.subr.mxu0 0.0
  %2586 = vmatpush1.msra.mxu0 %v2534
  %2587 = vmatprep.subr.mxu0 0.0
  %2588 = vmatpush1.msra.mxu0 0.0
  %2589 = vmatprep.subr.mxu0 0.0
  %2590 = vmatpush1.msra.mxu0 0.0
  %2591 = vmatprep.subr.mxu0 0.0
  %2592 = vmatpush1.msra.mxu0 0.0
  %2593 = vmatprep.subr.mxu0 0.0
  %2594 = vmatpush1.msra.mxu0 0.0
  %2595 = vmatprep.subr.mxu0 0.0
  %2596 = vmatpush1.msra.mxu0 0.0
  %2597 = vmatprep.subr.mxu0 0.0
  %2598 = vmatpush1.msra.mxu0 0.0
  %2599 = vmatprep.subr.mxu0 0.0
  %2600 = vmatpush1.msra.mxu0 0.0
  %2601 = vmatprep.subr.mxu0 0.0
  %2602 = vmatpush1.msra.mxu0 0.0
  %2603 = vmatprep.subr.mxu0 0.0
  %2604 = vmatpush1.msra.mxu0 0.0
  %2605 = vmatprep.subr.mxu0 0.0
  %2606 = vmatpush1.msra.mxu0 0.0
  %2607 = vmatprep.subr.mxu0 0.0
  %2608 = vmatpush1.msra.mxu0 0.0
  %2609 = vmatprep.subr.mxu0 0.0
  %2610 = vmatpush1.msra.mxu0 0.0
  %2611 = vmatprep.subr.mxu0 0.0
  %2612 = vmatpush1.msra.mxu0 0.0
  %2613 = vmatprep.subr.mxu0 0.0
  %2614 = vmatpush1.msra.mxu0 0.0
  %2615 = vmatprep.subr.mxu0 0.0
  %2616 = vmatpush1.msra.mxu0 0.0
  %2617 = vmatprep.subr.mxu0 0.0
  %2618 = vmatpush1.msra.mxu0 0.0
  %2619 = vmatprep.subr.mxu0 0.0
  %2620 = vmatpush1.msra.mxu0 0.0
  %2621 = vmatprep.subr.mxu0 0.0
  %2622 = vmatpush1.msra.mxu0 0.0
  %2623 = vmatprep.subr.mxu0 0.0
  %2624 = vmatpush1.msra.mxu0 0.0
  %2625 = vmatprep.subr.mxu0 0.0
  %2626 = vmatpush1.msra.mxu0 0.0
  %2627 = vmatprep.subr.mxu0 0.0
  %2628 = vmatpush1.msra.mxu0 0.0
  %2629 = vmatprep.subr.mxu0 0.0
  %2630 = vmatpush1.msra.mxu0 0.0
  %2631 = vmatprep.subr.mxu0 0.0
  %2632 = vmatpush1.msra.mxu0 0.0
  %2633 = vmatprep.subr.mxu0 0.0
  %2634 = vmatpush1.msra.mxu0 0.0
  %2635 = vmatprep.subr.mxu0 0.0
  %2636 = vmatpush1.msra.mxu0 0.0
  %2637 = vmatprep.subr.mxu0 0.0
  %2638 = vmatpush1.msra.mxu0 0.0
  %2639 = vmatprep.subr.mxu0 0.0
  %2640 = vmatpush1.msra.mxu0 0.0
  %2641 = vmatprep.subr.mxu0 0.0
  %2642 = vmatpush1.msra.mxu0 0.0
  %2643 = vmatprep.subr.mxu0 0.0
  %2644 = vmatpush1.msra.mxu0 0.0
  %2645 = vmatprep.subr.mxu0 0.0
  %2646 = vmatpush1.msra.mxu0 0.0
  %2647 = vmatprep.mubr.f32.mxu0 0.0
  %2648 = vmatmul.mubr.f32.gmra.mrb[0].mxu0 %v2536
  %v2649 = vpop.f32.mrb[0].mxu0
  %v2650 = vadd.f32 0.0, %v2649
  %v2651 = vpop.f32.mrb[0].mxu0
  %2652 = vmatprep.mubr.f32.mxu0 0.0
  %2653 = vmatmul.mubr.f32.gmra.mrb[0].mxu0 %v2539
  %v2654 = vpop.f32.mrb[0].mxu0
  %v2655 = vadd.f32 0.0, %v2654
  %v2656 = vpop.f32.mrb[0].mxu0
  %2657 = vmatprep.mubr.f32.mxu0 0.0
  %2658 = vmatmul.mubr.f32.gmra.mrb[0].mxu0 %v2542
  %v2659 = vpop.f32.mrb[0].mxu0
  %v2660 = vadd.f32 0.0, %v2659
  %v2661 = vpop.f32.mrb[0].mxu0
  %2662 = vmatprep.mubr.f32.mxu0 0.0
  %2663 = vmatmul.mubr.f32.gmra.mrb[0].mxu0 %v2545
  %v2664 = vpop.f32.mrb[0].mxu0
  %v2665 = vadd.f32 0.0, %v2664
  %v2666 = vpop.f32.mrb[0].mxu0
  %2667 = vmatprep.mubr.f32.mxu0 0.0
  %2668 = vmatmul.mubr.f32.gmra.mrb[0].mxu0 %v2548
  %v2669 = vpop.f32.mrb[0].mxu0
  %v2670 = vadd.f32 0.0, %v2669
  %v2671 = vpop.f32.mrb[0].mxu0
  %2672 = vmatprep.mubr.f32.mxu0 0.0
  %2673 = vmatmul.mubr.f32.gmra.mrb[0].mxu0 %v2551
  %v2674 = vpop.f32.mrb[0].mxu0
  %v2675 = vadd.f32 0.0, %v2674
  %v2676 = vpop.f32.mrb[0].mxu0
  %2677 = vmatprep.mubr.f32.mxu0 0.0
  %2678 = vmatmul.mubr.f32.gmra.mrb[0].mxu0 %v2554
  %v2679 = vpop.f32.mrb[0].mxu0
  %v2680 = vadd.f32 0.0, %v2679
  %v2681 = vpop.f32.mrb[0].mxu0
  %2682 = vmatprep.mubr.f32.mxu0 0.0
  %2683 = vmatmul.mubr.f32.gmra.mrb[0].mxu0 %v2557
  %v2684 = vpop.f32.mrb[0].mxu0
  %v2685 = vadd.f32 0.0, %v2684
  %v2686 = vpop.f32.mrb[0].mxu0
  %2687 = vmatprep.mubr.f32.mxu0 0.0
  %2688 = vmatmul.mubr.f32.gmra.mrb[0].mxu0 %v2560
  %v2689 = vpop.f32.mrb[0].mxu0
  %v2690 = vadd.f32 0.0, %v2689
  %v2691 = vpop.f32.mrb[0].mxu0
  %2692 = vmatprep.mubr.f32.mxu0 0.0
  %2693 = vmatmul.mubr.f32.gmra.mrb[0].mxu0 %v2563
  %v2694 = vpop.f32.mrb[0].mxu0
  %v2695 = vadd.f32 0.0, %v2694
  %v2696 = vpop.f32.mrb[0].mxu0
  %2697 = vmatprep.mubr.f32.mxu0 0.0
  %2698 = vmatmul.mubr.f32.gmra.mrb[0].mxu0 %v2566
  %v2699 = vpop.f32.mrb[0].mxu0
  %v2700 = vadd.f32 0.0, %v2699
  %v2701 = vpop.f32.mrb[0].mxu0
  %2702 = vmatprep.mubr.f32.mxu0 0.0
  %2703 = vmatmul.mubr.f32.gmra.mrb[0].mxu0 %v2569
  %v2704 = vpop.f32.mrb[0].mxu0
  %v2705 = vadd.f32 0.0, %v2704
  %v2706 = vpop.f32.mrb[0].mxu0
  %2707 = vmatprep.mubr.f32.mxu0 0.0
  %2708 = vmatmul.mubr.f32.gmra.mrb[0].mxu0 %v2572
  %v2709 = vpop.f32.mrb[0].mxu0
  %v2710 = vadd.f32 0.0, %v2709
  %v2711 = vpop.f32.mrb[0].mxu0
  %2712 = vmatprep.mubr.f32.mxu0 0.0
  %2713 = vmatmul.mubr.f32.gmra.mrb[0].mxu0 %v2575
  %v2714 = vpop.f32.mrb[0].mxu0
  %v2715 = vadd.f32 0.0, %v2714
  %v2716 = vpop.f32.mrb[0].mxu0
  %2717 = vmatprep.mubr.f32.mxu0 0.0
  %2718 = vmatmul.mubr.f32.gmra.mrb[0].mxu0 %v2578
  %v2719 = vpop.f32.mrb[0].mxu0
  %v2720 = vadd.f32 0.0, %v2719
  %v2721 = vpop.f32.mrb[0].mxu0
  %2722 = vmatprep.mubr.f32.mxu0 0.0
  %2723 = vmatmul.mubr.f32.gmra.mrb[0].mxu0 %v2581
  %v2724 = vpop.f32.mrb[0].mxu0
  %v2725 = vadd.f32 0.0, %v2724
  %v2726 = vpop.f32.mrb[0].mxu0
  %2727 = vdwg.mxu0
  %v2728 = vadd.f32 %v2499, %v2650
  %v2729 = vadd.f32 %v2500, %v2655
  %v2730 = vadd.f32 %v2501, %v2660
  %v2731 = vadd.f32 %v2502, %v2665
  %v2732 = vadd.f32 %v2503, %v2670
  %v2733 = vadd.f32 %v2504, %v2675
  %v2734 = vadd.f32 %v2505, %v2680
  %v2735 = vadd.f32 %v2506, %v2685
  %v2736 = vadd.f32 %v2507, %v2690
  %v2737 = vadd.f32 %v2508, %v2695
  %v2738 = vadd.f32 %v2509, %v2700
  %v2739 = vadd.f32 %v2510, %v2705
  %v2740 = vadd.f32 %v2511, %v2710
  %v2741 = vadd.f32 %v2512, %v2715
  %v2742 = vadd.f32 %v2513, %v2720
  %v2743 = vadd.f32 %v2514, %v2725
  %v2744 = vld [vmem:[%s2515 + $0x1] sm:$0xff]
  %v2745 = vld [vmem:[%s2515 + $0x11] sm:$0xff]
  %v2746 = vld [vmem:[%s2515 + $0x21] sm:$0xff]
  %v2747 = vld [vmem:[%s2515 + $0x31] sm:$0xff]
  %v2748 = vld [vmem:[%s2515 + $0x41] sm:$0xff]
  %v2749 = vld [vmem:[%s2515 + $0x51] sm:$0xff]
  %v2750 = vld [vmem:[%s2515 + $0x61] sm:$0xff]
  %v2751 = vld [vmem:[%s2515 + $0x71] sm:$0xff]
  %v2752 = vld [vmem:[%s2515 + $0xa1] sm:$0xff]
  %v2753 = vld [vmem:[%s2515 + $0xb1] sm:$0xff]
  %v2754 = vld [vmem:[%s2515 + $0xc1] sm:$0xff]
  %v2755 = vld [vmem:[%s2515 + $0xd1] sm:$0xff]
  %v2756 = vld [vmem:[%s2515 + $0xe1] sm:$0xff]
  %v2757 = vld [vmem:[%s2515 + $0xf1] sm:$0xff]
  %v2758 = vld [vmem:[%s2515 + $0x101] sm:$0xff]
  %v2759 = vld [vmem:[%s2515 + $0x111] sm:$0xff]
  %s2760 = scalar_lea.vmem %s4, 112
  %v2761 = vld [vmem:[%s2760] sm:$0xff]
  %v2762 = vld [vmem:[%s2760 + $0x8] sm:$0xff]
  %v2764 = vsel %vm882, %v2744, 0
  %v2767 = vsel %vm882, %v2745, 0
  %v2770 = vsel %vm882, %v2746, 0
  %v2773 = vsel %vm882, %v2747, 0
  %v2776 = vsel %vm882, %v2748, 0
  %v2779 = vsel %vm882, %v2749, 0
  %v2782 = vsel %vm882, %v2750, 0
  %v2785 = vsel %vm882, %v2751, 0
  %v2788 = vsel %vm882, %v2752, 0
  %v2791 = vsel %vm882, %v2753, 0
  %v2794 = vsel %vm882, %v2754, 0
  %v2797 = vsel %vm882, %v2755, 0
  %v2800 = vsel %vm882, %v2756, 0
  %v2803 = vsel %vm882, %v2757, 0
  %v2806 = vsel %vm882, %v2758, 0
  %v2809 = vsel %vm882, %v2759, 0
  %2811 = vmatprep.subr.mxu0 0.0
  %2812 = vmatpush1.msra.mxu0 %v2761
  %2813 = vmatprep.subr.mxu0 0.0
  %2814 = vmatpush1.msra.mxu0 %v2762
  %2815 = vmatprep.subr.mxu0 0.0
  %2816 = vmatpush1.msra.mxu0 0.0
  %2817 = vmatprep.subr.mxu0 0.0
  %2818 = vmatpush1.msra.mxu0 0.0
  %2819 = vmatprep.subr.mxu0 0.0
  %2820 = vmatpush1.msra.mxu0 0.0
  %2821 = vmatprep.subr.mxu0 0.0
  %2822 = vmatpush1.msra.mxu0 0.0
  %2823 = vmatprep.subr.mxu0 0.0
  %2824 = vmatpush1.msra.mxu0 0.0
  %2825 = vmatprep.subr.mxu0 0.0
  %2826 = vmatpush1.msra.mxu0 0.0
  %2827 = vmatprep.subr.mxu0 0.0
  %2828 = vmatpush1.msra.mxu0 0.0
  %2829 = vmatprep.subr.mxu0 0.0
  %2830 = vmatpush1.msra.mxu0 0.0
  %2831 = vmatprep.subr.mxu0 0.0
  %2832 = vmatpush1.msra.mxu0 0.0
  %2833 = vmatprep.subr.mxu0 0.0
  %2834 = vmatpush1.msra.mxu0 0.0
  %2835 = vmatprep.subr.mxu0 0.0
  %2836 = vmatpush1.msra.mxu0 0.0
  %2837 = vmatprep.subr.mxu0 0.0
  %2838 = vmatpush1.msra.mxu0 0.0
  %2839 = vmatprep.subr.mxu0 0.0
  %2840 = vmatpush1.msra.mxu0 0.0
  %2841 = vmatprep.subr.mxu0 0.0
  %2842 = vmatpush1.msra.mxu0 0.0
  %2843 = vmatprep.subr.mxu0 0.0
  %2844 = vmatpush1.msra.mxu0 0.0
  %2845 = vmatprep.subr.mxu0 0.0
  %2846 = vmatpush1.msra.mxu0 0.0
  %2847 = vmatprep.subr.mxu0 0.0
  %2848 = vmatpush1.msra.mxu0 0.0
  %2849 = vmatprep.subr.mxu0 0.0
  %2850 = vmatpush1.msra.mxu0 0.0
  %2851 = vmatprep.subr.mxu0 0.0
  %2852 = vmatpush1.msra.mxu0 0.0
  %2853 = vmatprep.subr.mxu0 0.0
  %2854 = vmatpush1.msra.mxu0 0.0
  %2855 = vmatprep.subr.mxu0 0.0
  %2856 = vmatpush1.msra.mxu0 0.0
  %2857 = vmatprep.subr.mxu0 0.0
  %2858 = vmatpush1.msra.mxu0 0.0
  %2859 = vmatprep.subr.mxu0 0.0
  %2860 = vmatpush1.msra.mxu0 0.0
  %2861 = vmatprep.subr.mxu0 0.0
  %2862 = vmatpush1.msra.mxu0 0.0
  %2863 = vmatprep.subr.mxu0 0.0
  %2864 = vmatpush1.msra.mxu0 0.0
  %2865 = vmatprep.subr.mxu0 0.0
  %2866 = vmatpush1.msra.mxu0 0.0
  %2867 = vmatprep.subr.mxu0 0.0
  %2868 = vmatpush1.msra.mxu0 0.0
  %2869 = vmatprep.subr.mxu0 0.0
  %2870 = vmatpush1.msra.mxu0 0.0
  %2871 = vmatprep.subr.mxu0 0.0
  %2872 = vmatpush1.msra.mxu0 0.0
  %2873 = vmatprep.subr.mxu0 0.0
  %2874 = vmatpush1.msra.mxu0 0.0
  %2875 = vmatprep.mubr.f32.mxu0 0.0
  %2876 = vmatmul.mubr.f32.gmra.mrb[0].mxu0 %v2764
  %v2877 = vpop.f32.mrb[0].mxu0
  %v2878 = vadd.f32 0.0, %v2877
  %v2879 = vpop.f32.mrb[0].mxu0
  %2880 = vmatprep.mubr.f32.mxu0 0.0
  %2881 = vmatmul.mubr.f32.gmra.mrb[0].mxu0 %v2767
  %v2882 = vpop.f32.mrb[0].mxu0
  %v2883 = vadd.f32 0.0, %v2882
  %v2884 = vpop.f32.mrb[0].mxu0
  %2885 = vmatprep.mubr.f32.mxu0 0.0
  %2886 = vmatmul.mubr.f32.gmra.mrb[0].mxu0 %v2770
  %v2887 = vpop.f32.mrb[0].mxu0
  %v2888 = vadd.f32 0.0, %v2887
  %v2889 = vpop.f32.mrb[0].mxu0
  %2890 = vmatprep.mubr.f32.mxu0 0.0
  %2891 = vmatmul.mubr.f32.gmra.mrb[0].mxu0 %v2773
  %v2892 = vpop.f32.mrb[0].mxu0
  %v2893 = vadd.f32 0.0, %v2892
  %v2894 = vpop.f32.mrb[0].mxu0
  %2895 = vmatprep.mubr.f32.mxu0 0.0
  %2896 = vmatmul.mubr.f32.gmra.mrb[0].mxu0 %v2776
  %v2897 = vpop.f32.mrb[0].mxu0
  %v2898 = vadd.f32 0.0, %v2897
  %v2899 = vpop.f32.mrb[0].mxu0
  %2900 = vmatprep.mubr.f32.mxu0 0.0
  %2901 = vmatmul.mubr.f32.gmra.mrb[0].mxu0 %v2779
  %v2902 = vpop.f32.mrb[0].mxu0
  %v2903 = vadd.f32 0.0, %v2902
  %v2904 = vpop.f32.mrb[0].mxu0
  %2905 = vmatprep.mubr.f32.mxu0 0.0
  %2906 = vmatmul.mubr.f32.gmra.mrb[0].mxu0 %v2782
  %v2907 = vpop.f32.mrb[0].mxu0
  %v2908 = vadd.f32 0.0, %v2907
  %v2909 = vpop.f32.mrb[0].mxu0
  %2910 = vmatprep.mubr.f32.mxu0 0.0
  %2911 = vmatmul.mubr.f32.gmra.mrb[0].mxu0 %v2785
  %v2912 = vpop.f32.mrb[0].mxu0
  %v2913 = vadd.f32 0.0, %v2912
  %v2914 = vpop.f32.mrb[0].mxu0
  %2915 = vmatprep.mubr.f32.mxu0 0.0
  %2916 = vmatmul.mubr.f32.gmra.mrb[0].mxu0 %v2788
  %v2917 = vpop.f32.mrb[0].mxu0
  %v2918 = vadd.f32 0.0, %v2917
  %v2919 = vpop.f32.mrb[0].mxu0
  %2920 = vmatprep.mubr.f32.mxu0 0.0
  %2921 = vmatmul.mubr.f32.gmra.mrb[0].mxu0 %v2791
  %v2922 = vpop.f32.mrb[0].mxu0
  %v2923 = vadd.f32 0.0, %v2922
  %v2924 = vpop.f32.mrb[0].mxu0
  %2925 = vmatprep.mubr.f32.mxu0 0.0
  %2926 = vmatmul.mubr.f32.gmra.mrb[0].mxu0 %v2794
  %v2927 = vpop.f32.mrb[0].mxu0
  %v2928 = vadd.f32 0.0, %v2927
  %v2929 = vpop.f32.mrb[0].mxu0
  %2930 = vmatprep.mubr.f32.mxu0 0.0
  %2931 = vmatmul.mubr.f32.gmra.mrb[0].mxu0 %v2797
  %v2932 = vpop.f32.mrb[0].mxu0
  %v2933 = vadd.f32 0.0, %v2932
  %v2934 = vpop.f32.mrb[0].mxu0
  %2935 = vmatprep.mubr.f32.mxu0 0.0
  %2936 = vmatmul.mubr.f32.gmra.mrb[0].mxu0 %v2800
  %v2937 = vpop.f32.mrb[0].mxu0
  %v2938 = vadd.f32 0.0, %v2937
  %v2939 = vpop.f32.mrb[0].mxu0
  %2940 = vmatprep.mubr.f32.mxu0 0.0
  %2941 = vmatmul.mubr.f32.gmra.mrb[0].mxu0 %v2803
  %v2942 = vpop.f32.mrb[0].mxu0
  %v2943 = vadd.f32 0.0, %v2942
  %v2944 = vpop.f32.mrb[0].mxu0
  %2945 = vmatprep.mubr.f32.mxu0 0.0
  %2946 = vmatmul.mubr.f32.gmra.mrb[0].mxu0 %v2806
  %v2947 = vpop.f32.mrb[0].mxu0
  %v2948 = vadd.f32 0.0, %v2947
  %v2949 = vpop.f32.mrb[0].mxu0
  %2950 = vmatprep.mubr.f32.mxu0 0.0
  %2951 = vmatmul.mubr.f32.gmra.mrb[0].mxu0 %v2809
  %v2952 = vpop.f32.mrb[0].mxu0
  %v2953 = vadd.f32 0.0, %v2952
  %v2954 = vpop.f32.mrb[0].mxu0
  %2955 = vdwg.mxu0
  %v2956 = vadd.f32 %v2728, %v2878
  %v2957 = vadd.f32 %v2729, %v2883
  %v2958 = vadd.f32 %v2730, %v2888
  %v2959 = vadd.f32 %v2731, %v2893
  %v2960 = vadd.f32 %v2732, %v2898
  %v2961 = vadd.f32 %v2733, %v2903
  %v2962 = vadd.f32 %v2734, %v2908
  %v2963 = vadd.f32 %v2735, %v2913
  %v2964 = vadd.f32 %v2736, %v2918
  %v2965 = vadd.f32 %v2737, %v2923
  %v2966 = vadd.f32 %v2738, %v2928
  %v2967 = vadd.f32 %v2739, %v2933
  %v2968 = vadd.f32 %v2740, %v2938
  %v2969 = vadd.f32 %v2741, %v2943
  %v2970 = vadd.f32 %v2742, %v2948
  %v2971 = vadd.f32 %v2743, %v2953
  %v2972 = vld [vmem:[%s2515 + $0x2] sm:$0xff]
  %v2973 = vld [vmem:[%s2515 + $0x12] sm:$0xff]
  %v2974 = vld [vmem:[%s2515 + $0x22] sm:$0xff]
  %v2975 = vld [vmem:[%s2515 + $0x32] sm:$0xff]
  %v2976 = vld [vmem:[%s2515 + $0x42] sm:$0xff]
  %v2977 = vld [vmem:[%s2515 + $0x52] sm:$0xff]
  %v2978 = vld [vmem:[%s2515 + $0x62] sm:$0xff]
  %v2979 = vld [vmem:[%s2515 + $0x72] sm:$0xff]
  %v2980 = vld [vmem:[%s2515 + $0xa2] sm:$0xff]
  %v2981 = vld [vmem:[%s2515 + $0xb2] sm:$0xff]
  %v2982 = vld [vmem:[%s2515 + $0xc2] sm:$0xff]
  %v2983 = vld [vmem:[%s2515 + $0xd2] sm:$0xff]
  %v2984 = vld [vmem:[%s2515 + $0xe2] sm:$0xff]
  %v2985 = vld [vmem:[%s2515 + $0xf2] sm:$0xff]
  %v2986 = vld [vmem:[%s2515 + $0x102] sm:$0xff]
  %v2987 = vld [vmem:[%s2515 + $0x112] sm:$0xff]
  %s2988 = scalar_lea.vmem %s4, 128
  %v2989 = vld [vmem:[%s2988] sm:$0xff]
  %v2990 = vld [vmem:[%s2988 + $0x8] sm:$0xff]
  %v2992 = vsel %vm882, %v2972, 0
  %v2995 = vsel %vm882, %v2973, 0
  %v2998 = vsel %vm882, %v2974, 0
  %v3001 = vsel %vm882, %v2975, 0
  %v3004 = vsel %vm882, %v2976, 0
  %v3007 = vsel %vm882, %v2977, 0
  %v3010 = vsel %vm882, %v2978, 0
  %v3013 = vsel %vm882, %v2979, 0
  %v3016 = vsel %vm882, %v2980, 0
  %v3019 = vsel %vm882, %v2981, 0
  %v3022 = vsel %vm882, %v2982, 0
  %v3025 = vsel %vm882, %v2983, 0
  %v3028 = vsel %vm882, %v2984, 0
  %v3031 = vsel %vm882, %v2985, 0
  %v3034 = vsel %vm882, %v2986, 0
  %v3037 = vsel %vm882, %v2987, 0
  %3039 = vmatprep.subr.mxu0 0.0
  %3040 = vmatpush1.msra.mxu0 %v2989
  %3041 = vmatprep.subr.mxu0 0.0
  %3042 = vmatpush1.msra.mxu0 %v2990
  %3043 = vmatprep.subr.mxu0 0.0
  %3044 = vmatpush1.msra.mxu0 0.0
  %3045 = vmatprep.subr.mxu0 0.0
  %3046 = vmatpush1.msra.mxu0 0.0
  %3047 = vmatprep.subr.mxu0 0.0
  %3048 = vmatpush1.msra.mxu0 0.0
  %3049 = vmatprep.subr.mxu0 0.0
  %3050 = vmatpush1.msra.mxu0 0.0
  %3051 = vmatprep.subr.mxu0 0.0
  %3052 = vmatpush1.msra.mxu0 0.0
  %3053 = vmatprep.subr.mxu0 0.0
  %3054 = vmatpush1.msra.mxu0 0.0
  %3055 = vmatprep.subr.mxu0 0.0
  %3056 = vmatpush1.msra.mxu0 0.0
  %3057 = vmatprep.subr.mxu0 0.0
  %3058 = vmatpush1.msra.mxu0 0.0
  %3059 = vmatprep.subr.mxu0 0.0
  %3060 = vmatpush1.msra.mxu0 0.0
  %3061 = vmatprep.subr.mxu0 0.0
  %3062 = vmatpush1.msra.mxu0 0.0
  %3063 = vmatprep.subr.mxu0 0.0
  %3064 = vmatpush1.msra.mxu0 0.0
  %3065 = vmatprep.subr.mxu0 0.0
  %3066 = vmatpush1.msra.mxu0 0.0
  %3067 = vmatprep.subr.mxu0 0.0
  %3068 = vmatpush1.msra.mxu0 0.0
  %3069 = vmatprep.subr.mxu0 0.0
  %3070 = vmatpush1.msra.mxu0 0.0
  %3071 = vmatprep.subr.mxu0 0.0
  %3072 = vmatpush1.msra.mxu0 0.0
  %3073 = vmatprep.subr.mxu0 0.0
  %3074 = vmatpush1.msra.mxu0 0.0
  %3075 = vmatprep.subr.mxu0 0.0
  %3076 = vmatpush1.msra.mxu0 0.0
  %3077 = vmatprep.subr.mxu0 0.0
  %3078 = vmatpush1.msra.mxu0 0.0
  %3079 = vmatprep.subr.mxu0 0.0
  %3080 = vmatpush1.msra.mxu0 0.0
  %3081 = vmatprep.subr.mxu0 0.0
  %3082 = vmatpush1.msra.mxu0 0.0
  %3083 = vmatprep.subr.mxu0 0.0
  %3084 = vmatpush1.msra.mxu0 0.0
  %3085 = vmatprep.subr.mxu0 0.0
  %3086 = vmatpush1.msra.mxu0 0.0
  %3087 = vmatprep.subr.mxu0 0.0
  %3088 = vmatpush1.msra.mxu0 0.0
  %3089 = vmatprep.subr.mxu0 0.0
  %3090 = vmatpush1.msra.mxu0 0.0
  %3091 = vmatprep.subr.mxu0 0.0
  %3092 = vmatpush1.msra.mxu0 0.0
  %3093 = vmatprep.subr.mxu0 0.0
  %3094 = vmatpush1.msra.mxu0 0.0
  %3095 = vmatprep.subr.mxu0 0.0
  %3096 = vmatpush1.msra.mxu0 0.0
  %3097 = vmatprep.subr.mxu0 0.0
  %3098 = vmatpush1.msra.mxu0 0.0
  %3099 = vmatprep.subr.mxu0 0.0
  %3100 = vmatpush1.msra.mxu0 0.0
  %3101 = vmatprep.subr.mxu0 0.0
  %3102 = vmatpush1.msra.mxu0 0.0
  %3103 = vmatprep.mubr.f32.mxu0 0.0
  %3104 = vmatmul.mubr.f32.gmra.mrb[0].mxu0 %v2992
  %v3105 = vpop.f32.mrb[0].mxu0
  %v3106 = vadd.f32 0.0, %v3105
  %v3107 = vpop.f32.mrb[0].mxu0
  %3108 = vmatprep.mubr.f32.mxu0 0.0
  %3109 = vmatmul.mubr.f32.gmra.mrb[0].mxu0 %v2995
  %v3110 = vpop.f32.mrb[0].mxu0
  %v3111 = vadd.f32 0.0, %v3110
  %v3112 = vpop.f32.mrb[0].mxu0
  %3113 = vmatprep.mubr.f32.mxu0 0.0
  %3114 = vmatmul.mubr.f32.gmra.mrb[0].mxu0 %v2998
  %v3115 = vpop.f32.mrb[0].mxu0
  %v3116 = vadd.f32 0.0, %v3115
  %v3117 = vpop.f32.mrb[0].mxu0
  %3118 = vmatprep.mubr.f32.mxu0 0.0
  %3119 = vmatmul.mubr.f32.gmra.mrb[0].mxu0 %v3001
  %v3120 = vpop.f32.mrb[0].mxu0
  %v3121 = vadd.f32 0.0, %v3120
  %v3122 = vpop.f32.mrb[0].mxu0
  %3123 = vmatprep.mubr.f32.mxu0 0.0
  %3124 = vmatmul.mubr.f32.gmra.mrb[0].mxu0 %v3004
  %v3125 = vpop.f32.mrb[0].mxu0
  %v3126 = vadd.f32 0.0, %v3125
  %v3127 = vpop.f32.mrb[0].mxu0
  %3128 = vmatprep.mubr.f32.mxu0 0.0
  %3129 = vmatmul.mubr.f32.gmra.mrb[0].mxu0 %v3007
  %v3130 = vpop.f32.mrb[0].mxu0
  %v3131 = vadd.f32 0.0, %v3130
  %v3132 = vpop.f32.mrb[0].mxu0
  %3133 = vmatprep.mubr.f32.mxu0 0.0
  %3134 = vmatmul.mubr.f32.gmra.mrb[0].mxu0 %v3010
  %v3135 = vpop.f32.mrb[0].mxu0
  %v3136 = vadd.f32 0.0, %v3135
  %v3137 = vpop.f32.mrb[0].mxu0
  %3138 = vmatprep.mubr.f32.mxu0 0.0
  %3139 = vmatmul.mubr.f32.gmra.mrb[0].mxu0 %v3013
  %v3140 = vpop.f32.mrb[0].mxu0
  %v3141 = vadd.f32 0.0, %v3140
  %v3142 = vpop.f32.mrb[0].mxu0
  %3143 = vmatprep.mubr.f32.mxu0 0.0
  %3144 = vmatmul.mubr.f32.gmra.mrb[0].mxu0 %v3016
  %v3145 = vpop.f32.mrb[0].mxu0
  %v3146 = vadd.f32 0.0, %v3145
  %v3147 = vpop.f32.mrb[0].mxu0
  %3148 = vmatprep.mubr.f32.mxu0 0.0
  %3149 = vmatmul.mubr.f32.gmra.mrb[0].mxu0 %v3019
  %v3150 = vpop.f32.mrb[0].mxu0
  %v3151 = vadd.f32 0.0, %v3150
  %v3152 = vpop.f32.mrb[0].mxu0
  %3153 = vmatprep.mubr.f32.mxu0 0.0
  %3154 = vmatmul.mubr.f32.gmra.mrb[0].mxu0 %v3022
  %v3155 = vpop.f32.mrb[0].mxu0
  %v3156 = vadd.f32 0.0, %v3155
  %v3157 = vpop.f32.mrb[0].mxu0
  %3158 = vmatprep.mubr.f32.mxu0 0.0
  %3159 = vmatmul.mubr.f32.gmra.mrb[0].mxu0 %v3025
  %v3160 = vpop.f32.mrb[0].mxu0
  %v3161 = vadd.f32 0.0, %v3160
  %v3162 = vpop.f32.mrb[0].mxu0
  %3163 = vmatprep.mubr.f32.mxu0 0.0
  %3164 = vmatmul.mubr.f32.gmra.mrb[0].mxu0 %v3028
  %v3165 = vpop.f32.mrb[0].mxu0
  %v3166 = vadd.f32 0.0, %v3165
  %v3167 = vpop.f32.mrb[0].mxu0
  %3168 = vmatprep.mubr.f32.mxu0 0.0
  %3169 = vmatmul.mubr.f32.gmra.mrb[0].mxu0 %v3031
  %v3170 = vpop.f32.mrb[0].mxu0
  %v3171 = vadd.f32 0.0, %v3170
  %v3172 = vpop.f32.mrb[0].mxu0
  %3173 = vmatprep.mubr.f32.mxu0 0.0
  %3174 = vmatmul.mubr.f32.gmra.mrb[0].mxu0 %v3034
  %v3175 = vpop.f32.mrb[0].mxu0
  %v3176 = vadd.f32 0.0, %v3175
  %v3177 = vpop.f32.mrb[0].mxu0
  %3178 = vmatprep.mubr.f32.mxu0 0.0
  %3179 = vmatmul.mubr.f32.gmra.mrb[0].mxu0 %v3037
  %v3180 = vpop.f32.mrb[0].mxu0
  %v3181 = vadd.f32 0.0, %v3180
  %v3182 = vpop.f32.mrb[0].mxu0
  %3183 = vdwg.mxu0
  %v3184 = vadd.f32 %v2956, %v3106
  %v3185 = vadd.f32 %v2957, %v3111
  %v3186 = vadd.f32 %v2958, %v3116
  %v3187 = vadd.f32 %v2959, %v3121
  %v3188 = vadd.f32 %v2960, %v3126
  %v3189 = vadd.f32 %v2961, %v3131
  %v3190 = vadd.f32 %v2962, %v3136
  %v3191 = vadd.f32 %v2963, %v3141
  %v3192 = vadd.f32 %v2964, %v3146
  %v3193 = vadd.f32 %v2965, %v3151
  %v3194 = vadd.f32 %v2966, %v3156
  %v3195 = vadd.f32 %v2967, %v3161
  %v3196 = vadd.f32 %v2968, %v3166
  %v3197 = vadd.f32 %v2969, %v3171
  %v3198 = vadd.f32 %v2970, %v3176
  %v3199 = vadd.f32 %v2971, %v3181
  %v3200 = vld [vmem:[%s5] sm:$0x1]
  %v3202 = vlaneseq
  %v3203 = vshrl.u32 %v3202, 7
  %v3204 = vsub.s32 0, %v3203
  %v3205 = vrot.slane %v3200, %v3204
  %v3207 = vmul.f32 %v3184, %v3205
  %v3208 = vmul.f32 %v3185, %v3205
  %v3209 = vmul.f32 %v3186, %v3205
  %v3210 = vmul.f32 %v3187, %v3205
  %v3211 = vmul.f32 %v3188, %v3205
  %v3212 = vmul.f32 %v3189, %v3205
  %v3213 = vmul.f32 %v3190, %v3205
  %v3214 = vmul.f32 %v3191, %v3205
  %v3215 = vmul.f32 %v3192, %v3205
  %v3216 = vmul.f32 %v3193, %v3205
  %v3217 = vmul.f32 %v3194, %v3205
  %v3218 = vmul.f32 %v3195, %v3205
  %v3219 = vmul.f32 %v3196, %v3205
  %v3220 = vmul.f32 %v3197, %v3205
  %v3221 = vmul.f32 %v3198, %v3205
  %v3222 = vmul.f32 %v3199, %v3205
  %v3223 = vld [vmem:[%s6] sm:$0x1]
  %v3225 = vlaneseq
  %v3226 = vshrl.u32 %v3225, 7
  %v3227 = vsub.s32 0, %v3226
  %v3228 = vrot.slane %v3223, %v3227
  %v3230 = vadd.f32 %v3207, %v3228
  %v3231 = vadd.f32 %v3208, %v3228
  %v3232 = vadd.f32 %v3209, %v3228
  %v3233 = vadd.f32 %v3210, %v3228
  %v3234 = vadd.f32 %v3211, %v3228
  %v3235 = vadd.f32 %v3212, %v3228
  %v3236 = vadd.f32 %v3213, %v3228
  %v3237 = vadd.f32 %v3214, %v3228
  %v3238 = vadd.f32 %v3215, %v3228
  %v3239 = vadd.f32 %v3216, %v3228
  %v3240 = vadd.f32 %v3217, %v3228
  %v3241 = vadd.f32 %v3218, %v3228
  %v3242 = vadd.f32 %v3219, %v3228
  %v3243 = vadd.f32 %v3220, %v3228
  %v3244 = vadd.f32 %v3221, %v3228
  %v3245 = vadd.f32 %v3222, %v3228
  %v3246 = vmax.f32 %v3230, 0.0
  %v3247 = vmax.f32 %v3231, 0.0
  %v3248 = vmax.f32 %v3232, 0.0
  %v3249 = vmax.f32 %v3233, 0.0
  %v3250 = vmax.f32 %v3234, 0.0
  %v3251 = vmax.f32 %v3235, 0.0
  %v3252 = vmax.f32 %v3236, 0.0
  %v3253 = vmax.f32 %v3237, 0.0
  %v3254 = vmax.f32 %v3238, 0.0
  %v3255 = vmax.f32 %v3239, 0.0
  %v3256 = vmax.f32 %v3240, 0.0
  %v3257 = vmax.f32 %v3241, 0.0
  %v3258 = vmax.f32 %v3242, 0.0
  %v3259 = vmax.f32 %v3243, 0.0
  %v3260 = vmax.f32 %v3244, 0.0
  %v3261 = vmax.f32 %v3245, 0.0
  %vm3262 = vcmask 64512
  %3263 = vst.msk [vmem:[%s7] sm:$0xff] %vm3262, %v3246
  %3264 = vst.msk [vmem:[%s7 + $0x8] sm:$0xff] %vm3262, %v3247
  %3265 = vst.msk [vmem:[%s7 + $0x10] sm:$0xff] %vm3262, %v3248
  %3266 = vst.msk [vmem:[%s7 + $0x18] sm:$0xff] %vm3262, %v3249
  %3267 = vst.msk [vmem:[%s7 + $0x20] sm:$0xff] %vm3262, %v3250
  %3268 = vst.msk [vmem:[%s7 + $0x28] sm:$0xff] %vm3262, %v3251
  %3269 = vst.msk [vmem:[%s7 + $0x30] sm:$0xff] %vm3262, %v3252
  %3270 = vst.msk [vmem:[%s7 + $0x38] sm:$0xff] %vm3262, %v3253
  %3271 = vst.msk [vmem:[%s7 + $0x40] sm:$0xff] %vm3262, %v3254
  %3272 = vst.msk [vmem:[%s7 + $0x48] sm:$0xff] %vm3262, %v3255
  %3273 = vst.msk [vmem:[%s7 + $0x50] sm:$0xff] %vm3262, %v3256
  %3274 = vst.msk [vmem:[%s7 + $0x58] sm:$0xff] %vm3262, %v3257
  %3275 = vst.msk [vmem:[%s7 + $0x60] sm:$0xff] %vm3262, %v3258
  %3276 = vst.msk [vmem:[%s7 + $0x68] sm:$0xff] %vm3262, %v3259
  %3277 = vst.msk [vmem:[%s7 + $0x70] sm:$0xff] %vm3262, %v3260
  %3278 = vst.msk [vmem:[%s7 + $0x78] sm:$0xff] %vm3262, %v3261
  // Predicated region
  $region30: #{tinyml_forward.2} parent=0 // pred_check
    _
  $region31: #{tinyml_forward.2} parent=0 // pred_check_branch
    %3280 = sbr.rel (0) target = $region33
  $region32: #{tinyml_forward.2} parent=0 // pred_region
    _
  $region33: #{tinyml_forward.2} parent=0 // pred_fallthru
    _
  // Predicated region
  $region34: #{tinyml_forward.2} parent=0 // pred_check
    _
  $region35: #{tinyml_forward.2} parent=0 // pred_check_branch
    %3282 = sbr.rel (0) target = $region37
  $region36: #{tinyml_forward.2} parent=0 // pred_region
    _
  $region37: #{tinyml_forward.2} parent=0 // pred_fallthru
    _

</llo_original>
